<compile_context>
chip_gen: v5e
topology: v5e:2x2
jax: 0.10.0
libtpu: 0.0.40
codegen_flags: <defaults>
</compile_context>

<pallas_src>
import jax
import jax.numpy as jnp
import numpy as np
from jax.experimental import pallas as pl
from jax.experimental.pallas import tpu as pltpu

_LANE = 128  # channel tile width on the lane axis


def _make_replk_kernel(KL: int, H: int, W: int, lane: int, R: int,
                       unroll_taps: bool):
    """Depthwise KLxKL conv (merged weights) for one (channel-tile, batch) block."""

    def kernel(x_ref, k_ref, b_ref, o_ref):
        # x_ref : (1, H + KL - 1, Wp_pad, lane)   spatially padded input tile
        # k_ref : (KL*KL, lane)                   merged, BN-fused depthwise taps
        # b_ref : (1, lane)                       merged bias
        # o_ref : (1, H, W, lane)

        # Hoisted once: bias broadcast, reused as accumulator init per row.
        bias_tile = jnp.broadcast_to(b_ref[0].astype(jnp.float32), (W, lane))

        if unroll_taps:
            # Fast path: R output rows per iteration, taps fully unrolled.
            # Each tap slice of the input is loaded once per (j, kw) and reused
            # by up to R accumulators (row reuse); accumulators live in vregs.
            def group_body(g, carry):
                h = g * R
                accs = [bias_tile] * R
                for j in range(KL + R - 1):                 # input-row offset
                    for kw in range(KL):
                        x_slc = x_ref[0, h + j, pl.ds(kw, W), :].astype(
                            jnp.float32)
                        for r in range(R):
                            kh = j - r
                            if 0 <= kh < KL:
                                w_tap = k_ref[kh * KL + kw].astype(jnp.float32)
                                accs[r] = accs[r] + x_slc * w_tap
                for r in range(R):
                    o_ref[0, h + r] = accs[r].astype(o_ref.dtype)
                return carry

            jax.lax.fori_loop(0, H // R, group_body, 0)
        else:
            # Large-kernel path (e.g. KL=31): bound the unroll — kh loops via
            # fori (kw unrolled) so compile time / live ranges stay sane.
            def row_body(h, carry):
                def kh_body(kh, acc):
                    for kw in range(KL):
                        x_slc = x_ref[0, h + kh, pl.ds(kw, W), :].astype(
                            jnp.float32)
                        w_tap = k_ref[kh * KL + kw].astype(jnp.float32)
                        acc = acc + x_slc * w_tap
                    return acc

                acc = jax.lax.fori_loop(0, KL, kh_body, bias_tile, unroll=2)
                o_ref[0, h] = acc.astype(o_ref.dtype)
                return carry

            jax.lax.fori_loop(0, H, row_body, 0)

    return kernel


def _fuse_bn(conv_w, gamma, beta, mean, var, eps=1e-5):
    """Fold eval-mode BatchNorm2d into conv weight (C,1,K,K) + bias (C,)."""
    std = jnp.sqrt(var + eps)
    scale = gamma / std
    return conv_w * scale[:, None, None, None], beta - mean * scale


def reparam_large_kernel_conv(x_nchw, params, *, kernel_size, small_kernel,
                              stride=1, groups=None):
    """Forward pass of ReparamLargeKernelConv (non-merged module, eval BN).

    x_nchw: (N, C, H, W) float32, PyTorch layout.
    params: dict with depthwise conv weights + BN stats for both branches.
    """
    N, C, H, W = x_nchw.shape
    if groups is None:
        groups = C
    # TODO(synk): grouped conv with groups != channels and stride > 1 are not
    # implemented; RepLKNet's large-kernel convs are depthwise, stride 1.
    assert stride == 1 and groups == C, "kernel supports depthwise, stride=1"

    KL, KS = kernel_size, small_kernel
    assert KL % 2 == 1, "large kernel must be odd"
    pL = KL // 2

    # ---- glue: fold BN, merge small branch into the large kernel -----------
    kL, bL = _fuse_bn(params["w_large"], params["g_large"], params["b_large"],
                      params["m_large"], params["v_large"])
    if KS is not None:
        assert KS % 2 == 1 and KS <= KL
        kS, bS = _fuse_bn(params["w_small"], params["g_small"],
                          params["b_small"], params["m_small"],
                          params["v_small"])
        pk = (KL - KS) // 2
        k_eq = kL + jnp.pad(kS, ((0, 0), (0, 0), (pk, pk), (pk, pk)))
        b_eq = bL + bS
    else:
        k_eq, b_eq = kL, bL

    # Channel padding to a lane-dense multiple of 128.
    Cp = ((C + _LANE - 1) // _LANE) * _LANE
    n_ct = Cp // _LANE

    # depthwise weight (C,1,KL,KL) -> (KL*KL, Cp): one row per tap, channels on lanes.
    k_flat = jnp.transpose(k_eq[:, 0, :, :], (1, 2, 0)).reshape(KL * KL, C)
    k_flat = jnp.pad(k_flat, ((0, 0), (0, Cp - C)))
    bias = jnp.pad(b_eq, (0, Cp - C)).reshape(1, Cp)

    # NCHW -> NHWC; spatial + channel padding fused into one pad.  The W axis
    # is right-padded to a multiple of 8 so the block's sublane dim is aligned.
    Hp = H + 2 * pL
    Wp = W + 2 * pL
    Wp_pad = ((Wp + 7) // 8) * 8
    x_nhwc = jnp.transpose(x_nchw, (0, 2, 3, 1))
    x_pad = jnp.pad(x_nhwc,
                    ((0, 0), (pL, pL), (pL, Wp_pad - W - pL), (0, Cp - C)))

    # Row blocking: R output rows per loop iteration (each loaded tap slice is
    # reused by up to R accumulators).  Bounded so accumulators stay well
    # inside the 64-vreg budget; only used on the fully-unrolled path.
    unroll_taps = KL <= 13
    R = 1
    if unroll_taps:
        for r in (4, 3, 2):
            if H % r == 0 and r * W <= 128:
                R = r
                break

    kernel = _make_replk_kernel(KL, H, W, _LANE, R, unroll_taps)

    # Generation-aware scoped-VMEM limit (v7x has only 64 MiB physical VMEM;
    # v5e's default scoped limit is just 16 MiB so we always raise it).
    itemsize = x_pad.dtype.itemsize
    x_blk = Hp * Wp_pad * _LANE * itemsize
    o_blk = H * W * _LANE * itemsize
    w_blk = KL * KL * _LANE * 4 + _LANE * 4
    vmem_need = 2 * (x_blk + o_blk + w_blk) + (2 << 20)
    try:
        vmem_phys = int(pltpu.get_tpu_info().vmem_capacity_bytes)
    except Exception:
        vmem_phys = 64 << 20            # conservative (v7x) fallback
    vmem_cap = int(vmem_phys * 0.9)
    vmem_limit = int(min(max(vmem_need, 16 << 20), vmem_cap))

    out_nhwc = pl.pallas_call(
        kernel,
        out_shape=jax.ShapeDtypeStruct((N, H, W, Cp), x_nchw.dtype),
        grid_spec=pltpu.PrefetchScalarGridSpec(
            num_scalar_prefetch=0,
            # channel tile OUTER, batch inner: weight/bias block indices are
            # unchanged across the inner batch steps -> no per-step re-DMA.
            grid=(n_ct, N),
            in_specs=[
                pl.BlockSpec((1, Hp, Wp_pad, _LANE), lambda c, n: (n, 0, 0, c)),
                pl.BlockSpec((KL * KL, _LANE), lambda c, n: (0, c)),
                pl.BlockSpec((1, _LANE), lambda c, n: (0, c)),
            ],
            out_specs=pl.BlockSpec((1, H, W, _LANE), lambda c, n: (n, 0, 0, c)),
        ),
        compiler_params=pltpu.CompilerParams(
            dimension_semantics=("parallel", "parallel"),
            vmem_limit_bytes=vmem_limit),
    )(x_pad, k_flat, bias)

    # drop channel padding, back to PyTorch NCHW layout
    out_nhwc = out_nhwc[..., :C]
    return jnp.transpose(out_nhwc, (0, 3, 1, 2))


# ----------------------------- reference (plain JAX) ------------------------
def _reference(x_nchw, params, kernel_size, small_kernel):
    C = x_nchw.shape[1]

    def branch(w, g, b, m, v, pad):
        y = jax.lax.conv_general_dilated(
            x_nchw, w, window_strides=(1, 1),
            padding=[(pad, pad), (pad, pad)],
            dimension_numbers=("NCHW", "OIHW", "NCHW"),
            feature_group_count=C)
        scale = g / jnp.sqrt(v + 1e-5)
        return y * scale[None, :, None, None] + (b - m * scale)[None, :, None, None]

    out = branch(params["w_large"], params["g_large"], params["b_large"],
                 params["m_large"], params["v_large"], kernel_size // 2)
    out = out + branch(params["w_small"], params["g_small"], params["b_small"],
                       params["m_small"], params["v_small"], small_kernel // 2)
    return out


if __name__ == "__main__":
    N, C, H, W = 2, 4, 16, 16
    KL, KS = 7, 3          # kernel_size=7, small_kernel=3, groups=C (depthwise)

    key = jax.random.PRNGKey(0)
    ks = jax.random.split(key, 10)
    params = {
        # depthwise conv weights: (out_channels, in_channels/groups=1, K, K)
        "w_large": jax.random.normal(ks[0], (C, 1, KL, KL), jnp.float32) * 0.1,
        "w_small": jax.random.normal(ks[1], (C, 1, KS, KS), jnp.float32) * 0.1,
        # BatchNorm2d (eval mode): gamma, beta, running_mean, running_var
        "g_large": 1.0 + 0.1 * jax.random.normal(ks[2], (C,), jnp.float32),
        "b_large": 0.1 * jax.random.normal(ks[3], (C,), jnp.float32),
        "m_large": 0.1 * jax.random.normal(ks[4], (C,), jnp.float32),
        "v_large": jax.random.uniform(ks[5], (C,), jnp.float32, 0.5, 1.5),
        "g_small": 1.0 + 0.1 * jax.random.normal(ks[6], (C,), jnp.float32),
        "b_small": 0.1 * jax.random.normal(ks[7], (C,), jnp.float32),
        "m_small": 0.1 * jax.random.normal(ks[8], (C,), jnp.float32),
        "v_small": jax.random.uniform(ks[9], (C,), jnp.float32, 0.5, 1.5),
    }

    x = jax.random.normal(jax.random.PRNGKey(0), (N, C, H, W), jnp.float32)

    out = reparam_large_kernel_conv(x, params, kernel_size=KL, small_kernel=KS)
    out = jax.block_until_ready(out)

    ref = _reference(x, params, KL, KS)
    np.testing.assert_allclose(np.asarray(out), np.asarray(ref),
                               rtol=1e-4, atol=1e-4)
    print("KERNEL_OK")
</pallas_src>

<mosaic_0001>
module attributes {stable_mosaic.version = 11 : i64} {
  func.func @kernel(%arg0: i32, %arg1: i32, %arg2: memref<1x22x24x128xf32, #tpu.memory_space<vmem>>, %arg3: memref<49x128xf32, #tpu.memory_space<vmem>>, %arg4: memref<1x128xf32, #tpu.memory_space<vmem>>, %arg5: memref<1x16x16x128xf32, #tpu.memory_space<vmem>>) attributes {dimension_semantics = [#tpu.dimension_semantics<parallel>, #tpu.dimension_semantics<parallel>], iteration_bounds = array<i64: 1, 2>, scalar_prefetch = 0 : i64, scratch_operands = 0 : i64, tpu.core_type = #tpu.core_type<tc>, window_params = [{transform_indices = @transform_0, window_bounds = array<i64: 1, 22, 24, 128>}, {transform_indices = @transform_1, window_bounds = array<i64: 49, 128>}, {transform_indices = @transform_2, window_bounds = array<i64: 1, 128>}, {transform_indices = @transform_3, window_bounds = array<i64: 1, 16, 16, 128>}]} {
    %c0 = arith.constant 0 : index
    %c0_0 = arith.constant 0 : index
    %0 = vector.load %arg4[%c0, %c0_0] : memref<1x128xf32, #tpu.memory_space<vmem>>, vector<1x128xf32>
    %1 = vector.shape_cast %0 : vector<1x128xf32> to vector<128xf32>
    %2 = vector.shape_cast %1 : vector<128xf32> to vector<1x128xf32>
    %3 = vector.broadcast %2 : vector<1x128xf32> to vector<16x128xf32>
    %c0_i32 = arith.constant 0 : i32
    %c4_i32 = arith.constant 4 : i32
    %4 = arith.addi %c0_i32, %c4_i32 : i32
    %c1_i32 = arith.constant 1 : i32
    scf.for %arg6 = %c0_i32 to %4 step %c1_i32  : i32 {
      %c4_i32_2 = arith.constant 4 : i32
      %5 = arith.muli %arg6, %c4_i32_2 : i32
      %c0_i32_3 = arith.constant 0 : i32
      %6 = arith.addi %5, %c0_i32_3 : i32
      %c0_4 = arith.constant 0 : index
      %7 = arith.index_cast %6 : i32 to index
      %c0_5 = arith.constant 0 : index
      %c0_6 = arith.constant 0 : index
      %8 = vector.load %arg2[%c0_4, %7, %c0_5, %c0_6] : memref<1x22x24x128xf32, #tpu.memory_space<vmem>>, vector<1x1x16x128xf32>
      %9 = vector.shape_cast %8 : vector<1x1x16x128xf32> to vector<16x128xf32>
      %c0_7 = arith.constant 0 : index
      %c0_8 = arith.constant 0 : index
      %10 = vector.load %arg3[%c0_7, %c0_8] : memref<49x128xf32, #tpu.memory_space<vmem>>, vector<1x128xf32>
      %11 = vector.shape_cast %10 : vector<1x128xf32> to vector<128xf32>
      %12 = vector.shape_cast %11 : vector<128xf32> to vector<1x128xf32>
      %13 = vector.broadcast %12 : vector<1x128xf32> to vector<16x128xf32>
      %14 = arith.mulf %9, %13 : vector<16x128xf32>
      %15 = arith.addf %3, %14 : vector<16x128xf32>
      %c0_i32_9 = arith.constant 0 : i32
      %16 = arith.addi %5, %c0_i32_9 : i32
      %c0_10 = arith.constant 0 : index
      %17 = arith.index_cast %16 : i32 to index
      %c1 = arith.constant 1 : index
      %c0_11 = arith.constant 0 : index
      %18 = vector.load %arg2[%c0_10, %17, %c1, %c0_11] : memref<1x22x24x128xf32, #tpu.memory_space<vmem>>, vector<1x1x16x128xf32>
      %19 = vector.shape_cast %18 : vector<1x1x16x128xf32> to vector<16x128xf32>
      %c1_12 = arith.constant 1 : index
      %c0_13 = arith.constant 0 : index
      %20 = vector.load %arg3[%c1_12, %c0_13] : memref<49x128xf32, #tpu.memory_space<vmem>>, vector<1x128xf32>
      %21 = vector.shape_cast %20 : vector<1x128xf32> to vector<128xf32>
      %22 = vector.shape_cast %21 : vector<128xf32> to vector<1x128xf32>
      %23 = vector.broadcast %22 : vector<1x128xf32> to vector<16x128xf32>
      %24 = arith.mulf %19, %23 : vector<16x128xf32>
      %25 = arith.addf %15, %24 : vector<16x128xf32>
      %c0_i32_14 = arith.constant 0 : i32
      %26 = arith.addi %5, %c0_i32_14 : i32
      %c0_15 = arith.constant 0 : index
      %27 = arith.index_cast %26 : i32 to index
      %c2 = arith.constant 2 : index
      %c0_16 = arith.constant 0 : index
      %28 = vector.load %arg2[%c0_15, %27, %c2, %c0_16] : memref<1x22x24x128xf32, #tpu.memory_space<vmem>>, vector<1x1x16x128xf32>
      %29 = vector.shape_cast %28 : vector<1x1x16x128xf32> to vector<16x128xf32>
      %c2_17 = arith.constant 2 : index
      %c0_18 = arith.constant 0 : index
      %30 = vector.load %arg3[%c2_17, %c0_18] : memref<49x128xf32, #tpu.memory_space<vmem>>, vector<1x128xf32>
      %31 = vector.shape_cast %30 : vector<1x128xf32> to vector<128xf32>
      %32 = vector.shape_cast %31 : vector<128xf32> to vector<1x128xf32>
      %33 = vector.broadcast %32 : vector<1x128xf32> to vector<16x128xf32>
      %34 = arith.mulf %29, %33 : vector<16x128xf32>
      %35 = arith.addf %25, %34 : vector<16x128xf32>
      %c0_i32_19 = arith.constant 0 : i32
      %36 = arith.addi %5, %c0_i32_19 : i32
      %c0_20 = arith.constant 0 : index
      %37 = arith.index_cast %36 : i32 to index
      %c3 = arith.constant 3 : index
      %c0_21 = arith.constant 0 : index
      %38 = vector.load %arg2[%c0_20, %37, %c3, %c0_21] : memref<1x22x24x128xf32, #tpu.memory_space<vmem>>, vector<1x1x16x128xf32>
      %39 = vector.shape_cast %38 : vector<1x1x16x128xf32> to vector<16x128xf32>
      %c3_22 = arith.constant 3 : index
      %c0_23 = arith.constant 0 : index
      %40 = vector.load %arg3[%c3_22, %c0_23] : memref<49x128xf32, #tpu.memory_space<vmem>>, vector<1x128xf32>
      %41 = vector.shape_cast %40 : vector<1x128xf32> to vector<128xf32>
      %42 = vector.shape_cast %41 : vector<128xf32> to vector<1x128xf32>
      %43 = vector.broadcast %42 : vector<1x128xf32> to vector<16x128xf32>
      %44 = arith.mulf %39, %43 : vector<16x128xf32>
      %45 = arith.addf %35, %44 : vector<16x128xf32>
      %c0_i32_24 = arith.constant 0 : i32
      %46 = arith.addi %5, %c0_i32_24 : i32
      %c0_25 = arith.constant 0 : index
      %47 = arith.index_cast %46 : i32 to index
      %c4 = arith.constant 4 : index
      %c0_26 = arith.constant 0 : index
      %48 = vector.load %arg2[%c0_25, %47, %c4, %c0_26] : memref<1x22x24x128xf32, #tpu.memory_space<vmem>>, vector<1x1x16x128xf32>
      %49 = vector.shape_cast %48 : vector<1x1x16x128xf32> to vector<16x128xf32>
      %c4_27 = arith.constant 4 : index
      %c0_28 = arith.constant 0 : index
      %50 = vector.load %arg3[%c4_27, %c0_28] : memref<49x128xf32, #tpu.memory_space<vmem>>, vector<1x128xf32>
      %51 = vector.shape_cast %50 : vector<1x128xf32> to vector<128xf32>
      %52 = vector.shape_cast %51 : vector<128xf32> to vector<1x128xf32>
      %53 = vector.broadcast %52 : vector<1x128xf32> to vector<16x128xf32>
      %54 = arith.mulf %49, %53 : vector<16x128xf32>
      %55 = arith.addf %45, %54 : vector<16x128xf32>
      %c0_i32_29 = arith.constant 0 : i32
      %56 = arith.addi %5, %c0_i32_29 : i32
      %c0_30 = arith.constant 0 : index
      %57 = arith.index_cast %56 : i32 to index
      %c5 = arith.constant 5 : index
      %c0_31 = arith.constant 0 : index
      %58 = vector.load %arg2[%c0_30, %57, %c5, %c0_31] : memref<1x22x24x128xf32, #tpu.memory_space<vmem>>, vector<1x1x16x128xf32>
      %59 = vector.shape_cast %58 : vector<1x1x16x128xf32> to vector<16x128xf32>
      %c5_32 = arith.constant 5 : index
      %c0_33 = arith.constant 0 : index
      %60 = vector.load %arg3[%c5_32, %c0_33] : memref<49x128xf32, #tpu.memory_space<vmem>>, vector<1x128xf32>
      %61 = vector.shape_cast %60 : vector<1x128xf32> to vector<128xf32>
      %62 = vector.shape_cast %61 : vector<128xf32> to vector<1x128xf32>
      %63 = vector.broadcast %62 : vector<1x128xf32> to vector<16x128xf32>
      %64 = arith.mulf %59, %63 : vector<16x128xf32>
      %65 = arith.addf %55, %64 : vector<16x128xf32>
      %c0_i32_34 = arith.constant 0 : i32
      %66 = arith.addi %5, %c0_i32_34 : i32
      %c0_35 = arith.constant 0 : index
      %67 = arith.index_cast %66 : i32 to index
      %c6 = arith.constant 6 : index
      %c0_36 = arith.constant 0 : index
      %68 = vector.load %arg2[%c0_35, %67, %c6, %c0_36] : memref<1x22x24x128xf32, #tpu.memory_space<vmem>>, vector<1x1x16x128xf32>
      %69 = vector.shape_cast %68 : vector<1x1x16x128xf32> to vector<16x128xf32>
      %c6_37 = arith.constant 6 : index
      %c0_38 = arith.constant 0 : index
      %70 = vector.load %arg3[%c6_37, %c0_38] : memref<49x128xf32, #tpu.memory_space<vmem>>, vector<1x128xf32>
      %71 = vector.shape_cast %70 : vector<1x128xf32> to vector<128xf32>
      %72 = vector.shape_cast %71 : vector<128xf32> to vector<1x128xf32>
      %73 = vector.broadcast %72 : vector<1x128xf32> to vector<16x128xf32>
      %74 = arith.mulf %69, %73 : vector<16x128xf32>
      %75 = arith.addf %65, %74 : vector<16x128xf32>
      %c1_i32_39 = arith.constant 1 : i32
      %76 = arith.addi %5, %c1_i32_39 : i32
      %c0_40 = arith.constant 0 : index
      %77 = arith.index_cast %76 : i32 to index
      %c0_41 = arith.constant 0 : index
      %c0_42 = arith.constant 0 : index
      %78 = vector.load %arg2[%c0_40, %77, %c0_41, %c0_42] : memref<1x22x24x128xf32, #tpu.memory_space<vmem>>, vector<1x1x16x128xf32>
      %79 = vector.shape_cast %78 : vector<1x1x16x128xf32> to vector<16x128xf32>
      %c7 = arith.constant 7 : index
      %c0_43 = arith.constant 0 : index
      %80 = vector.load %arg3[%c7, %c0_43] : memref<49x128xf32, #tpu.memory_space<vmem>>, vector<1x128xf32>
      %81 = vector.shape_cast %80 : vector<1x128xf32> to vector<128xf32>
      %82 = vector.shape_cast %81 : vector<128xf32> to vector<1x128xf32>
      %83 = vector.broadcast %82 : vector<1x128xf32> to vector<16x128xf32>
      %84 = arith.mulf %79, %83 : vector<16x128xf32>
      %85 = arith.addf %75, %84 : vector<16x128xf32>
      %c0_44 = arith.constant 0 : index
      %c0_45 = arith.constant 0 : index
      %86 = vector.load %arg3[%c0_44, %c0_45] : memref<49x128xf32, #tpu.memory_space<vmem>>, vector<1x128xf32>
      %87 = vector.shape_cast %86 : vector<1x128xf32> to vector<128xf32>
      %88 = vector.shape_cast %87 : vector<128xf32> to vector<1x128xf32>
      %89 = vector.broadcast %88 : vector<1x128xf32> to vector<16x128xf32>
      %90 = arith.mulf %79, %89 : vector<16x128xf32>
      %91 = arith.addf %3, %90 : vector<16x128xf32>
      %c1_i32_46 = arith.constant 1 : i32
      %92 = arith.addi %5, %c1_i32_46 : i32
      %c0_47 = arith.constant 0 : index
      %93 = arith.index_cast %92 : i32 to index
      %c1_48 = arith.constant 1 : index
      %c0_49 = arith.constant 0 : index
      %94 = vector.load %arg2[%c0_47, %93, %c1_48, %c0_49] : memref<1x22x24x128xf32, #tpu.memory_space<vmem>>, vector<1x1x16x128xf32>
      %95 = vector.shape_cast %94 : vector<1x1x16x128xf32> to vector<16x128xf32>
      %c8 = arith.constant 8 : index
      %c0_50 = arith.constant 0 : index
      %96 = vector.load %arg3[%c8, %c0_50] : memref<49x128xf32, #tpu.memory_space<vmem>>, vector<1x128xf32>
      %97 = vector.shape_cast %96 : vector<1x128xf32> to vector<128xf32>
      %98 = vector.shape_cast %97 : vector<128xf32> to vector<1x128xf32>
      %99 = vector.broadcast %98 : vector<1x128xf32> to vector<16x128xf32>
      %100 = arith.mulf %95, %99 : vector<16x128xf32>
      %101 = arith.addf %85, %100 : vector<16x128xf32>
      %c1_51 = arith.constant 1 : index
      %c0_52 = arith.constant 0 : index
      %102 = vector.load %arg3[%c1_51, %c0_52] : memref<49x128xf32, #tpu.memory_space<vmem>>, vector<1x128xf32>
      %103 = vector.shape_cast %102 : vector<1x128xf32> to vector<128xf32>
      %104 = vector.shape_cast %103 : vector<128xf32> to vector<1x128xf32>
      %105 = vector.broadcast %104 : vector<1x128xf32> to vector<16x128xf32>
      %106 = arith.mulf %95, %105 : vector<16x128xf32>
      %107 = arith.addf %91, %106 : vector<16x128xf32>
      %c1_i32_53 = arith.constant 1 : i32
      %108 = arith.addi %5, %c1_i32_53 : i32
      %c0_54 = arith.constant 0 : index
      %109 = arith.index_cast %108 : i32 to index
      %c2_55 = arith.constant 2 : index
      %c0_56 = arith.constant 0 : index
      %110 = vector.load %arg2[%c0_54, %109, %c2_55, %c0_56] : memref<1x22x24x128xf32, #tpu.memory_space<vmem>>, vector<1x1x16x128xf32>
      %111 = vector.shape_cast %110 : vector<1x1x16x128xf32> to vector<16x128xf32>
      %c9 = arith.constant 9 : index
      %c0_57 = arith.constant 0 : index
      %112 = vector.load %arg3[%c9, %c0_57] : memref<49x128xf32, #tpu.memory_space<vmem>>, vector<1x128xf32>
      %113 = vector.shape_cast %112 : vector<1x128xf32> to vector<128xf32>
      %114 = vector.shape_cast %113 : vector<128xf32> to vector<1x128xf32>
      %115 = vector.broadcast %114 : vector<1x128xf32> to vector<16x128xf32>
      %116 = arith.mulf %111, %115 : vector<16x128xf32>
      %117 = arith.addf %101, %116 : vector<16x128xf32>
      %c2_58 = arith.constant 2 : index
      %c0_59 = arith.constant 0 : index
      %118 = vector.load %arg3[%c2_58, %c0_59] : memref<49x128xf32, #tpu.memory_space<vmem>>, vector<1x128xf32>
      %119 = vector.shape_cast %118 : vector<1x128xf32> to vector<128xf32>
      %120 = vector.shape_cast %119 : vector<128xf32> to vector<1x128xf32>
      %121 = vector.broadcast %120 : vector<1x128xf32> to vector<16x128xf32>
      %122 = arith.mulf %111, %121 : vector<16x128xf32>
      %123 = arith.addf %107, %122 : vector<16x128xf32>
      %c1_i32_60 = arith.constant 1 : i32
      %124 = arith.addi %5, %c1_i32_60 : i32
      %c0_61 = arith.constant 0 : index
      %125 = arith.index_cast %124 : i32 to index
      %c3_62 = arith.constant 3 : index
      %c0_63 = arith.constant 0 : index
      %126 = vector.load %arg2[%c0_61, %125, %c3_62, %c0_63] : memref<1x22x24x128xf32, #tpu.memory_space<vmem>>, vector<1x1x16x128xf32>
      %127 = vector.shape_cast %126 : vector<1x1x16x128xf32> to vector<16x128xf32>
      %c10 = arith.constant 10 : index
      %c0_64 = arith.constant 0 : index
      %128 = vector.load %arg3[%c10, %c0_64] : memref<49x128xf32, #tpu.memory_space<vmem>>, vector<1x128xf32>
      %129 = vector.shape_cast %128 : vector<1x128xf32> to vector<128xf32>
      %130 = vector.shape_cast %129 : vector<128xf32> to vector<1x128xf32>
      %131 = vector.broadcast %130 : vector<1x128xf32> to vector<16x128xf32>
      %132 = arith.mulf %127, %131 : vector<16x128xf32>
      %133 = arith.addf %117, %132 : vector<16x128xf32>
      %c3_65 = arith.constant 3 : index
      %c0_66 = arith.constant 0 : index
      %134 = vector.load %arg3[%c3_65, %c0_66] : memref<49x128xf32, #tpu.memory_space<vmem>>, vector<1x128xf32>
      %135 = vector.shape_cast %134 : vector<1x128xf32> to vector<128xf32>
      %136 = vector.shape_cast %135 : vector<128xf32> to vector<1x128xf32>
      %137 = vector.broadcast %136 : vector<1x128xf32> to vector<16x128xf32>
      %138 = arith.mulf %127, %137 : vector<16x128xf32>
      %139 = arith.addf %123, %138 : vector<16x128xf32>
      %c1_i32_67 = arith.constant 1 : i32
      %140 = arith.addi %5, %c1_i32_67 : i32
      %c0_68 = arith.constant 0 : index
      %141 = arith.index_cast %140 : i32 to index
      %c4_69 = arith.constant 4 : index
      %c0_70 = arith.constant 0 : index
      %142 = vector.load %arg2[%c0_68, %141, %c4_69, %c0_70] : memref<1x22x24x128xf32, #tpu.memory_space<vmem>>, vector<1x1x16x128xf32>
      %143 = vector.shape_cast %142 : vector<1x1x16x128xf32> to vector<16x128xf32>
      %c11 = arith.constant 11 : index
      %c0_71 = arith.constant 0 : index
      %144 = vector.load %arg3[%c11, %c0_71] : memref<49x128xf32, #tpu.memory_space<vmem>>, vector<1x128xf32>
      %145 = vector.shape_cast %144 : vector<1x128xf32> to vector<128xf32>
      %146 = vector.shape_cast %145 : vector<128xf32> to vector<1x128xf32>
      %147 = vector.broadcast %146 : vector<1x128xf32> to vector<16x128xf32>
      %148 = arith.mulf %143, %147 : vector<16x128xf32>
      %149 = arith.addf %133, %148 : vector<16x128xf32>
      %c4_72 = arith.constant 4 : index
      %c0_73 = arith.constant 0 : index
      %150 = vector.load %arg3[%c4_72, %c0_73] : memref<49x128xf32, #tpu.memory_space<vmem>>, vector<1x128xf32>
      %151 = vector.shape_cast %150 : vector<1x128xf32> to vector<128xf32>
      %152 = vector.shape_cast %151 : vector<128xf32> to vector<1x128xf32>
      %153 = vector.broadcast %152 : vector<1x128xf32> to vector<16x128xf32>
      %154 = arith.mulf %143, %153 : vector<16x128xf32>
      %155 = arith.addf %139, %154 : vector<16x128xf32>
      %c1_i32_74 = arith.constant 1 : i32
      %156 = arith.addi %5, %c1_i32_74 : i32
      %c0_75 = arith.constant 0 : index
      %157 = arith.index_cast %156 : i32 to index
      %c5_76 = arith.constant 5 : index
      %c0_77 = arith.constant 0 : index
      %158 = vector.load %arg2[%c0_75, %157, %c5_76, %c0_77] : memref<1x22x24x128xf32, #tpu.memory_space<vmem>>, vector<1x1x16x128xf32>
      %159 = vector.shape_cast %158 : vector<1x1x16x128xf32> to vector<16x128xf32>
      %c12 = arith.constant 12 : index
      %c0_78 = arith.constant 0 : index
      %160 = vector.load %arg3[%c12, %c0_78] : memref<49x128xf32, #tpu.memory_space<vmem>>, vector<1x128xf32>
      %161 = vector.shape_cast %160 : vector<1x128xf32> to vector<128xf32>
      %162 = vector.shape_cast %161 : vector<128xf32> to vector<1x128xf32>
      %163 = vector.broadcast %162 : vector<1x128xf32> to vector<16x128xf32>
      %164 = arith.mulf %159, %163 : vector<16x128xf32>
      %165 = arith.addf %149, %164 : vector<16x128xf32>
      %c5_79 = arith.constant 5 : index
      %c0_80 = arith.constant 0 : index
      %166 = vector.load %arg3[%c5_79, %c0_80] : memref<49x128xf32, #tpu.memory_space<vmem>>, vector<1x128xf32>
      %167 = vector.shape_cast %166 : vector<1x128xf32> to vector<128xf32>
      %168 = vector.shape_cast %167 : vector<128xf32> to vector<1x128xf32>
      %169 = vector.broadcast %168 : vector<1x128xf32> to vector<16x128xf32>
      %170 = arith.mulf %159, %169 : vector<16x128xf32>
      %171 = arith.addf %155, %170 : vector<16x128xf32>
      %c1_i32_81 = arith.constant 1 : i32
      %172 = arith.addi %5, %c1_i32_81 : i32
      %c0_82 = arith.constant 0 : index
      %173 = arith.index_cast %172 : i32 to index
      %c6_83 = arith.constant 6 : index
      %c0_84 = arith.constant 0 : index
      %174 = vector.load %arg2[%c0_82, %173, %c6_83, %c0_84] : memref<1x22x24x128xf32, #tpu.memory_space<vmem>>, vector<1x1x16x128xf32>
      %175 = vector.shape_cast %174 : vector<1x1x16x128xf32> to vector<16x128xf32>
      %c13 = arith.constant 13 : index
      %c0_85 = arith.constant 0 : index
      %176 = vector.load %arg3[%c13, %c0_85] : memref<49x128xf32, #tpu.memory_space<vmem>>, vector<1x128xf32>
      %177 = vector.shape_cast %176 : vector<1x128xf32> to vector<128xf32>
      %178 = vector.shape_cast %177 : vector<128xf32> to vector<1x128xf32>
      %179 = vector.broadcast %178 : vector<1x128xf32> to vector<16x128xf32>
      %180 = arith.mulf %175, %179 : vector<16x128xf32>
      %181 = arith.addf %165, %180 : vector<16x128xf32>
      %c6_86 = arith.constant 6 : index
      %c0_87 = arith.constant 0 : index
      %182 = vector.load %arg3[%c6_86, %c0_87] : memref<49x128xf32, #tpu.memory_space<vmem>>, vector<1x128xf32>
      %183 = vector.shape_cast %182 : vector<1x128xf32> to vector<128xf32>
      %184 = vector.shape_cast %183 : vector<128xf32> to vector<1x128xf32>
      %185 = vector.broadcast %184 : vector<1x128xf32> to vector<16x128xf32>
      %186 = arith.mulf %175, %185 : vector<16x128xf32>
      %187 = arith.addf %171, %186 : vector<16x128xf32>
      %c2_i32 = arith.constant 2 : i32
      %188 = arith.addi %5, %c2_i32 : i32
      %c0_88 = arith.constant 0 : index
      %189 = arith.index_cast %188 : i32 to index
      %c0_89 = arith.constant 0 : index
      %c0_90 = arith.constant 0 : index
      %190 = vector.load %arg2[%c0_88, %189, %c0_89, %c0_90] : memref<1x22x24x128xf32, #tpu.memory_space<vmem>>, vector<1x1x16x128xf32>
      %191 = vector.shape_cast %190 : vector<1x1x16x128xf32> to vector<16x128xf32>
      %c14 = arith.constant 14 : index
      %c0_91 = arith.constant 0 : index
      %192 = vector.load %arg3[%c14, %c0_91] : memref<49x128xf32, #tpu.memory_space<vmem>>, vector<1x128xf32>
      %193 = vector.shape_cast %192 : vector<1x128xf32> to vector<128xf32>
      %194 = vector.shape_cast %193 : vector<128xf32> to vector<1x128xf32>
      %195 = vector.broadcast %194 : vector<1x128xf32> to vector<16x128xf32>
      %196 = arith.mulf %191, %195 : vector<16x128xf32>
      %197 = arith.addf %181, %196 : vector<16x128xf32>
      %c7_92 = arith.constant 7 : index
      %c0_93 = arith.constant 0 : index
      %198 = vector.load %arg3[%c7_92, %c0_93] : memref<49x128xf32, #tpu.memory_space<vmem>>, vector<1x128xf32>
      %199 = vector.shape_cast %198 : vector<1x128xf32> to vector<128xf32>
      %200 = vector.shape_cast %199 : vector<128xf32> to vector<1x128xf32>
      %201 = vector.broadcast %200 : vector<1x128xf32> to vector<16x128xf32>
      %202 = arith.mulf %191, %201 : vector<16x128xf32>
      %203 = arith.addf %187, %202 : vector<16x128xf32>
      %c0_94 = arith.constant 0 : index
      %c0_95 = arith.constant 0 : index
      %204 = vector.load %arg3[%c0_94, %c0_95] : memref<49x128xf32, #tpu.memory_space<vmem>>, vector<1x128xf32>
      %205 = vector.shape_cast %204 : vector<1x128xf32> to vector<128xf32>
      %206 = vector.shape_cast %205 : vector<128xf32> to vector<1x128xf32>
      %207 = vector.broadcast %206 : vector<1x128xf32> to vector<16x128xf32>
      %208 = arith.mulf %191, %207 : vector<16x128xf32>
      %209 = arith.addf %3, %208 : vector<16x128xf32>
      %c2_i32_96 = arith.constant 2 : i32
      %210 = arith.addi %5, %c2_i32_96 : i32
      %c0_97 = arith.constant 0 : index
      %211 = arith.index_cast %210 : i32 to index
      %c1_98 = arith.constant 1 : index
      %c0_99 = arith.constant 0 : index
      %212 = vector.load %arg2[%c0_97, %211, %c1_98, %c0_99] : memref<1x22x24x128xf32, #tpu.memory_space<vmem>>, vector<1x1x16x128xf32>
      %213 = vector.shape_cast %212 : vector<1x1x16x128xf32> to vector<16x128xf32>
      %c15 = arith.constant 15 : index
      %c0_100 = arith.constant 0 : index
      %214 = vector.load %arg3[%c15, %c0_100] : memref<49x128xf32, #tpu.memory_space<vmem>>, vector<1x128xf32>
      %215 = vector.shape_cast %214 : vector<1x128xf32> to vector<128xf32>
      %216 = vector.shape_cast %215 : vector<128xf32> to vector<1x128xf32>
      %217 = vector.broadcast %216 : vector<1x128xf32> to vector<16x128xf32>
      %218 = arith.mulf %213, %217 : vector<16x128xf32>
      %219 = arith.addf %197, %218 : vector<16x128xf32>
      %c8_101 = arith.constant 8 : index
      %c0_102 = arith.constant 0 : index
      %220 = vector.load %arg3[%c8_101, %c0_102] : memref<49x128xf32, #tpu.memory_space<vmem>>, vector<1x128xf32>
      %221 = vector.shape_cast %220 : vector<1x128xf32> to vector<128xf32>
      %222 = vector.shape_cast %221 : vector<128xf32> to vector<1x128xf32>
      %223 = vector.broadcast %222 : vector<1x128xf32> to vector<16x128xf32>
      %224 = arith.mulf %213, %223 : vector<16x128xf32>
      %225 = arith.addf %203, %224 : vector<16x128xf32>
      %c1_103 = arith.constant 1 : index
      %c0_104 = arith.constant 0 : index
      %226 = vector.load %arg3[%c1_103, %c0_104] : memref<49x128xf32, #tpu.memory_space<vmem>>, vector<1x128xf32>
      %227 = vector.shape_cast %226 : vector<1x128xf32> to vector<128xf32>
      %228 = vector.shape_cast %227 : vector<128xf32> to vector<1x128xf32>
      %229 = vector.broadcast %228 : vector<1x128xf32> to vector<16x128xf32>
      %230 = arith.mulf %213, %229 : vector<16x128xf32>
      %231 = arith.addf %209, %230 : vector<16x128xf32>
      %c2_i32_105 = arith.constant 2 : i32
      %232 = arith.addi %5, %c2_i32_105 : i32
      %c0_106 = arith.constant 0 : index
      %233 = arith.index_cast %232 : i32 to index
      %c2_107 = arith.constant 2 : index
      %c0_108 = arith.constant 0 : index
      %234 = vector.load %arg2[%c0_106, %233, %c2_107, %c0_108] : memref<1x22x24x128xf32, #tpu.memory_space<vmem>>, vector<1x1x16x128xf32>
      %235 = vector.shape_cast %234 : vector<1x1x16x128xf32> to vector<16x128xf32>
      %c16 = arith.constant 16 : index
      %c0_109 = arith.constant 0 : index
      %236 = vector.load %arg3[%c16, %c0_109] : memref<49x128xf32, #tpu.memory_space<vmem>>, vector<1x128xf32>
      %237 = vector.shape_cast %236 : vector<1x128xf32> to vector<128xf32>
      %238 = vector.shape_cast %237 : vector<128xf32> to vector<1x128xf32>
      %239 = vector.broadcast %238 : vector<1x128xf32> to vector<16x128xf32>
      %240 = arith.mulf %235, %239 : vector<16x128xf32>
      %241 = arith.addf %219, %240 : vector<16x128xf32>
      %c9_110 = arith.constant 9 : index
      %c0_111 = arith.constant 0 : index
      %242 = vector.load %arg3[%c9_110, %c0_111] : memref<49x128xf32, #tpu.memory_space<vmem>>, vector<1x128xf32>
      %243 = vector.shape_cast %242 : vector<1x128xf32> to vector<128xf32>
      %244 = vector.shape_cast %243 : vector<128xf32> to vector<1x128xf32>
      %245 = vector.broadcast %244 : vector<1x128xf32> to vector<16x128xf32>
      %246 = arith.mulf %235, %245 : vector<16x128xf32>
      %247 = arith.addf %225, %246 : vector<16x128xf32>
      %c2_112 = arith.constant 2 : index
      %c0_113 = arith.constant 0 : index
      %248 = vector.load %arg3[%c2_112, %c0_113] : memref<49x128xf32, #tpu.memory_space<vmem>>, vector<1x128xf32>
      %249 = vector.shape_cast %248 : vector<1x128xf32> to vector<128xf32>
      %250 = vector.shape_cast %249 : vector<128xf32> to vector<1x128xf32>
      %251 = vector.broadcast %250 : vector<1x128xf32> to vector<16x128xf32>
      %252 = arith.mulf %235, %251 : vector<16x128xf32>
      %253 = arith.addf %231, %252 : vector<16x128xf32>
      %c2_i32_114 = arith.constant 2 : i32
      %254 = arith.addi %5, %c2_i32_114 : i32
      %c0_115 = arith.constant 0 : index
      %255 = arith.index_cast %254 : i32 to index
      %c3_116 = arith.constant 3 : index
      %c0_117 = arith.constant 0 : index
      %256 = vector.load %arg2[%c0_115, %255, %c3_116, %c0_117] : memref<1x22x24x128xf32, #tpu.memory_space<vmem>>, vector<1x1x16x128xf32>
      %257 = vector.shape_cast %256 : vector<1x1x16x128xf32> to vector<16x128xf32>
      %c17 = arith.constant 17 : index
      %c0_118 = arith.constant 0 : index
      %258 = vector.load %arg3[%c17, %c0_118] : memref<49x128xf32, #tpu.memory_space<vmem>>, vector<1x128xf32>
      %259 = vector.shape_cast %258 : vector<1x128xf32> to vector<128xf32>
      %260 = vector.shape_cast %259 : vector<128xf32> to vector<1x128xf32>
      %261 = vector.broadcast %260 : vector<1x128xf32> to vector<16x128xf32>
      %262 = arith.mulf %257, %261 : vector<16x128xf32>
      %263 = arith.addf %241, %262 : vector<16x128xf32>
      %c10_119 = arith.constant 10 : index
      %c0_120 = arith.constant 0 : index
      %264 = vector.load %arg3[%c10_119, %c0_120] : memref<49x128xf32, #tpu.memory_space<vmem>>, vector<1x128xf32>
      %265 = vector.shape_cast %264 : vector<1x128xf32> to vector<128xf32>
      %266 = vector.shape_cast %265 : vector<128xf32> to vector<1x128xf32>
      %267 = vector.broadcast %266 : vector<1x128xf32> to vector<16x128xf32>
      %268 = arith.mulf %257, %267 : vector<16x128xf32>
      %269 = arith.addf %247, %268 : vector<16x128xf32>
      %c3_121 = arith.constant 3 : index
      %c0_122 = arith.constant 0 : index
      %270 = vector.load %arg3[%c3_121, %c0_122] : memref<49x128xf32, #tpu.memory_space<vmem>>, vector<1x128xf32>
      %271 = vector.shape_cast %270 : vector<1x128xf32> to vector<128xf32>
      %272 = vector.shape_cast %271 : vector<128xf32> to vector<1x128xf32>
      %273 = vector.broadcast %272 : vector<1x128xf32> to vector<16x128xf32>
      %274 = arith.mulf %257, %273 : vector<16x128xf32>
      %275 = arith.addf %253, %274 : vector<16x128xf32>
      %c2_i32_123 = arith.constant 2 : i32
      %276 = arith.addi %5, %c2_i32_123 : i32
      %c0_124 = arith.constant 0 : index
      %277 = arith.index_cast %276 : i32 to index
      %c4_125 = arith.constant 4 : index
      %c0_126 = arith.constant 0 : index
      %278 = vector.load %arg2[%c0_124, %277, %c4_125, %c0_126] : memref<1x22x24x128xf32, #tpu.memory_space<vmem>>, vector<1x1x16x128xf32>
      %279 = vector.shape_cast %278 : vector<1x1x16x128xf32> to vector<16x128xf32>
      %c18 = arith.constant 18 : index
      %c0_127 = arith.constant 0 : index
      %280 = vector.load %arg3[%c18, %c0_127] : memref<49x128xf32, #tpu.memory_space<vmem>>, vector<1x128xf32>
      %281 = vector.shape_cast %280 : vector<1x128xf32> to vector<128xf32>
      %282 = vector.shape_cast %281 : vector<128xf32> to vector<1x128xf32>
      %283 = vector.broadcast %282 : vector<1x128xf32> to vector<16x128xf32>
      %284 = arith.mulf %279, %283 : vector<16x128xf32>
      %285 = arith.addf %263, %284 : vector<16x128xf32>
      %c11_128 = arith.constant 11 : index
      %c0_129 = arith.constant 0 : index
      %286 = vector.load %arg3[%c11_128, %c0_129] : memref<49x128xf32, #tpu.memory_space<vmem>>, vector<1x128xf32>
      %287 = vector.shape_cast %286 : vector<1x128xf32> to vector<128xf32>
      %288 = vector.shape_cast %287 : vector<128xf32> to vector<1x128xf32>
      %289 = vector.broadcast %288 : vector<1x128xf32> to vector<16x128xf32>
      %290 = arith.mulf %279, %289 : vector<16x128xf32>
      %291 = arith.addf %269, %290 : vector<16x128xf32>
      %c4_130 = arith.constant 4 : index
      %c0_131 = arith.constant 0 : index
      %292 = vector.load %arg3[%c4_130, %c0_131] : memref<49x128xf32, #tpu.memory_space<vmem>>, vector<1x128xf32>
      %293 = vector.shape_cast %292 : vector<1x128xf32> to vector<128xf32>
      %294 = vector.shape_cast %293 : vector<128xf32> to vector<1x128xf32>
      %295 = vector.broadcast %294 : vector<1x128xf32> to vector<16x128xf32>
      %296 = arith.mulf %279, %295 : vector<16x128xf32>
      %297 = arith.addf %275, %296 : vector<16x128xf32>
      %c2_i32_132 = arith.constant 2 : i32
      %298 = arith.addi %5, %c2_i32_132 : i32
      %c0_133 = arith.constant 0 : index
      %299 = arith.index_cast %298 : i32 to index
      %c5_134 = arith.constant 5 : index
      %c0_135 = arith.constant 0 : index
      %300 = vector.load %arg2[%c0_133, %299, %c5_134, %c0_135] : memref<1x22x24x128xf32, #tpu.memory_space<vmem>>, vector<1x1x16x128xf32>
      %301 = vector.shape_cast %300 : vector<1x1x16x128xf32> to vector<16x128xf32>
      %c19 = arith.constant 19 : index
      %c0_136 = arith.constant 0 : index
      %302 = vector.load %arg3[%c19, %c0_136] : memref<49x128xf32, #tpu.memory_space<vmem>>, vector<1x128xf32>
      %303 = vector.shape_cast %302 : vector<1x128xf32> to vector<128xf32>
      %304 = vector.shape_cast %303 : vector<128xf32> to vector<1x128xf32>
      %305 = vector.broadcast %304 : vector<1x128xf32> to vector<16x128xf32>
      %306 = arith.mulf %301, %305 : vector<16x128xf32>
      %307 = arith.addf %285, %306 : vector<16x128xf32>
      %c12_137 = arith.constant 12 : index
      %c0_138 = arith.constant 0 : index
      %308 = vector.load %arg3[%c12_137, %c0_138] : memref<49x128xf32, #tpu.memory_space<vmem>>, vector<1x128xf32>
      %309 = vector.shape_cast %308 : vector<1x128xf32> to vector<128xf32>
      %310 = vector.shape_cast %309 : vector<128xf32> to vector<1x128xf32>
      %311 = vector.broadcast %310 : vector<1x128xf32> to vector<16x128xf32>
      %312 = arith.mulf %301, %311 : vector<16x128xf32>
      %313 = arith.addf %291, %312 : vector<16x128xf32>
      %c5_139 = arith.constant 5 : index
      %c0_140 = arith.constant 0 : index
      %314 = vector.load %arg3[%c5_139, %c0_140] : memref<49x128xf32, #tpu.memory_space<vmem>>, vector<1x128xf32>
      %315 = vector.shape_cast %314 : vector<1x128xf32> to vector<128xf32>
      %316 = vector.shape_cast %315 : vector<128xf32> to vector<1x128xf32>
      %317 = vector.broadcast %316 : vector<1x128xf32> to vector<16x128xf32>
      %318 = arith.mulf %301, %317 : vector<16x128xf32>
      %319 = arith.addf %297, %318 : vector<16x128xf32>
      %c2_i32_141 = arith.constant 2 : i32
      %320 = arith.addi %5, %c2_i32_141 : i32
      %c0_142 = arith.constant 0 : index
      %321 = arith.index_cast %320 : i32 to index
      %c6_143 = arith.constant 6 : index
      %c0_144 = arith.constant 0 : index
      %322 = vector.load %arg2[%c0_142, %321, %c6_143, %c0_144] : memref<1x22x24x128xf32, #tpu.memory_space<vmem>>, vector<1x1x16x128xf32>
      %323 = vector.shape_cast %322 : vector<1x1x16x128xf32> to vector<16x128xf32>
      %c20 = arith.constant 20 : index
      %c0_145 = arith.constant 0 : index
      %324 = vector.load %arg3[%c20, %c0_145] : memref<49x128xf32, #tpu.memory_space<vmem>>, vector<1x128xf32>
      %325 = vector.shape_cast %324 : vector<1x128xf32> to vector<128xf32>
      %326 = vector.shape_cast %325 : vector<128xf32> to vector<1x128xf32>
      %327 = vector.broadcast %326 : vector<1x128xf32> to vector<16x128xf32>
      %328 = arith.mulf %323, %327 : vector<16x128xf32>
      %329 = arith.addf %307, %328 : vector<16x128xf32>
      %c13_146 = arith.constant 13 : index
      %c0_147 = arith.constant 0 : index
      %330 = vector.load %arg3[%c13_146, %c0_147] : memref<49x128xf32, #tpu.memory_space<vmem>>, vector<1x128xf32>
      %331 = vector.shape_cast %330 : vector<1x128xf32> to vector<128xf32>
      %332 = vector.shape_cast %331 : vector<128xf32> to vector<1x128xf32>
      %333 = vector.broadcast %332 : vector<1x128xf32> to vector<16x128xf32>
      %334 = arith.mulf %323, %333 : vector<16x128xf32>
      %335 = arith.addf %313, %334 : vector<16x128xf32>
      %c6_148 = arith.constant 6 : index
      %c0_149 = arith.constant 0 : index
      %336 = vector.load %arg3[%c6_148, %c0_149] : memref<49x128xf32, #tpu.memory_space<vmem>>, vector<1x128xf32>
      %337 = vector.shape_cast %336 : vector<1x128xf32> to vector<128xf32>
      %338 = vector.shape_cast %337 : vector<128xf32> to vector<1x128xf32>
      %339 = vector.broadcast %338 : vector<1x128xf32> to vector<16x128xf32>
      %340 = arith.mulf %323, %339 : vector<16x128xf32>
      %341 = arith.addf %319, %340 : vector<16x128xf32>
      %c3_i32 = arith.constant 3 : i32
      %342 = arith.addi %5, %c3_i32 : i32
      %c0_150 = arith.constant 0 : index
      %343 = arith.index_cast %342 : i32 to index
      %c0_151 = arith.constant 0 : index
      %c0_152 = arith.constant 0 : index
      %344 = vector.load %arg2[%c0_150, %343, %c0_151, %c0_152] : memref<1x22x24x128xf32, #tpu.memory_space<vmem>>, vector<1x1x16x128xf32>
      %345 = vector.shape_cast %344 : vector<1x1x16x128xf32> to vector<16x128xf32>
      %c21 = arith.constant 21 : index
      %c0_153 = arith.constant 0 : index
      %346 = vector.load %arg3[%c21, %c0_153] : memref<49x128xf32, #tpu.memory_space<vmem>>, vector<1x128xf32>
      %347 = vector.shape_cast %346 : vector<1x128xf32> to vector<128xf32>
      %348 = vector.shape_cast %347 : vector<128xf32> to vector<1x128xf32>
      %349 = vector.broadcast %348 : vector<1x128xf32> to vector<16x128xf32>
      %350 = arith.mulf %345, %349 : vector<16x128xf32>
      %351 = arith.addf %329, %350 : vector<16x128xf32>
      %c14_154 = arith.constant 14 : index
      %c0_155 = arith.constant 0 : index
      %352 = vector.load %arg3[%c14_154, %c0_155] : memref<49x128xf32, #tpu.memory_space<vmem>>, vector<1x128xf32>
      %353 = vector.shape_cast %352 : vector<1x128xf32> to vector<128xf32>
      %354 = vector.shape_cast %353 : vector<128xf32> to vector<1x128xf32>
      %355 = vector.broadcast %354 : vector<1x128xf32> to vector<16x128xf32>
      %356 = arith.mulf %345, %355 : vector<16x128xf32>
      %357 = arith.addf %335, %356 : vector<16x128xf32>
      %c7_156 = arith.constant 7 : index
      %c0_157 = arith.constant 0 : index
      %358 = vector.load %arg3[%c7_156, %c0_157] : memref<49x128xf32, #tpu.memory_space<vmem>>, vector<1x128xf32>
      %359 = vector.shape_cast %358 : vector<1x128xf32> to vector<128xf32>
      %360 = vector.shape_cast %359 : vector<128xf32> to vector<1x128xf32>
      %361 = vector.broadcast %360 : vector<1x128xf32> to vector<16x128xf32>
      %362 = arith.mulf %345, %361 : vector<16x128xf32>
      %363 = arith.addf %341, %362 : vector<16x128xf32>
      %c0_158 = arith.constant 0 : index
      %c0_159 = arith.constant 0 : index
      %364 = vector.load %arg3[%c0_158, %c0_159] : memref<49x128xf32, #tpu.memory_space<vmem>>, vector<1x128xf32>
      %365 = vector.shape_cast %364 : vector<1x128xf32> to vector<128xf32>
      %366 = vector.shape_cast %365 : vector<128xf32> to vector<1x128xf32>
      %367 = vector.broadcast %366 : vector<1x128xf32> to vector<16x128xf32>
      %368 = arith.mulf %345, %367 : vector<16x128xf32>
      %369 = arith.addf %3, %368 : vector<16x128xf32>
      %c3_i32_160 = arith.constant 3 : i32
      %370 = arith.addi %5, %c3_i32_160 : i32
      %c0_161 = arith.constant 0 : index
      %371 = arith.index_cast %370 : i32 to index
      %c1_162 = arith.constant 1 : index
      %c0_163 = arith.constant 0 : index
      %372 = vector.load %arg2[%c0_161, %371, %c1_162, %c0_163] : memref<1x22x24x128xf32, #tpu.memory_space<vmem>>, vector<1x1x16x128xf32>
      %373 = vector.shape_cast %372 : vector<1x1x16x128xf32> to vector<16x128xf32>
      %c22 = arith.constant 22 : index
      %c0_164 = arith.constant 0 : index
      %374 = vector.load %arg3[%c22, %c0_164] : memref<49x128xf32, #tpu.memory_space<vmem>>, vector<1x128xf32>
      %375 = vector.shape_cast %374 : vector<1x128xf32> to vector<128xf32>
      %376 = vector.shape_cast %375 : vector<128xf32> to vector<1x128xf32>
      %377 = vector.broadcast %376 : vector<1x128xf32> to vector<16x128xf32>
      %378 = arith.mulf %373, %377 : vector<16x128xf32>
      %379 = arith.addf %351, %378 : vector<16x128xf32>
      %c15_165 = arith.constant 15 : index
      %c0_166 = arith.constant 0 : index
      %380 = vector.load %arg3[%c15_165, %c0_166] : memref<49x128xf32, #tpu.memory_space<vmem>>, vector<1x128xf32>
      %381 = vector.shape_cast %380 : vector<1x128xf32> to vector<128xf32>
      %382 = vector.shape_cast %381 : vector<128xf32> to vector<1x128xf32>
      %383 = vector.broadcast %382 : vector<1x128xf32> to vector<16x128xf32>
      %384 = arith.mulf %373, %383 : vector<16x128xf32>
      %385 = arith.addf %357, %384 : vector<16x128xf32>
      %c8_167 = arith.constant 8 : index
      %c0_168 = arith.constant 0 : index
      %386 = vector.load %arg3[%c8_167, %c0_168] : memref<49x128xf32, #tpu.memory_space<vmem>>, vector<1x128xf32>
      %387 = vector.shape_cast %386 : vector<1x128xf32> to vector<128xf32>
      %388 = vector.shape_cast %387 : vector<128xf32> to vector<1x128xf32>
      %389 = vector.broadcast %388 : vector<1x128xf32> to vector<16x128xf32>
      %390 = arith.mulf %373, %389 : vector<16x128xf32>
      %391 = arith.addf %363, %390 : vector<16x128xf32>
      %c1_169 = arith.constant 1 : index
      %c0_170 = arith.constant 0 : index
      %392 = vector.load %arg3[%c1_169, %c0_170] : memref<49x128xf32, #tpu.memory_space<vmem>>, vector<1x128xf32>
      %393 = vector.shape_cast %392 : vector<1x128xf32> to vector<128xf32>
      %394 = vector.shape_cast %393 : vector<128xf32> to vector<1x128xf32>
      %395 = vector.broadcast %394 : vector<1x128xf32> to vector<16x128xf32>
      %396 = arith.mulf %373, %395 : vector<16x128xf32>
      %397 = arith.addf %369, %396 : vector<16x128xf32>
      %c3_i32_171 = arith.constant 3 : i32
      %398 = arith.addi %5, %c3_i32_171 : i32
      %c0_172 = arith.constant 0 : index
      %399 = arith.index_cast %398 : i32 to index
      %c2_173 = arith.constant 2 : index
      %c0_174 = arith.constant 0 : index
      %400 = vector.load %arg2[%c0_172, %399, %c2_173, %c0_174] : memref<1x22x24x128xf32, #tpu.memory_space<vmem>>, vector<1x1x16x128xf32>
      %401 = vector.shape_cast %400 : vector<1x1x16x128xf32> to vector<16x128xf32>
      %c23 = arith.constant 23 : index
      %c0_175 = arith.constant 0 : index
      %402 = vector.load %arg3[%c23, %c0_175] : memref<49x128xf32, #tpu.memory_space<vmem>>, vector<1x128xf32>
      %403 = vector.shape_cast %402 : vector<1x128xf32> to vector<128xf32>
      %404 = vector.shape_cast %403 : vector<128xf32> to vector<1x128xf32>
      %405 = vector.broadcast %404 : vector<1x128xf32> to vector<16x128xf32>
      %406 = arith.mulf %401, %405 : vector<16x128xf32>
      %407 = arith.addf %379, %406 : vector<16x128xf32>
      %c16_176 = arith.constant 16 : index
      %c0_177 = arith.constant 0 : index
      %408 = vector.load %arg3[%c16_176, %c0_177] : memref<49x128xf32, #tpu.memory_space<vmem>>, vector<1x128xf32>
      %409 = vector.shape_cast %408 : vector<1x128xf32> to vector<128xf32>
      %410 = vector.shape_cast %409 : vector<128xf32> to vector<1x128xf32>
      %411 = vector.broadcast %410 : vector<1x128xf32> to vector<16x128xf32>
      %412 = arith.mulf %401, %411 : vector<16x128xf32>
      %413 = arith.addf %385, %412 : vector<16x128xf32>
      %c9_178 = arith.constant 9 : index
      %c0_179 = arith.constant 0 : index
      %414 = vector.load %arg3[%c9_178, %c0_179] : memref<49x128xf32, #tpu.memory_space<vmem>>, vector<1x128xf32>
      %415 = vector.shape_cast %414 : vector<1x128xf32> to vector<128xf32>
      %416 = vector.shape_cast %415 : vector<128xf32> to vector<1x128xf32>
      %417 = vector.broadcast %416 : vector<1x128xf32> to vector<16x128xf32>
      %418 = arith.mulf %401, %417 : vector<16x128xf32>
      %419 = arith.addf %391, %418 : vector<16x128xf32>
      %c2_180 = arith.constant 2 : index
      %c0_181 = arith.constant 0 : index
      %420 = vector.load %arg3[%c2_180, %c0_181] : memref<49x128xf32, #tpu.memory_space<vmem>>, vector<1x128xf32>
      %421 = vector.shape_cast %420 : vector<1x128xf32> to vector<128xf32>
      %422 = vector.shape_cast %421 : vector<128xf32> to vector<1x128xf32>
      %423 = vector.broadcast %422 : vector<1x128xf32> to vector<16x128xf32>
      %424 = arith.mulf %401, %423 : vector<16x128xf32>
      %425 = arith.addf %397, %424 : vector<16x128xf32>
      %c3_i32_182 = arith.constant 3 : i32
      %426 = arith.addi %5, %c3_i32_182 : i32
      %c0_183 = arith.constant 0 : index
      %427 = arith.index_cast %426 : i32 to index
      %c3_184 = arith.constant 3 : index
      %c0_185 = arith.constant 0 : index
      %428 = vector.load %arg2[%c0_183, %427, %c3_184, %c0_185] : memref<1x22x24x128xf32, #tpu.memory_space<vmem>>, vector<1x1x16x128xf32>
      %429 = vector.shape_cast %428 : vector<1x1x16x128xf32> to vector<16x128xf32>
      %c24 = arith.constant 24 : index
      %c0_186 = arith.constant 0 : index
      %430 = vector.load %arg3[%c24, %c0_186] : memref<49x128xf32, #tpu.memory_space<vmem>>, vector<1x128xf32>
      %431 = vector.shape_cast %430 : vector<1x128xf32> to vector<128xf32>
      %432 = vector.shape_cast %431 : vector<128xf32> to vector<1x128xf32>
      %433 = vector.broadcast %432 : vector<1x128xf32> to vector<16x128xf32>
      %434 = arith.mulf %429, %433 : vector<16x128xf32>
      %435 = arith.addf %407, %434 : vector<16x128xf32>
      %c17_187 = arith.constant 17 : index
      %c0_188 = arith.constant 0 : index
      %436 = vector.load %arg3[%c17_187, %c0_188] : memref<49x128xf32, #tpu.memory_space<vmem>>, vector<1x128xf32>
      %437 = vector.shape_cast %436 : vector<1x128xf32> to vector<128xf32>
      %438 = vector.shape_cast %437 : vector<128xf32> to vector<1x128xf32>
      %439 = vector.broadcast %438 : vector<1x128xf32> to vector<16x128xf32>
      %440 = arith.mulf %429, %439 : vector<16x128xf32>
      %441 = arith.addf %413, %440 : vector<16x128xf32>
      %c10_189 = arith.constant 10 : index
      %c0_190 = arith.constant 0 : index
      %442 = vector.load %arg3[%c10_189, %c0_190] : memref<49x128xf32, #tpu.memory_space<vmem>>, vector<1x128xf32>
      %443 = vector.shape_cast %442 : vector<1x128xf32> to vector<128xf32>
      %444 = vector.shape_cast %443 : vector<128xf32> to vector<1x128xf32>
      %445 = vector.broadcast %444 : vector<1x128xf32> to vector<16x128xf32>
      %446 = arith.mulf %429, %445 : vector<16x128xf32>
      %447 = arith.addf %419, %446 : vector<16x128xf32>
      %c3_191 = arith.constant 3 : index
      %c0_192 = arith.constant 0 : index
      %448 = vector.load %arg3[%c3_191, %c0_192] : memref<49x128xf32, #tpu.memory_space<vmem>>, vector<1x128xf32>
      %449 = vector.shape_cast %448 : vector<1x128xf32> to vector<128xf32>
      %450 = vector.shape_cast %449 : vector<128xf32> to vector<1x128xf32>
      %451 = vector.broadcast %450 : vector<1x128xf32> to vector<16x128xf32>
      %452 = arith.mulf %429, %451 : vector<16x128xf32>
      %453 = arith.addf %425, %452 : vector<16x128xf32>
      %c3_i32_193 = arith.constant 3 : i32
      %454 = arith.addi %5, %c3_i32_193 : i32
      %c0_194 = arith.constant 0 : index
      %455 = arith.index_cast %454 : i32 to index
      %c4_195 = arith.constant 4 : index
      %c0_196 = arith.constant 0 : index
      %456 = vector.load %arg2[%c0_194, %455, %c4_195, %c0_196] : memref<1x22x24x128xf32, #tpu.memory_space<vmem>>, vector<1x1x16x128xf32>
      %457 = vector.shape_cast %456 : vector<1x1x16x128xf32> to vector<16x128xf32>
      %c25 = arith.constant 25 : index
      %c0_197 = arith.constant 0 : index
      %458 = vector.load %arg3[%c25, %c0_197] : memref<49x128xf32, #tpu.memory_space<vmem>>, vector<1x128xf32>
      %459 = vector.shape_cast %458 : vector<1x128xf32> to vector<128xf32>
      %460 = vector.shape_cast %459 : vector<128xf32> to vector<1x128xf32>
      %461 = vector.broadcast %460 : vector<1x128xf32> to vector<16x128xf32>
      %462 = arith.mulf %457, %461 : vector<16x128xf32>
      %463 = arith.addf %435, %462 : vector<16x128xf32>
      %c18_198 = arith.constant 18 : index
      %c0_199 = arith.constant 0 : index
      %464 = vector.load %arg3[%c18_198, %c0_199] : memref<49x128xf32, #tpu.memory_space<vmem>>, vector<1x128xf32>
      %465 = vector.shape_cast %464 : vector<1x128xf32> to vector<128xf32>
      %466 = vector.shape_cast %465 : vector<128xf32> to vector<1x128xf32>
      %467 = vector.broadcast %466 : vector<1x128xf32> to vector<16x128xf32>
      %468 = arith.mulf %457, %467 : vector<16x128xf32>
      %469 = arith.addf %441, %468 : vector<16x128xf32>
      %c11_200 = arith.constant 11 : index
      %c0_201 = arith.constant 0 : index
      %470 = vector.load %arg3[%c11_200, %c0_201] : memref<49x128xf32, #tpu.memory_space<vmem>>, vector<1x128xf32>
      %471 = vector.shape_cast %470 : vector<1x128xf32> to vector<128xf32>
      %472 = vector.shape_cast %471 : vector<128xf32> to vector<1x128xf32>
      %473 = vector.broadcast %472 : vector<1x128xf32> to vector<16x128xf32>
      %474 = arith.mulf %457, %473 : vector<16x128xf32>
      %475 = arith.addf %447, %474 : vector<16x128xf32>
      %c4_202 = arith.constant 4 : index
      %c0_203 = arith.constant 0 : index
      %476 = vector.load %arg3[%c4_202, %c0_203] : memref<49x128xf32, #tpu.memory_space<vmem>>, vector<1x128xf32>
      %477 = vector.shape_cast %476 : vector<1x128xf32> to vector<128xf32>
      %478 = vector.shape_cast %477 : vector<128xf32> to vector<1x128xf32>
      %479 = vector.broadcast %478 : vector<1x128xf32> to vector<16x128xf32>
      %480 = arith.mulf %457, %479 : vector<16x128xf32>
      %481 = arith.addf %453, %480 : vector<16x128xf32>
      %c3_i32_204 = arith.constant 3 : i32
      %482 = arith.addi %5, %c3_i32_204 : i32
      %c0_205 = arith.constant 0 : index
      %483 = arith.index_cast %482 : i32 to index
      %c5_206 = arith.constant 5 : index
      %c0_207 = arith.constant 0 : index
      %484 = vector.load %arg2[%c0_205, %483, %c5_206, %c0_207] : memref<1x22x24x128xf32, #tpu.memory_space<vmem>>, vector<1x1x16x128xf32>
      %485 = vector.shape_cast %484 : vector<1x1x16x128xf32> to vector<16x128xf32>
      %c26 = arith.constant 26 : index
      %c0_208 = arith.constant 0 : index
      %486 = vector.load %arg3[%c26, %c0_208] : memref<49x128xf32, #tpu.memory_space<vmem>>, vector<1x128xf32>
      %487 = vector.shape_cast %486 : vector<1x128xf32> to vector<128xf32>
      %488 = vector.shape_cast %487 : vector<128xf32> to vector<1x128xf32>
      %489 = vector.broadcast %488 : vector<1x128xf32> to vector<16x128xf32>
      %490 = arith.mulf %485, %489 : vector<16x128xf32>
      %491 = arith.addf %463, %490 : vector<16x128xf32>
      %c19_209 = arith.constant 19 : index
      %c0_210 = arith.constant 0 : index
      %492 = vector.load %arg3[%c19_209, %c0_210] : memref<49x128xf32, #tpu.memory_space<vmem>>, vector<1x128xf32>
      %493 = vector.shape_cast %492 : vector<1x128xf32> to vector<128xf32>
      %494 = vector.shape_cast %493 : vector<128xf32> to vector<1x128xf32>
      %495 = vector.broadcast %494 : vector<1x128xf32> to vector<16x128xf32>
      %496 = arith.mulf %485, %495 : vector<16x128xf32>
      %497 = arith.addf %469, %496 : vector<16x128xf32>
      %c12_211 = arith.constant 12 : index
      %c0_212 = arith.constant 0 : index
      %498 = vector.load %arg3[%c12_211, %c0_212] : memref<49x128xf32, #tpu.memory_space<vmem>>, vector<1x128xf32>
      %499 = vector.shape_cast %498 : vector<1x128xf32> to vector<128xf32>
      %500 = vector.shape_cast %499 : vector<128xf32> to vector<1x128xf32>
      %501 = vector.broadcast %500 : vector<1x128xf32> to vector<16x128xf32>
      %502 = arith.mulf %485, %501 : vector<16x128xf32>
      %503 = arith.addf %475, %502 : vector<16x128xf32>
      %c5_213 = arith.constant 5 : index
      %c0_214 = arith.constant 0 : index
      %504 = vector.load %arg3[%c5_213, %c0_214] : memref<49x128xf32, #tpu.memory_space<vmem>>, vector<1x128xf32>
      %505 = vector.shape_cast %504 : vector<1x128xf32> to vector<128xf32>
      %506 = vector.shape_cast %505 : vector<128xf32> to vector<1x128xf32>
      %507 = vector.broadcast %506 : vector<1x128xf32> to vector<16x128xf32>
      %508 = arith.mulf %485, %507 : vector<16x128xf32>
      %509 = arith.addf %481, %508 : vector<16x128xf32>
      %c3_i32_215 = arith.constant 3 : i32
      %510 = arith.addi %5, %c3_i32_215 : i32
      %c0_216 = arith.constant 0 : index
      %511 = arith.index_cast %510 : i32 to index
      %c6_217 = arith.constant 6 : index
      %c0_218 = arith.constant 0 : index
      %512 = vector.load %arg2[%c0_216, %511, %c6_217, %c0_218] : memref<1x22x24x128xf32, #tpu.memory_space<vmem>>, vector<1x1x16x128xf32>
      %513 = vector.shape_cast %512 : vector<1x1x16x128xf32> to vector<16x128xf32>
      %c27 = arith.constant 27 : index
      %c0_219 = arith.constant 0 : index
      %514 = vector.load %arg3[%c27, %c0_219] : memref<49x128xf32, #tpu.memory_space<vmem>>, vector<1x128xf32>
      %515 = vector.shape_cast %514 : vector<1x128xf32> to vector<128xf32>
      %516 = vector.shape_cast %515 : vector<128xf32> to vector<1x128xf32>
      %517 = vector.broadcast %516 : vector<1x128xf32> to vector<16x128xf32>
      %518 = arith.mulf %513, %517 : vector<16x128xf32>
      %519 = arith.addf %491, %518 : vector<16x128xf32>
      %c20_220 = arith.constant 20 : index
      %c0_221 = arith.constant 0 : index
      %520 = vector.load %arg3[%c20_220, %c0_221] : memref<49x128xf32, #tpu.memory_space<vmem>>, vector<1x128xf32>
      %521 = vector.shape_cast %520 : vector<1x128xf32> to vector<128xf32>
      %522 = vector.shape_cast %521 : vector<128xf32> to vector<1x128xf32>
      %523 = vector.broadcast %522 : vector<1x128xf32> to vector<16x128xf32>
      %524 = arith.mulf %513, %523 : vector<16x128xf32>
      %525 = arith.addf %497, %524 : vector<16x128xf32>
      %c13_222 = arith.constant 13 : index
      %c0_223 = arith.constant 0 : index
      %526 = vector.load %arg3[%c13_222, %c0_223] : memref<49x128xf32, #tpu.memory_space<vmem>>, vector<1x128xf32>
      %527 = vector.shape_cast %526 : vector<1x128xf32> to vector<128xf32>
      %528 = vector.shape_cast %527 : vector<128xf32> to vector<1x128xf32>
      %529 = vector.broadcast %528 : vector<1x128xf32> to vector<16x128xf32>
      %530 = arith.mulf %513, %529 : vector<16x128xf32>
      %531 = arith.addf %503, %530 : vector<16x128xf32>
      %c6_224 = arith.constant 6 : index
      %c0_225 = arith.constant 0 : index
      %532 = vector.load %arg3[%c6_224, %c0_225] : memref<49x128xf32, #tpu.memory_space<vmem>>, vector<1x128xf32>
      %533 = vector.shape_cast %532 : vector<1x128xf32> to vector<128xf32>
      %534 = vector.shape_cast %533 : vector<128xf32> to vector<1x128xf32>
      %535 = vector.broadcast %534 : vector<1x128xf32> to vector<16x128xf32>
      %536 = arith.mulf %513, %535 : vector<16x128xf32>
      %537 = arith.addf %509, %536 : vector<16x128xf32>
      %c4_i32_226 = arith.constant 4 : i32
      %538 = arith.addi %5, %c4_i32_226 : i32
      %c0_227 = arith.constant 0 : index
      %539 = arith.index_cast %538 : i32 to index
      %c0_228 = arith.constant 0 : index
      %c0_229 = arith.constant 0 : index
      %540 = vector.load %arg2[%c0_227, %539, %c0_228, %c0_229] : memref<1x22x24x128xf32, #tpu.memory_space<vmem>>, vector<1x1x16x128xf32>
      %541 = vector.shape_cast %540 : vector<1x1x16x128xf32> to vector<16x128xf32>
      %c28 = arith.constant 28 : index
      %c0_230 = arith.constant 0 : index
      %542 = vector.load %arg3[%c28, %c0_230] : memref<49x128xf32, #tpu.memory_space<vmem>>, vector<1x128xf32>
      %543 = vector.shape_cast %542 : vector<1x128xf32> to vector<128xf32>
      %544 = vector.shape_cast %543 : vector<128xf32> to vector<1x128xf32>
      %545 = vector.broadcast %544 : vector<1x128xf32> to vector<16x128xf32>
      %546 = arith.mulf %541, %545 : vector<16x128xf32>
      %547 = arith.addf %519, %546 : vector<16x128xf32>
      %c21_231 = arith.constant 21 : index
      %c0_232 = arith.constant 0 : index
      %548 = vector.load %arg3[%c21_231, %c0_232] : memref<49x128xf32, #tpu.memory_space<vmem>>, vector<1x128xf32>
      %549 = vector.shape_cast %548 : vector<1x128xf32> to vector<128xf32>
      %550 = vector.shape_cast %549 : vector<128xf32> to vector<1x128xf32>
      %551 = vector.broadcast %550 : vector<1x128xf32> to vector<16x128xf32>
      %552 = arith.mulf %541, %551 : vector<16x128xf32>
      %553 = arith.addf %525, %552 : vector<16x128xf32>
      %c14_233 = arith.constant 14 : index
      %c0_234 = arith.constant 0 : index
      %554 = vector.load %arg3[%c14_233, %c0_234] : memref<49x128xf32, #tpu.memory_space<vmem>>, vector<1x128xf32>
      %555 = vector.shape_cast %554 : vector<1x128xf32> to vector<128xf32>
      %556 = vector.shape_cast %555 : vector<128xf32> to vector<1x128xf32>
      %557 = vector.broadcast %556 : vector<1x128xf32> to vector<16x128xf32>
      %558 = arith.mulf %541, %557 : vector<16x128xf32>
      %559 = arith.addf %531, %558 : vector<16x128xf32>
      %c7_235 = arith.constant 7 : index
      %c0_236 = arith.constant 0 : index
      %560 = vector.load %arg3[%c7_235, %c0_236] : memref<49x128xf32, #tpu.memory_space<vmem>>, vector<1x128xf32>
      %561 = vector.shape_cast %560 : vector<1x128xf32> to vector<128xf32>
      %562 = vector.shape_cast %561 : vector<128xf32> to vector<1x128xf32>
      %563 = vector.broadcast %562 : vector<1x128xf32> to vector<16x128xf32>
      %564 = arith.mulf %541, %563 : vector<16x128xf32>
      %565 = arith.addf %537, %564 : vector<16x128xf32>
      %c4_i32_237 = arith.constant 4 : i32
      %566 = arith.addi %5, %c4_i32_237 : i32
      %c0_238 = arith.constant 0 : index
      %567 = arith.index_cast %566 : i32 to index
      %c1_239 = arith.constant 1 : index
      %c0_240 = arith.constant 0 : index
      %568 = vector.load %arg2[%c0_238, %567, %c1_239, %c0_240] : memref<1x22x24x128xf32, #tpu.memory_space<vmem>>, vector<1x1x16x128xf32>
      %569 = vector.shape_cast %568 : vector<1x1x16x128xf32> to vector<16x128xf32>
      %c29 = arith.constant 29 : index
      %c0_241 = arith.constant 0 : index
      %570 = vector.load %arg3[%c29, %c0_241] : memref<49x128xf32, #tpu.memory_space<vmem>>, vector<1x128xf32>
      %571 = vector.shape_cast %570 : vector<1x128xf32> to vector<128xf32>
      %572 = vector.shape_cast %571 : vector<128xf32> to vector<1x128xf32>
      %573 = vector.broadcast %572 : vector<1x128xf32> to vector<16x128xf32>
      %574 = arith.mulf %569, %573 : vector<16x128xf32>
      %575 = arith.addf %547, %574 : vector<16x128xf32>
      %c22_242 = arith.constant 22 : index
      %c0_243 = arith.constant 0 : index
      %576 = vector.load %arg3[%c22_242, %c0_243] : memref<49x128xf32, #tpu.memory_space<vmem>>, vector<1x128xf32>
      %577 = vector.shape_cast %576 : vector<1x128xf32> to vector<128xf32>
      %578 = vector.shape_cast %577 : vector<128xf32> to vector<1x128xf32>
      %579 = vector.broadcast %578 : vector<1x128xf32> to vector<16x128xf32>
      %580 = arith.mulf %569, %579 : vector<16x128xf32>
      %581 = arith.addf %553, %580 : vector<16x128xf32>
      %c15_244 = arith.constant 15 : index
      %c0_245 = arith.constant 0 : index
      %582 = vector.load %arg3[%c15_244, %c0_245] : memref<49x128xf32, #tpu.memory_space<vmem>>, vector<1x128xf32>
      %583 = vector.shape_cast %582 : vector<1x128xf32> to vector<128xf32>
      %584 = vector.shape_cast %583 : vector<128xf32> to vector<1x128xf32>
      %585 = vector.broadcast %584 : vector<1x128xf32> to vector<16x128xf32>
      %586 = arith.mulf %569, %585 : vector<16x128xf32>
      %587 = arith.addf %559, %586 : vector<16x128xf32>
      %c8_246 = arith.constant 8 : index
      %c0_247 = arith.constant 0 : index
      %588 = vector.load %arg3[%c8_246, %c0_247] : memref<49x128xf32, #tpu.memory_space<vmem>>, vector<1x128xf32>
      %589 = vector.shape_cast %588 : vector<1x128xf32> to vector<128xf32>
      %590 = vector.shape_cast %589 : vector<128xf32> to vector<1x128xf32>
      %591 = vector.broadcast %590 : vector<1x128xf32> to vector<16x128xf32>
      %592 = arith.mulf %569, %591 : vector<16x128xf32>
      %593 = arith.addf %565, %592 : vector<16x128xf32>
      %c4_i32_248 = arith.constant 4 : i32
      %594 = arith.addi %5, %c4_i32_248 : i32
      %c0_249 = arith.constant 0 : index
      %595 = arith.index_cast %594 : i32 to index
      %c2_250 = arith.constant 2 : index
      %c0_251 = arith.constant 0 : index
      %596 = vector.load %arg2[%c0_249, %595, %c2_250, %c0_251] : memref<1x22x24x128xf32, #tpu.memory_space<vmem>>, vector<1x1x16x128xf32>
      %597 = vector.shape_cast %596 : vector<1x1x16x128xf32> to vector<16x128xf32>
      %c30 = arith.constant 30 : index
      %c0_252 = arith.constant 0 : index
      %598 = vector.load %arg3[%c30, %c0_252] : memref<49x128xf32, #tpu.memory_space<vmem>>, vector<1x128xf32>
      %599 = vector.shape_cast %598 : vector<1x128xf32> to vector<128xf32>
      %600 = vector.shape_cast %599 : vector<128xf32> to vector<1x128xf32>
      %601 = vector.broadcast %600 : vector<1x128xf32> to vector<16x128xf32>
      %602 = arith.mulf %597, %601 : vector<16x128xf32>
      %603 = arith.addf %575, %602 : vector<16x128xf32>
      %c23_253 = arith.constant 23 : index
      %c0_254 = arith.constant 0 : index
      %604 = vector.load %arg3[%c23_253, %c0_254] : memref<49x128xf32, #tpu.memory_space<vmem>>, vector<1x128xf32>
      %605 = vector.shape_cast %604 : vector<1x128xf32> to vector<128xf32>
      %606 = vector.shape_cast %605 : vector<128xf32> to vector<1x128xf32>
      %607 = vector.broadcast %606 : vector<1x128xf32> to vector<16x128xf32>
      %608 = arith.mulf %597, %607 : vector<16x128xf32>
      %609 = arith.addf %581, %608 : vector<16x128xf32>
      %c16_255 = arith.constant 16 : index
      %c0_256 = arith.constant 0 : index
      %610 = vector.load %arg3[%c16_255, %c0_256] : memref<49x128xf32, #tpu.memory_space<vmem>>, vector<1x128xf32>
      %611 = vector.shape_cast %610 : vector<1x128xf32> to vector<128xf32>
      %612 = vector.shape_cast %611 : vector<128xf32> to vector<1x128xf32>
      %613 = vector.broadcast %612 : vector<1x128xf32> to vector<16x128xf32>
      %614 = arith.mulf %597, %613 : vector<16x128xf32>
      %615 = arith.addf %587, %614 : vector<16x128xf32>
      %c9_257 = arith.constant 9 : index
      %c0_258 = arith.constant 0 : index
      %616 = vector.load %arg3[%c9_257, %c0_258] : memref<49x128xf32, #tpu.memory_space<vmem>>, vector<1x128xf32>
      %617 = vector.shape_cast %616 : vector<1x128xf32> to vector<128xf32>
      %618 = vector.shape_cast %617 : vector<128xf32> to vector<1x128xf32>
      %619 = vector.broadcast %618 : vector<1x128xf32> to vector<16x128xf32>
      %620 = arith.mulf %597, %619 : vector<16x128xf32>
      %621 = arith.addf %593, %620 : vector<16x128xf32>
      %c4_i32_259 = arith.constant 4 : i32
      %622 = arith.addi %5, %c4_i32_259 : i32
      %c0_260 = arith.constant 0 : index
      %623 = arith.index_cast %622 : i32 to index
      %c3_261 = arith.constant 3 : index
      %c0_262 = arith.constant 0 : index
      %624 = vector.load %arg2[%c0_260, %623, %c3_261, %c0_262] : memref<1x22x24x128xf32, #tpu.memory_space<vmem>>, vector<1x1x16x128xf32>
      %625 = vector.shape_cast %624 : vector<1x1x16x128xf32> to vector<16x128xf32>
      %c31 = arith.constant 31 : index
      %c0_263 = arith.constant 0 : index
      %626 = vector.load %arg3[%c31, %c0_263] : memref<49x128xf32, #tpu.memory_space<vmem>>, vector<1x128xf32>
      %627 = vector.shape_cast %626 : vector<1x128xf32> to vector<128xf32>
      %628 = vector.shape_cast %627 : vector<128xf32> to vector<1x128xf32>
      %629 = vector.broadcast %628 : vector<1x128xf32> to vector<16x128xf32>
      %630 = arith.mulf %625, %629 : vector<16x128xf32>
      %631 = arith.addf %603, %630 : vector<16x128xf32>
      %c24_264 = arith.constant 24 : index
      %c0_265 = arith.constant 0 : index
      %632 = vector.load %arg3[%c24_264, %c0_265] : memref<49x128xf32, #tpu.memory_space<vmem>>, vector<1x128xf32>
      %633 = vector.shape_cast %632 : vector<1x128xf32> to vector<128xf32>
      %634 = vector.shape_cast %633 : vector<128xf32> to vector<1x128xf32>
      %635 = vector.broadcast %634 : vector<1x128xf32> to vector<16x128xf32>
      %636 = arith.mulf %625, %635 : vector<16x128xf32>
      %637 = arith.addf %609, %636 : vector<16x128xf32>
      %c17_266 = arith.constant 17 : index
      %c0_267 = arith.constant 0 : index
      %638 = vector.load %arg3[%c17_266, %c0_267] : memref<49x128xf32, #tpu.memory_space<vmem>>, vector<1x128xf32>
      %639 = vector.shape_cast %638 : vector<1x128xf32> to vector<128xf32>
      %640 = vector.shape_cast %639 : vector<128xf32> to vector<1x128xf32>
      %641 = vector.broadcast %640 : vector<1x128xf32> to vector<16x128xf32>
      %642 = arith.mulf %625, %641 : vector<16x128xf32>
      %643 = arith.addf %615, %642 : vector<16x128xf32>
      %c10_268 = arith.constant 10 : index
      %c0_269 = arith.constant 0 : index
      %644 = vector.load %arg3[%c10_268, %c0_269] : memref<49x128xf32, #tpu.memory_space<vmem>>, vector<1x128xf32>
      %645 = vector.shape_cast %644 : vector<1x128xf32> to vector<128xf32>
      %646 = vector.shape_cast %645 : vector<128xf32> to vector<1x128xf32>
      %647 = vector.broadcast %646 : vector<1x128xf32> to vector<16x128xf32>
      %648 = arith.mulf %625, %647 : vector<16x128xf32>
      %649 = arith.addf %621, %648 : vector<16x128xf32>
      %c4_i32_270 = arith.constant 4 : i32
      %650 = arith.addi %5, %c4_i32_270 : i32
      %c0_271 = arith.constant 0 : index
      %651 = arith.index_cast %650 : i32 to index
      %c4_272 = arith.constant 4 : index
      %c0_273 = arith.constant 0 : index
      %652 = vector.load %arg2[%c0_271, %651, %c4_272, %c0_273] : memref<1x22x24x128xf32, #tpu.memory_space<vmem>>, vector<1x1x16x128xf32>
      %653 = vector.shape_cast %652 : vector<1x1x16x128xf32> to vector<16x128xf32>
      %c32 = arith.constant 32 : index
      %c0_274 = arith.constant 0 : index
      %654 = vector.load %arg3[%c32, %c0_274] : memref<49x128xf32, #tpu.memory_space<vmem>>, vector<1x128xf32>
      %655 = vector.shape_cast %654 : vector<1x128xf32> to vector<128xf32>
      %656 = vector.shape_cast %655 : vector<128xf32> to vector<1x128xf32>
      %657 = vector.broadcast %656 : vector<1x128xf32> to vector<16x128xf32>
      %658 = arith.mulf %653, %657 : vector<16x128xf32>
      %659 = arith.addf %631, %658 : vector<16x128xf32>
      %c25_275 = arith.constant 25 : index
      %c0_276 = arith.constant 0 : index
      %660 = vector.load %arg3[%c25_275, %c0_276] : memref<49x128xf32, #tpu.memory_space<vmem>>, vector<1x128xf32>
      %661 = vector.shape_cast %660 : vector<1x128xf32> to vector<128xf32>
      %662 = vector.shape_cast %661 : vector<128xf32> to vector<1x128xf32>
      %663 = vector.broadcast %662 : vector<1x128xf32> to vector<16x128xf32>
      %664 = arith.mulf %653, %663 : vector<16x128xf32>
      %665 = arith.addf %637, %664 : vector<16x128xf32>
      %c18_277 = arith.constant 18 : index
      %c0_278 = arith.constant 0 : index
      %666 = vector.load %arg3[%c18_277, %c0_278] : memref<49x128xf32, #tpu.memory_space<vmem>>, vector<1x128xf32>
      %667 = vector.shape_cast %666 : vector<1x128xf32> to vector<128xf32>
      %668 = vector.shape_cast %667 : vector<128xf32> to vector<1x128xf32>
      %669 = vector.broadcast %668 : vector<1x128xf32> to vector<16x128xf32>
      %670 = arith.mulf %653, %669 : vector<16x128xf32>
      %671 = arith.addf %643, %670 : vector<16x128xf32>
      %c11_279 = arith.constant 11 : index
      %c0_280 = arith.constant 0 : index
      %672 = vector.load %arg3[%c11_279, %c0_280] : memref<49x128xf32, #tpu.memory_space<vmem>>, vector<1x128xf32>
      %673 = vector.shape_cast %672 : vector<1x128xf32> to vector<128xf32>
      %674 = vector.shape_cast %673 : vector<128xf32> to vector<1x128xf32>
      %675 = vector.broadcast %674 : vector<1x128xf32> to vector<16x128xf32>
      %676 = arith.mulf %653, %675 : vector<16x128xf32>
      %677 = arith.addf %649, %676 : vector<16x128xf32>
      %c4_i32_281 = arith.constant 4 : i32
      %678 = arith.addi %5, %c4_i32_281 : i32
      %c0_282 = arith.constant 0 : index
      %679 = arith.index_cast %678 : i32 to index
      %c5_283 = arith.constant 5 : index
      %c0_284 = arith.constant 0 : index
      %680 = vector.load %arg2[%c0_282, %679, %c5_283, %c0_284] : memref<1x22x24x128xf32, #tpu.memory_space<vmem>>, vector<1x1x16x128xf32>
      %681 = vector.shape_cast %680 : vector<1x1x16x128xf32> to vector<16x128xf32>
      %c33 = arith.constant 33 : index
      %c0_285 = arith.constant 0 : index
      %682 = vector.load %arg3[%c33, %c0_285] : memref<49x128xf32, #tpu.memory_space<vmem>>, vector<1x128xf32>
      %683 = vector.shape_cast %682 : vector<1x128xf32> to vector<128xf32>
      %684 = vector.shape_cast %683 : vector<128xf32> to vector<1x128xf32>
      %685 = vector.broadcast %684 : vector<1x128xf32> to vector<16x128xf32>
      %686 = arith.mulf %681, %685 : vector<16x128xf32>
      %687 = arith.addf %659, %686 : vector<16x128xf32>
      %c26_286 = arith.constant 26 : index
      %c0_287 = arith.constant 0 : index
      %688 = vector.load %arg3[%c26_286, %c0_287] : memref<49x128xf32, #tpu.memory_space<vmem>>, vector<1x128xf32>
      %689 = vector.shape_cast %688 : vector<1x128xf32> to vector<128xf32>
      %690 = vector.shape_cast %689 : vector<128xf32> to vector<1x128xf32>
      %691 = vector.broadcast %690 : vector<1x128xf32> to vector<16x128xf32>
      %692 = arith.mulf %681, %691 : vector<16x128xf32>
      %693 = arith.addf %665, %692 : vector<16x128xf32>
      %c19_288 = arith.constant 19 : index
      %c0_289 = arith.constant 0 : index
      %694 = vector.load %arg3[%c19_288, %c0_289] : memref<49x128xf32, #tpu.memory_space<vmem>>, vector<1x128xf32>
      %695 = vector.shape_cast %694 : vector<1x128xf32> to vector<128xf32>
      %696 = vector.shape_cast %695 : vector<128xf32> to vector<1x128xf32>
      %697 = vector.broadcast %696 : vector<1x128xf32> to vector<16x128xf32>
      %698 = arith.mulf %681, %697 : vector<16x128xf32>
      %699 = arith.addf %671, %698 : vector<16x128xf32>
      %c12_290 = arith.constant 12 : index
      %c0_291 = arith.constant 0 : index
      %700 = vector.load %arg3[%c12_290, %c0_291] : memref<49x128xf32, #tpu.memory_space<vmem>>, vector<1x128xf32>
      %701 = vector.shape_cast %700 : vector<1x128xf32> to vector<128xf32>
      %702 = vector.shape_cast %701 : vector<128xf32> to vector<1x128xf32>
      %703 = vector.broadcast %702 : vector<1x128xf32> to vector<16x128xf32>
      %704 = arith.mulf %681, %703 : vector<16x128xf32>
      %705 = arith.addf %677, %704 : vector<16x128xf32>
      %c4_i32_292 = arith.constant 4 : i32
      %706 = arith.addi %5, %c4_i32_292 : i32
      %c0_293 = arith.constant 0 : index
      %707 = arith.index_cast %706 : i32 to index
      %c6_294 = arith.constant 6 : index
      %c0_295 = arith.constant 0 : index
      %708 = vector.load %arg2[%c0_293, %707, %c6_294, %c0_295] : memref<1x22x24x128xf32, #tpu.memory_space<vmem>>, vector<1x1x16x128xf32>
      %709 = vector.shape_cast %708 : vector<1x1x16x128xf32> to vector<16x128xf32>
      %c34 = arith.constant 34 : index
      %c0_296 = arith.constant 0 : index
      %710 = vector.load %arg3[%c34, %c0_296] : memref<49x128xf32, #tpu.memory_space<vmem>>, vector<1x128xf32>
      %711 = vector.shape_cast %710 : vector<1x128xf32> to vector<128xf32>
      %712 = vector.shape_cast %711 : vector<128xf32> to vector<1x128xf32>
      %713 = vector.broadcast %712 : vector<1x128xf32> to vector<16x128xf32>
      %714 = arith.mulf %709, %713 : vector<16x128xf32>
      %715 = arith.addf %687, %714 : vector<16x128xf32>
      %c27_297 = arith.constant 27 : index
      %c0_298 = arith.constant 0 : index
      %716 = vector.load %arg3[%c27_297, %c0_298] : memref<49x128xf32, #tpu.memory_space<vmem>>, vector<1x128xf32>
      %717 = vector.shape_cast %716 : vector<1x128xf32> to vector<128xf32>
      %718 = vector.shape_cast %717 : vector<128xf32> to vector<1x128xf32>
      %719 = vector.broadcast %718 : vector<1x128xf32> to vector<16x128xf32>
      %720 = arith.mulf %709, %719 : vector<16x128xf32>
      %721 = arith.addf %693, %720 : vector<16x128xf32>
      %c20_299 = arith.constant 20 : index
      %c0_300 = arith.constant 0 : index
      %722 = vector.load %arg3[%c20_299, %c0_300] : memref<49x128xf32, #tpu.memory_space<vmem>>, vector<1x128xf32>
      %723 = vector.shape_cast %722 : vector<1x128xf32> to vector<128xf32>
      %724 = vector.shape_cast %723 : vector<128xf32> to vector<1x128xf32>
      %725 = vector.broadcast %724 : vector<1x128xf32> to vector<16x128xf32>
      %726 = arith.mulf %709, %725 : vector<16x128xf32>
      %727 = arith.addf %699, %726 : vector<16x128xf32>
      %c13_301 = arith.constant 13 : index
      %c0_302 = arith.constant 0 : index
      %728 = vector.load %arg3[%c13_301, %c0_302] : memref<49x128xf32, #tpu.memory_space<vmem>>, vector<1x128xf32>
      %729 = vector.shape_cast %728 : vector<1x128xf32> to vector<128xf32>
      %730 = vector.shape_cast %729 : vector<128xf32> to vector<1x128xf32>
      %731 = vector.broadcast %730 : vector<1x128xf32> to vector<16x128xf32>
      %732 = arith.mulf %709, %731 : vector<16x128xf32>
      %733 = arith.addf %705, %732 : vector<16x128xf32>
      %c5_i32 = arith.constant 5 : i32
      %734 = arith.addi %5, %c5_i32 : i32
      %c0_303 = arith.constant 0 : index
      %735 = arith.index_cast %734 : i32 to index
      %c0_304 = arith.constant 0 : index
      %c0_305 = arith.constant 0 : index
      %736 = vector.load %arg2[%c0_303, %735, %c0_304, %c0_305] : memref<1x22x24x128xf32, #tpu.memory_space<vmem>>, vector<1x1x16x128xf32>
      %737 = vector.shape_cast %736 : vector<1x1x16x128xf32> to vector<16x128xf32>
      %c35 = arith.constant 35 : index
      %c0_306 = arith.constant 0 : index
      %738 = vector.load %arg3[%c35, %c0_306] : memref<49x128xf32, #tpu.memory_space<vmem>>, vector<1x128xf32>
      %739 = vector.shape_cast %738 : vector<1x128xf32> to vector<128xf32>
      %740 = vector.shape_cast %739 : vector<128xf32> to vector<1x128xf32>
      %741 = vector.broadcast %740 : vector<1x128xf32> to vector<16x128xf32>
      %742 = arith.mulf %737, %741 : vector<16x128xf32>
      %743 = arith.addf %715, %742 : vector<16x128xf32>
      %c28_307 = arith.constant 28 : index
      %c0_308 = arith.constant 0 : index
      %744 = vector.load %arg3[%c28_307, %c0_308] : memref<49x128xf32, #tpu.memory_space<vmem>>, vector<1x128xf32>
      %745 = vector.shape_cast %744 : vector<1x128xf32> to vector<128xf32>
      %746 = vector.shape_cast %745 : vector<128xf32> to vector<1x128xf32>
      %747 = vector.broadcast %746 : vector<1x128xf32> to vector<16x128xf32>
      %748 = arith.mulf %737, %747 : vector<16x128xf32>
      %749 = arith.addf %721, %748 : vector<16x128xf32>
      %c21_309 = arith.constant 21 : index
      %c0_310 = arith.constant 0 : index
      %750 = vector.load %arg3[%c21_309, %c0_310] : memref<49x128xf32, #tpu.memory_space<vmem>>, vector<1x128xf32>
      %751 = vector.shape_cast %750 : vector<1x128xf32> to vector<128xf32>
      %752 = vector.shape_cast %751 : vector<128xf32> to vector<1x128xf32>
      %753 = vector.broadcast %752 : vector<1x128xf32> to vector<16x128xf32>
      %754 = arith.mulf %737, %753 : vector<16x128xf32>
      %755 = arith.addf %727, %754 : vector<16x128xf32>
      %c14_311 = arith.constant 14 : index
      %c0_312 = arith.constant 0 : index
      %756 = vector.load %arg3[%c14_311, %c0_312] : memref<49x128xf32, #tpu.memory_space<vmem>>, vector<1x128xf32>
      %757 = vector.shape_cast %756 : vector<1x128xf32> to vector<128xf32>
      %758 = vector.shape_cast %757 : vector<128xf32> to vector<1x128xf32>
      %759 = vector.broadcast %758 : vector<1x128xf32> to vector<16x128xf32>
      %760 = arith.mulf %737, %759 : vector<16x128xf32>
      %761 = arith.addf %733, %760 : vector<16x128xf32>
      %c5_i32_313 = arith.constant 5 : i32
      %762 = arith.addi %5, %c5_i32_313 : i32
      %c0_314 = arith.constant 0 : index
      %763 = arith.index_cast %762 : i32 to index
      %c1_315 = arith.constant 1 : index
      %c0_316 = arith.constant 0 : index
      %764 = vector.load %arg2[%c0_314, %763, %c1_315, %c0_316] : memref<1x22x24x128xf32, #tpu.memory_space<vmem>>, vector<1x1x16x128xf32>
      %765 = vector.shape_cast %764 : vector<1x1x16x128xf32> to vector<16x128xf32>
      %c36 = arith.constant 36 : index
      %c0_317 = arith.constant 0 : index
      %766 = vector.load %arg3[%c36, %c0_317] : memref<49x128xf32, #tpu.memory_space<vmem>>, vector<1x128xf32>
      %767 = vector.shape_cast %766 : vector<1x128xf32> to vector<128xf32>
      %768 = vector.shape_cast %767 : vector<128xf32> to vector<1x128xf32>
      %769 = vector.broadcast %768 : vector<1x128xf32> to vector<16x128xf32>
      %770 = arith.mulf %765, %769 : vector<16x128xf32>
      %771 = arith.addf %743, %770 : vector<16x128xf32>
      %c29_318 = arith.constant 29 : index
      %c0_319 = arith.constant 0 : index
      %772 = vector.load %arg3[%c29_318, %c0_319] : memref<49x128xf32, #tpu.memory_space<vmem>>, vector<1x128xf32>
      %773 = vector.shape_cast %772 : vector<1x128xf32> to vector<128xf32>
      %774 = vector.shape_cast %773 : vector<128xf32> to vector<1x128xf32>
      %775 = vector.broadcast %774 : vector<1x128xf32> to vector<16x128xf32>
      %776 = arith.mulf %765, %775 : vector<16x128xf32>
      %777 = arith.addf %749, %776 : vector<16x128xf32>
      %c22_320 = arith.constant 22 : index
      %c0_321 = arith.constant 0 : index
      %778 = vector.load %arg3[%c22_320, %c0_321] : memref<49x128xf32, #tpu.memory_space<vmem>>, vector<1x128xf32>
      %779 = vector.shape_cast %778 : vector<1x128xf32> to vector<128xf32>
      %780 = vector.shape_cast %779 : vector<128xf32> to vector<1x128xf32>
      %781 = vector.broadcast %780 : vector<1x128xf32> to vector<16x128xf32>
      %782 = arith.mulf %765, %781 : vector<16x128xf32>
      %783 = arith.addf %755, %782 : vector<16x128xf32>
      %c15_322 = arith.constant 15 : index
      %c0_323 = arith.constant 0 : index
      %784 = vector.load %arg3[%c15_322, %c0_323] : memref<49x128xf32, #tpu.memory_space<vmem>>, vector<1x128xf32>
      %785 = vector.shape_cast %784 : vector<1x128xf32> to vector<128xf32>
      %786 = vector.shape_cast %785 : vector<128xf32> to vector<1x128xf32>
      %787 = vector.broadcast %786 : vector<1x128xf32> to vector<16x128xf32>
      %788 = arith.mulf %765, %787 : vector<16x128xf32>
      %789 = arith.addf %761, %788 : vector<16x128xf32>
      %c5_i32_324 = arith.constant 5 : i32
      %790 = arith.addi %5, %c5_i32_324 : i32
      %c0_325 = arith.constant 0 : index
      %791 = arith.index_cast %790 : i32 to index
      %c2_326 = arith.constant 2 : index
      %c0_327 = arith.constant 0 : index
      %792 = vector.load %arg2[%c0_325, %791, %c2_326, %c0_327] : memref<1x22x24x128xf32, #tpu.memory_space<vmem>>, vector<1x1x16x128xf32>
      %793 = vector.shape_cast %792 : vector<1x1x16x128xf32> to vector<16x128xf32>
      %c37 = arith.constant 37 : index
      %c0_328 = arith.constant 0 : index
      %794 = vector.load %arg3[%c37, %c0_328] : memref<49x128xf32, #tpu.memory_space<vmem>>, vector<1x128xf32>
      %795 = vector.shape_cast %794 : vector<1x128xf32> to vector<128xf32>
      %796 = vector.shape_cast %795 : vector<128xf32> to vector<1x128xf32>
      %797 = vector.broadcast %796 : vector<1x128xf32> to vector<16x128xf32>
      %798 = arith.mulf %793, %797 : vector<16x128xf32>
      %799 = arith.addf %771, %798 : vector<16x128xf32>
      %c30_329 = arith.constant 30 : index
      %c0_330 = arith.constant 0 : index
      %800 = vector.load %arg3[%c30_329, %c0_330] : memref<49x128xf32, #tpu.memory_space<vmem>>, vector<1x128xf32>
      %801 = vector.shape_cast %800 : vector<1x128xf32> to vector<128xf32>
      %802 = vector.shape_cast %801 : vector<128xf32> to vector<1x128xf32>
      %803 = vector.broadcast %802 : vector<1x128xf32> to vector<16x128xf32>
      %804 = arith.mulf %793, %803 : vector<16x128xf32>
      %805 = arith.addf %777, %804 : vector<16x128xf32>
      %c23_331 = arith.constant 23 : index
      %c0_332 = arith.constant 0 : index
      %806 = vector.load %arg3[%c23_331, %c0_332] : memref<49x128xf32, #tpu.memory_space<vmem>>, vector<1x128xf32>
      %807 = vector.shape_cast %806 : vector<1x128xf32> to vector<128xf32>
      %808 = vector.shape_cast %807 : vector<128xf32> to vector<1x128xf32>
      %809 = vector.broadcast %808 : vector<1x128xf32> to vector<16x128xf32>
      %810 = arith.mulf %793, %809 : vector<16x128xf32>
      %811 = arith.addf %783, %810 : vector<16x128xf32>
      %c16_333 = arith.constant 16 : index
      %c0_334 = arith.constant 0 : index
      %812 = vector.load %arg3[%c16_333, %c0_334] : memref<49x128xf32, #tpu.memory_space<vmem>>, vector<1x128xf32>
      %813 = vector.shape_cast %812 : vector<1x128xf32> to vector<128xf32>
      %814 = vector.shape_cast %813 : vector<128xf32> to vector<1x128xf32>
      %815 = vector.broadcast %814 : vector<1x128xf32> to vector<16x128xf32>
      %816 = arith.mulf %793, %815 : vector<16x128xf32>
      %817 = arith.addf %789, %816 : vector<16x128xf32>
      %c5_i32_335 = arith.constant 5 : i32
      %818 = arith.addi %5, %c5_i32_335 : i32
      %c0_336 = arith.constant 0 : index
      %819 = arith.index_cast %818 : i32 to index
      %c3_337 = arith.constant 3 : index
      %c0_338 = arith.constant 0 : index
      %820 = vector.load %arg2[%c0_336, %819, %c3_337, %c0_338] : memref<1x22x24x128xf32, #tpu.memory_space<vmem>>, vector<1x1x16x128xf32>
      %821 = vector.shape_cast %820 : vector<1x1x16x128xf32> to vector<16x128xf32>
      %c38 = arith.constant 38 : index
      %c0_339 = arith.constant 0 : index
      %822 = vector.load %arg3[%c38, %c0_339] : memref<49x128xf32, #tpu.memory_space<vmem>>, vector<1x128xf32>
      %823 = vector.shape_cast %822 : vector<1x128xf32> to vector<128xf32>
      %824 = vector.shape_cast %823 : vector<128xf32> to vector<1x128xf32>
      %825 = vector.broadcast %824 : vector<1x128xf32> to vector<16x128xf32>
      %826 = arith.mulf %821, %825 : vector<16x128xf32>
      %827 = arith.addf %799, %826 : vector<16x128xf32>
      %c31_340 = arith.constant 31 : index
      %c0_341 = arith.constant 0 : index
      %828 = vector.load %arg3[%c31_340, %c0_341] : memref<49x128xf32, #tpu.memory_space<vmem>>, vector<1x128xf32>
      %829 = vector.shape_cast %828 : vector<1x128xf32> to vector<128xf32>
      %830 = vector.shape_cast %829 : vector<128xf32> to vector<1x128xf32>
      %831 = vector.broadcast %830 : vector<1x128xf32> to vector<16x128xf32>
      %832 = arith.mulf %821, %831 : vector<16x128xf32>
      %833 = arith.addf %805, %832 : vector<16x128xf32>
      %c24_342 = arith.constant 24 : index
      %c0_343 = arith.constant 0 : index
      %834 = vector.load %arg3[%c24_342, %c0_343] : memref<49x128xf32, #tpu.memory_space<vmem>>, vector<1x128xf32>
      %835 = vector.shape_cast %834 : vector<1x128xf32> to vector<128xf32>
      %836 = vector.shape_cast %835 : vector<128xf32> to vector<1x128xf32>
      %837 = vector.broadcast %836 : vector<1x128xf32> to vector<16x128xf32>
      %838 = arith.mulf %821, %837 : vector<16x128xf32>
      %839 = arith.addf %811, %838 : vector<16x128xf32>
      %c17_344 = arith.constant 17 : index
      %c0_345 = arith.constant 0 : index
      %840 = vector.load %arg3[%c17_344, %c0_345] : memref<49x128xf32, #tpu.memory_space<vmem>>, vector<1x128xf32>
      %841 = vector.shape_cast %840 : vector<1x128xf32> to vector<128xf32>
      %842 = vector.shape_cast %841 : vector<128xf32> to vector<1x128xf32>
      %843 = vector.broadcast %842 : vector<1x128xf32> to vector<16x128xf32>
      %844 = arith.mulf %821, %843 : vector<16x128xf32>
      %845 = arith.addf %817, %844 : vector<16x128xf32>
      %c5_i32_346 = arith.constant 5 : i32
      %846 = arith.addi %5, %c5_i32_346 : i32
      %c0_347 = arith.constant 0 : index
      %847 = arith.index_cast %846 : i32 to index
      %c4_348 = arith.constant 4 : index
      %c0_349 = arith.constant 0 : index
      %848 = vector.load %arg2[%c0_347, %847, %c4_348, %c0_349] : memref<1x22x24x128xf32, #tpu.memory_space<vmem>>, vector<1x1x16x128xf32>
      %849 = vector.shape_cast %848 : vector<1x1x16x128xf32> to vector<16x128xf32>
      %c39 = arith.constant 39 : index
      %c0_350 = arith.constant 0 : index
      %850 = vector.load %arg3[%c39, %c0_350] : memref<49x128xf32, #tpu.memory_space<vmem>>, vector<1x128xf32>
      %851 = vector.shape_cast %850 : vector<1x128xf32> to vector<128xf32>
      %852 = vector.shape_cast %851 : vector<128xf32> to vector<1x128xf32>
      %853 = vector.broadcast %852 : vector<1x128xf32> to vector<16x128xf32>
      %854 = arith.mulf %849, %853 : vector<16x128xf32>
      %855 = arith.addf %827, %854 : vector<16x128xf32>
      %c32_351 = arith.constant 32 : index
      %c0_352 = arith.constant 0 : index
      %856 = vector.load %arg3[%c32_351, %c0_352] : memref<49x128xf32, #tpu.memory_space<vmem>>, vector<1x128xf32>
      %857 = vector.shape_cast %856 : vector<1x128xf32> to vector<128xf32>
      %858 = vector.shape_cast %857 : vector<128xf32> to vector<1x128xf32>
      %859 = vector.broadcast %858 : vector<1x128xf32> to vector<16x128xf32>
      %860 = arith.mulf %849, %859 : vector<16x128xf32>
      %861 = arith.addf %833, %860 : vector<16x128xf32>
      %c25_353 = arith.constant 25 : index
      %c0_354 = arith.constant 0 : index
      %862 = vector.load %arg3[%c25_353, %c0_354] : memref<49x128xf32, #tpu.memory_space<vmem>>, vector<1x128xf32>
      %863 = vector.shape_cast %862 : vector<1x128xf32> to vector<128xf32>
      %864 = vector.shape_cast %863 : vector<128xf32> to vector<1x128xf32>
      %865 = vector.broadcast %864 : vector<1x128xf32> to vector<16x128xf32>
      %866 = arith.mulf %849, %865 : vector<16x128xf32>
      %867 = arith.addf %839, %866 : vector<16x128xf32>
      %c18_355 = arith.constant 18 : index
      %c0_356 = arith.constant 0 : index
      %868 = vector.load %arg3[%c18_355, %c0_356] : memref<49x128xf32, #tpu.memory_space<vmem>>, vector<1x128xf32>
      %869 = vector.shape_cast %868 : vector<1x128xf32> to vector<128xf32>
      %870 = vector.shape_cast %869 : vector<128xf32> to vector<1x128xf32>
      %871 = vector.broadcast %870 : vector<1x128xf32> to vector<16x128xf32>
      %872 = arith.mulf %849, %871 : vector<16x128xf32>
      %873 = arith.addf %845, %872 : vector<16x128xf32>
      %c5_i32_357 = arith.constant 5 : i32
      %874 = arith.addi %5, %c5_i32_357 : i32
      %c0_358 = arith.constant 0 : index
      %875 = arith.index_cast %874 : i32 to index
      %c5_359 = arith.constant 5 : index
      %c0_360 = arith.constant 0 : index
      %876 = vector.load %arg2[%c0_358, %875, %c5_359, %c0_360] : memref<1x22x24x128xf32, #tpu.memory_space<vmem>>, vector<1x1x16x128xf32>
      %877 = vector.shape_cast %876 : vector<1x1x16x128xf32> to vector<16x128xf32>
      %c40 = arith.constant 40 : index
      %c0_361 = arith.constant 0 : index
      %878 = vector.load %arg3[%c40, %c0_361] : memref<49x128xf32, #tpu.memory_space<vmem>>, vector<1x128xf32>
      %879 = vector.shape_cast %878 : vector<1x128xf32> to vector<128xf32>
      %880 = vector.shape_cast %879 : vector<128xf32> to vector<1x128xf32>
      %881 = vector.broadcast %880 : vector<1x128xf32> to vector<16x128xf32>
      %882 = arith.mulf %877, %881 : vector<16x128xf32>
      %883 = arith.addf %855, %882 : vector<16x128xf32>
      %c33_362 = arith.constant 33 : index
      %c0_363 = arith.constant 0 : index
      %884 = vector.load %arg3[%c33_362, %c0_363] : memref<49x128xf32, #tpu.memory_space<vmem>>, vector<1x128xf32>
      %885 = vector.shape_cast %884 : vector<1x128xf32> to vector<128xf32>
      %886 = vector.shape_cast %885 : vector<128xf32> to vector<1x128xf32>
      %887 = vector.broadcast %886 : vector<1x128xf32> to vector<16x128xf32>
      %888 = arith.mulf %877, %887 : vector<16x128xf32>
      %889 = arith.addf %861, %888 : vector<16x128xf32>
      %c26_364 = arith.constant 26 : index
      %c0_365 = arith.constant 0 : index
      %890 = vector.load %arg3[%c26_364, %c0_365] : memref<49x128xf32, #tpu.memory_space<vmem>>, vector<1x128xf32>
      %891 = vector.shape_cast %890 : vector<1x128xf32> to vector<128xf32>
      %892 = vector.shape_cast %891 : vector<128xf32> to vector<1x128xf32>
      %893 = vector.broadcast %892 : vector<1x128xf32> to vector<16x128xf32>
      %894 = arith.mulf %877, %893 : vector<16x128xf32>
      %895 = arith.addf %867, %894 : vector<16x128xf32>
      %c19_366 = arith.constant 19 : index
      %c0_367 = arith.constant 0 : index
      %896 = vector.load %arg3[%c19_366, %c0_367] : memref<49x128xf32, #tpu.memory_space<vmem>>, vector<1x128xf32>
      %897 = vector.shape_cast %896 : vector<1x128xf32> to vector<128xf32>
      %898 = vector.shape_cast %897 : vector<128xf32> to vector<1x128xf32>
      %899 = vector.broadcast %898 : vector<1x128xf32> to vector<16x128xf32>
      %900 = arith.mulf %877, %899 : vector<16x128xf32>
      %901 = arith.addf %873, %900 : vector<16x128xf32>
      %c5_i32_368 = arith.constant 5 : i32
      %902 = arith.addi %5, %c5_i32_368 : i32
      %c0_369 = arith.constant 0 : index
      %903 = arith.index_cast %902 : i32 to index
      %c6_370 = arith.constant 6 : index
      %c0_371 = arith.constant 0 : index
      %904 = vector.load %arg2[%c0_369, %903, %c6_370, %c0_371] : memref<1x22x24x128xf32, #tpu.memory_space<vmem>>, vector<1x1x16x128xf32>
      %905 = vector.shape_cast %904 : vector<1x1x16x128xf32> to vector<16x128xf32>
      %c41 = arith.constant 41 : index
      %c0_372 = arith.constant 0 : index
      %906 = vector.load %arg3[%c41, %c0_372] : memref<49x128xf32, #tpu.memory_space<vmem>>, vector<1x128xf32>
      %907 = vector.shape_cast %906 : vector<1x128xf32> to vector<128xf32>
      %908 = vector.shape_cast %907 : vector<128xf32> to vector<1x128xf32>
      %909 = vector.broadcast %908 : vector<1x128xf32> to vector<16x128xf32>
      %910 = arith.mulf %905, %909 : vector<16x128xf32>
      %911 = arith.addf %883, %910 : vector<16x128xf32>
      %c34_373 = arith.constant 34 : index
      %c0_374 = arith.constant 0 : index
      %912 = vector.load %arg3[%c34_373, %c0_374] : memref<49x128xf32, #tpu.memory_space<vmem>>, vector<1x128xf32>
      %913 = vector.shape_cast %912 : vector<1x128xf32> to vector<128xf32>
      %914 = vector.shape_cast %913 : vector<128xf32> to vector<1x128xf32>
      %915 = vector.broadcast %914 : vector<1x128xf32> to vector<16x128xf32>
      %916 = arith.mulf %905, %915 : vector<16x128xf32>
      %917 = arith.addf %889, %916 : vector<16x128xf32>
      %c27_375 = arith.constant 27 : index
      %c0_376 = arith.constant 0 : index
      %918 = vector.load %arg3[%c27_375, %c0_376] : memref<49x128xf32, #tpu.memory_space<vmem>>, vector<1x128xf32>
      %919 = vector.shape_cast %918 : vector<1x128xf32> to vector<128xf32>
      %920 = vector.shape_cast %919 : vector<128xf32> to vector<1x128xf32>
      %921 = vector.broadcast %920 : vector<1x128xf32> to vector<16x128xf32>
      %922 = arith.mulf %905, %921 : vector<16x128xf32>
      %923 = arith.addf %895, %922 : vector<16x128xf32>
      %c20_377 = arith.constant 20 : index
      %c0_378 = arith.constant 0 : index
      %924 = vector.load %arg3[%c20_377, %c0_378] : memref<49x128xf32, #tpu.memory_space<vmem>>, vector<1x128xf32>
      %925 = vector.shape_cast %924 : vector<1x128xf32> to vector<128xf32>
      %926 = vector.shape_cast %925 : vector<128xf32> to vector<1x128xf32>
      %927 = vector.broadcast %926 : vector<1x128xf32> to vector<16x128xf32>
      %928 = arith.mulf %905, %927 : vector<16x128xf32>
      %929 = arith.addf %901, %928 : vector<16x128xf32>
      %c6_i32 = arith.constant 6 : i32
      %930 = arith.addi %5, %c6_i32 : i32
      %c0_379 = arith.constant 0 : index
      %931 = arith.index_cast %930 : i32 to index
      %c0_380 = arith.constant 0 : index
      %c0_381 = arith.constant 0 : index
      %932 = vector.load %arg2[%c0_379, %931, %c0_380, %c0_381] : memref<1x22x24x128xf32, #tpu.memory_space<vmem>>, vector<1x1x16x128xf32>
      %933 = vector.shape_cast %932 : vector<1x1x16x128xf32> to vector<16x128xf32>
      %c42 = arith.constant 42 : index
      %c0_382 = arith.constant 0 : index
      %934 = vector.load %arg3[%c42, %c0_382] : memref<49x128xf32, #tpu.memory_space<vmem>>, vector<1x128xf32>
      %935 = vector.shape_cast %934 : vector<1x128xf32> to vector<128xf32>
      %936 = vector.shape_cast %935 : vector<128xf32> to vector<1x128xf32>
      %937 = vector.broadcast %936 : vector<1x128xf32> to vector<16x128xf32>
      %938 = arith.mulf %933, %937 : vector<16x128xf32>
      %939 = arith.addf %911, %938 : vector<16x128xf32>
      %c35_383 = arith.constant 35 : index
      %c0_384 = arith.constant 0 : index
      %940 = vector.load %arg3[%c35_383, %c0_384] : memref<49x128xf32, #tpu.memory_space<vmem>>, vector<1x128xf32>
      %941 = vector.shape_cast %940 : vector<1x128xf32> to vector<128xf32>
      %942 = vector.shape_cast %941 : vector<128xf32> to vector<1x128xf32>
      %943 = vector.broadcast %942 : vector<1x128xf32> to vector<16x128xf32>
      %944 = arith.mulf %933, %943 : vector<16x128xf32>
      %945 = arith.addf %917, %944 : vector<16x128xf32>
      %c28_385 = arith.constant 28 : index
      %c0_386 = arith.constant 0 : index
      %946 = vector.load %arg3[%c28_385, %c0_386] : memref<49x128xf32, #tpu.memory_space<vmem>>, vector<1x128xf32>
      %947 = vector.shape_cast %946 : vector<1x128xf32> to vector<128xf32>
      %948 = vector.shape_cast %947 : vector<128xf32> to vector<1x128xf32>
      %949 = vector.broadcast %948 : vector<1x128xf32> to vector<16x128xf32>
      %950 = arith.mulf %933, %949 : vector<16x128xf32>
      %951 = arith.addf %923, %950 : vector<16x128xf32>
      %c21_387 = arith.constant 21 : index
      %c0_388 = arith.constant 0 : index
      %952 = vector.load %arg3[%c21_387, %c0_388] : memref<49x128xf32, #tpu.memory_space<vmem>>, vector<1x128xf32>
      %953 = vector.shape_cast %952 : vector<1x128xf32> to vector<128xf32>
      %954 = vector.shape_cast %953 : vector<128xf32> to vector<1x128xf32>
      %955 = vector.broadcast %954 : vector<1x128xf32> to vector<16x128xf32>
      %956 = arith.mulf %933, %955 : vector<16x128xf32>
      %957 = arith.addf %929, %956 : vector<16x128xf32>
      %c6_i32_389 = arith.constant 6 : i32
      %958 = arith.addi %5, %c6_i32_389 : i32
      %c0_390 = arith.constant 0 : index
      %959 = arith.index_cast %958 : i32 to index
      %c1_391 = arith.constant 1 : index
      %c0_392 = arith.constant 0 : index
      %960 = vector.load %arg2[%c0_390, %959, %c1_391, %c0_392] : memref<1x22x24x128xf32, #tpu.memory_space<vmem>>, vector<1x1x16x128xf32>
      %961 = vector.shape_cast %960 : vector<1x1x16x128xf32> to vector<16x128xf32>
      %c43 = arith.constant 43 : index
      %c0_393 = arith.constant 0 : index
      %962 = vector.load %arg3[%c43, %c0_393] : memref<49x128xf32, #tpu.memory_space<vmem>>, vector<1x128xf32>
      %963 = vector.shape_cast %962 : vector<1x128xf32> to vector<128xf32>
      %964 = vector.shape_cast %963 : vector<128xf32> to vector<1x128xf32>
      %965 = vector.broadcast %964 : vector<1x128xf32> to vector<16x128xf32>
      %966 = arith.mulf %961, %965 : vector<16x128xf32>
      %967 = arith.addf %939, %966 : vector<16x128xf32>
      %c36_394 = arith.constant 36 : index
      %c0_395 = arith.constant 0 : index
      %968 = vector.load %arg3[%c36_394, %c0_395] : memref<49x128xf32, #tpu.memory_space<vmem>>, vector<1x128xf32>
      %969 = vector.shape_cast %968 : vector<1x128xf32> to vector<128xf32>
      %970 = vector.shape_cast %969 : vector<128xf32> to vector<1x128xf32>
      %971 = vector.broadcast %970 : vector<1x128xf32> to vector<16x128xf32>
      %972 = arith.mulf %961, %971 : vector<16x128xf32>
      %973 = arith.addf %945, %972 : vector<16x128xf32>
      %c29_396 = arith.constant 29 : index
      %c0_397 = arith.constant 0 : index
      %974 = vector.load %arg3[%c29_396, %c0_397] : memref<49x128xf32, #tpu.memory_space<vmem>>, vector<1x128xf32>
      %975 = vector.shape_cast %974 : vector<1x128xf32> to vector<128xf32>
      %976 = vector.shape_cast %975 : vector<128xf32> to vector<1x128xf32>
      %977 = vector.broadcast %976 : vector<1x128xf32> to vector<16x128xf32>
      %978 = arith.mulf %961, %977 : vector<16x128xf32>
      %979 = arith.addf %951, %978 : vector<16x128xf32>
      %c22_398 = arith.constant 22 : index
      %c0_399 = arith.constant 0 : index
      %980 = vector.load %arg3[%c22_398, %c0_399] : memref<49x128xf32, #tpu.memory_space<vmem>>, vector<1x128xf32>
      %981 = vector.shape_cast %980 : vector<1x128xf32> to vector<128xf32>
      %982 = vector.shape_cast %981 : vector<128xf32> to vector<1x128xf32>
      %983 = vector.broadcast %982 : vector<1x128xf32> to vector<16x128xf32>
      %984 = arith.mulf %961, %983 : vector<16x128xf32>
      %985 = arith.addf %957, %984 : vector<16x128xf32>
      %c6_i32_400 = arith.constant 6 : i32
      %986 = arith.addi %5, %c6_i32_400 : i32
      %c0_401 = arith.constant 0 : index
      %987 = arith.index_cast %986 : i32 to index
      %c2_402 = arith.constant 2 : index
      %c0_403 = arith.constant 0 : index
      %988 = vector.load %arg2[%c0_401, %987, %c2_402, %c0_403] : memref<1x22x24x128xf32, #tpu.memory_space<vmem>>, vector<1x1x16x128xf32>
      %989 = vector.shape_cast %988 : vector<1x1x16x128xf32> to vector<16x128xf32>
      %c44 = arith.constant 44 : index
      %c0_404 = arith.constant 0 : index
      %990 = vector.load %arg3[%c44, %c0_404] : memref<49x128xf32, #tpu.memory_space<vmem>>, vector<1x128xf32>
      %991 = vector.shape_cast %990 : vector<1x128xf32> to vector<128xf32>
      %992 = vector.shape_cast %991 : vector<128xf32> to vector<1x128xf32>
      %993 = vector.broadcast %992 : vector<1x128xf32> to vector<16x128xf32>
      %994 = arith.mulf %989, %993 : vector<16x128xf32>
      %995 = arith.addf %967, %994 : vector<16x128xf32>
      %c37_405 = arith.constant 37 : index
      %c0_406 = arith.constant 0 : index
      %996 = vector.load %arg3[%c37_405, %c0_406] : memref<49x128xf32, #tpu.memory_space<vmem>>, vector<1x128xf32>
      %997 = vector.shape_cast %996 : vector<1x128xf32> to vector<128xf32>
      %998 = vector.shape_cast %997 : vector<128xf32> to vector<1x128xf32>
      %999 = vector.broadcast %998 : vector<1x128xf32> to vector<16x128xf32>
      %1000 = arith.mulf %989, %999 : vector<16x128xf32>
      %1001 = arith.addf %973, %1000 : vector<16x128xf32>
      %c30_407 = arith.constant 30 : index
      %c0_408 = arith.constant 0 : index
      %1002 = vector.load %arg3[%c30_407, %c0_408] : memref<49x128xf32, #tpu.memory_space<vmem>>, vector<1x128xf32>
      %1003 = vector.shape_cast %1002 : vector<1x128xf32> to vector<128xf32>
      %1004 = vector.shape_cast %1003 : vector<128xf32> to vector<1x128xf32>
      %1005 = vector.broadcast %1004 : vector<1x128xf32> to vector<16x128xf32>
      %1006 = arith.mulf %989, %1005 : vector<16x128xf32>
      %1007 = arith.addf %979, %1006 : vector<16x128xf32>
      %c23_409 = arith.constant 23 : index
      %c0_410 = arith.constant 0 : index
      %1008 = vector.load %arg3[%c23_409, %c0_410] : memref<49x128xf32, #tpu.memory_space<vmem>>, vector<1x128xf32>
      %1009 = vector.shape_cast %1008 : vector<1x128xf32> to vector<128xf32>
      %1010 = vector.shape_cast %1009 : vector<128xf32> to vector<1x128xf32>
      %1011 = vector.broadcast %1010 : vector<1x128xf32> to vector<16x128xf32>
      %1012 = arith.mulf %989, %1011 : vector<16x128xf32>
      %1013 = arith.addf %985, %1012 : vector<16x128xf32>
      %c6_i32_411 = arith.constant 6 : i32
      %1014 = arith.addi %5, %c6_i32_411 : i32
      %c0_412 = arith.constant 0 : index
      %1015 = arith.index_cast %1014 : i32 to index
      %c3_413 = arith.constant 3 : index
      %c0_414 = arith.constant 0 : index
      %1016 = vector.load %arg2[%c0_412, %1015, %c3_413, %c0_414] : memref<1x22x24x128xf32, #tpu.memory_space<vmem>>, vector<1x1x16x128xf32>
      %1017 = vector.shape_cast %1016 : vector<1x1x16x128xf32> to vector<16x128xf32>
      %c45 = arith.constant 45 : index
      %c0_415 = arith.constant 0 : index
      %1018 = vector.load %arg3[%c45, %c0_415] : memref<49x128xf32, #tpu.memory_space<vmem>>, vector<1x128xf32>
      %1019 = vector.shape_cast %1018 : vector<1x128xf32> to vector<128xf32>
      %1020 = vector.shape_cast %1019 : vector<128xf32> to vector<1x128xf32>
      %1021 = vector.broadcast %1020 : vector<1x128xf32> to vector<16x128xf32>
      %1022 = arith.mulf %1017, %1021 : vector<16x128xf32>
      %1023 = arith.addf %995, %1022 : vector<16x128xf32>
      %c38_416 = arith.constant 38 : index
      %c0_417 = arith.constant 0 : index
      %1024 = vector.load %arg3[%c38_416, %c0_417] : memref<49x128xf32, #tpu.memory_space<vmem>>, vector<1x128xf32>
      %1025 = vector.shape_cast %1024 : vector<1x128xf32> to vector<128xf32>
      %1026 = vector.shape_cast %1025 : vector<128xf32> to vector<1x128xf32>
      %1027 = vector.broadcast %1026 : vector<1x128xf32> to vector<16x128xf32>
      %1028 = arith.mulf %1017, %1027 : vector<16x128xf32>
      %1029 = arith.addf %1001, %1028 : vector<16x128xf32>
      %c31_418 = arith.constant 31 : index
      %c0_419 = arith.constant 0 : index
      %1030 = vector.load %arg3[%c31_418, %c0_419] : memref<49x128xf32, #tpu.memory_space<vmem>>, vector<1x128xf32>
      %1031 = vector.shape_cast %1030 : vector<1x128xf32> to vector<128xf32>
      %1032 = vector.shape_cast %1031 : vector<128xf32> to vector<1x128xf32>
      %1033 = vector.broadcast %1032 : vector<1x128xf32> to vector<16x128xf32>
      %1034 = arith.mulf %1017, %1033 : vector<16x128xf32>
      %1035 = arith.addf %1007, %1034 : vector<16x128xf32>
      %c24_420 = arith.constant 24 : index
      %c0_421 = arith.constant 0 : index
      %1036 = vector.load %arg3[%c24_420, %c0_421] : memref<49x128xf32, #tpu.memory_space<vmem>>, vector<1x128xf32>
      %1037 = vector.shape_cast %1036 : vector<1x128xf32> to vector<128xf32>
      %1038 = vector.shape_cast %1037 : vector<128xf32> to vector<1x128xf32>
      %1039 = vector.broadcast %1038 : vector<1x128xf32> to vector<16x128xf32>
      %1040 = arith.mulf %1017, %1039 : vector<16x128xf32>
      %1041 = arith.addf %1013, %1040 : vector<16x128xf32>
      %c6_i32_422 = arith.constant 6 : i32
      %1042 = arith.addi %5, %c6_i32_422 : i32
      %c0_423 = arith.constant 0 : index
      %1043 = arith.index_cast %1042 : i32 to index
      %c4_424 = arith.constant 4 : index
      %c0_425 = arith.constant 0 : index
      %1044 = vector.load %arg2[%c0_423, %1043, %c4_424, %c0_425] : memref<1x22x24x128xf32, #tpu.memory_space<vmem>>, vector<1x1x16x128xf32>
      %1045 = vector.shape_cast %1044 : vector<1x1x16x128xf32> to vector<16x128xf32>
      %c46 = arith.constant 46 : index
      %c0_426 = arith.constant 0 : index
      %1046 = vector.load %arg3[%c46, %c0_426] : memref<49x128xf32, #tpu.memory_space<vmem>>, vector<1x128xf32>
      %1047 = vector.shape_cast %1046 : vector<1x128xf32> to vector<128xf32>
      %1048 = vector.shape_cast %1047 : vector<128xf32> to vector<1x128xf32>
      %1049 = vector.broadcast %1048 : vector<1x128xf32> to vector<16x128xf32>
      %1050 = arith.mulf %1045, %1049 : vector<16x128xf32>
      %1051 = arith.addf %1023, %1050 : vector<16x128xf32>
      %c39_427 = arith.constant 39 : index
      %c0_428 = arith.constant 0 : index
      %1052 = vector.load %arg3[%c39_427, %c0_428] : memref<49x128xf32, #tpu.memory_space<vmem>>, vector<1x128xf32>
      %1053 = vector.shape_cast %1052 : vector<1x128xf32> to vector<128xf32>
      %1054 = vector.shape_cast %1053 : vector<128xf32> to vector<1x128xf32>
      %1055 = vector.broadcast %1054 : vector<1x128xf32> to vector<16x128xf32>
      %1056 = arith.mulf %1045, %1055 : vector<16x128xf32>
      %1057 = arith.addf %1029, %1056 : vector<16x128xf32>
      %c32_429 = arith.constant 32 : index
      %c0_430 = arith.constant 0 : index
      %1058 = vector.load %arg3[%c32_429, %c0_430] : memref<49x128xf32, #tpu.memory_space<vmem>>, vector<1x128xf32>
      %1059 = vector.shape_cast %1058 : vector<1x128xf32> to vector<128xf32>
      %1060 = vector.shape_cast %1059 : vector<128xf32> to vector<1x128xf32>
      %1061 = vector.broadcast %1060 : vector<1x128xf32> to vector<16x128xf32>
      %1062 = arith.mulf %1045, %1061 : vector<16x128xf32>
      %1063 = arith.addf %1035, %1062 : vector<16x128xf32>
      %c25_431 = arith.constant 25 : index
      %c0_432 = arith.constant 0 : index
      %1064 = vector.load %arg3[%c25_431, %c0_432] : memref<49x128xf32, #tpu.memory_space<vmem>>, vector<1x128xf32>
      %1065 = vector.shape_cast %1064 : vector<1x128xf32> to vector<128xf32>
      %1066 = vector.shape_cast %1065 : vector<128xf32> to vector<1x128xf32>
      %1067 = vector.broadcast %1066 : vector<1x128xf32> to vector<16x128xf32>
      %1068 = arith.mulf %1045, %1067 : vector<16x128xf32>
      %1069 = arith.addf %1041, %1068 : vector<16x128xf32>
      %c6_i32_433 = arith.constant 6 : i32
      %1070 = arith.addi %5, %c6_i32_433 : i32
      %c0_434 = arith.constant 0 : index
      %1071 = arith.index_cast %1070 : i32 to index
      %c5_435 = arith.constant 5 : index
      %c0_436 = arith.constant 0 : index
      %1072 = vector.load %arg2[%c0_434, %1071, %c5_435, %c0_436] : memref<1x22x24x128xf32, #tpu.memory_space<vmem>>, vector<1x1x16x128xf32>
      %1073 = vector.shape_cast %1072 : vector<1x1x16x128xf32> to vector<16x128xf32>
      %c47 = arith.constant 47 : index
      %c0_437 = arith.constant 0 : index
      %1074 = vector.load %arg3[%c47, %c0_437] : memref<49x128xf32, #tpu.memory_space<vmem>>, vector<1x128xf32>
      %1075 = vector.shape_cast %1074 : vector<1x128xf32> to vector<128xf32>
      %1076 = vector.shape_cast %1075 : vector<128xf32> to vector<1x128xf32>
      %1077 = vector.broadcast %1076 : vector<1x128xf32> to vector<16x128xf32>
      %1078 = arith.mulf %1073, %1077 : vector<16x128xf32>
      %1079 = arith.addf %1051, %1078 : vector<16x128xf32>
      %c40_438 = arith.constant 40 : index
      %c0_439 = arith.constant 0 : index
      %1080 = vector.load %arg3[%c40_438, %c0_439] : memref<49x128xf32, #tpu.memory_space<vmem>>, vector<1x128xf32>
      %1081 = vector.shape_cast %1080 : vector<1x128xf32> to vector<128xf32>
      %1082 = vector.shape_cast %1081 : vector<128xf32> to vector<1x128xf32>
      %1083 = vector.broadcast %1082 : vector<1x128xf32> to vector<16x128xf32>
      %1084 = arith.mulf %1073, %1083 : vector<16x128xf32>
      %1085 = arith.addf %1057, %1084 : vector<16x128xf32>
      %c33_440 = arith.constant 33 : index
      %c0_441 = arith.constant 0 : index
      %1086 = vector.load %arg3[%c33_440, %c0_441] : memref<49x128xf32, #tpu.memory_space<vmem>>, vector<1x128xf32>
      %1087 = vector.shape_cast %1086 : vector<1x128xf32> to vector<128xf32>
      %1088 = vector.shape_cast %1087 : vector<128xf32> to vector<1x128xf32>
      %1089 = vector.broadcast %1088 : vector<1x128xf32> to vector<16x128xf32>
      %1090 = arith.mulf %1073, %1089 : vector<16x128xf32>
      %1091 = arith.addf %1063, %1090 : vector<16x128xf32>
      %c26_442 = arith.constant 26 : index
      %c0_443 = arith.constant 0 : index
      %1092 = vector.load %arg3[%c26_442, %c0_443] : memref<49x128xf32, #tpu.memory_space<vmem>>, vector<1x128xf32>
      %1093 = vector.shape_cast %1092 : vector<1x128xf32> to vector<128xf32>
      %1094 = vector.shape_cast %1093 : vector<128xf32> to vector<1x128xf32>
      %1095 = vector.broadcast %1094 : vector<1x128xf32> to vector<16x128xf32>
      %1096 = arith.mulf %1073, %1095 : vector<16x128xf32>
      %1097 = arith.addf %1069, %1096 : vector<16x128xf32>
      %c6_i32_444 = arith.constant 6 : i32
      %1098 = arith.addi %5, %c6_i32_444 : i32
      %c0_445 = arith.constant 0 : index
      %1099 = arith.index_cast %1098 : i32 to index
      %c6_446 = arith.constant 6 : index
      %c0_447 = arith.constant 0 : index
      %1100 = vector.load %arg2[%c0_445, %1099, %c6_446, %c0_447] : memref<1x22x24x128xf32, #tpu.memory_space<vmem>>, vector<1x1x16x128xf32>
      %1101 = vector.shape_cast %1100 : vector<1x1x16x128xf32> to vector<16x128xf32>
      %c48 = arith.constant 48 : index
      %c0_448 = arith.constant 0 : index
      %1102 = vector.load %arg3[%c48, %c0_448] : memref<49x128xf32, #tpu.memory_space<vmem>>, vector<1x128xf32>
      %1103 = vector.shape_cast %1102 : vector<1x128xf32> to vector<128xf32>
      %1104 = vector.shape_cast %1103 : vector<128xf32> to vector<1x128xf32>
      %1105 = vector.broadcast %1104 : vector<1x128xf32> to vector<16x128xf32>
      %1106 = arith.mulf %1101, %1105 : vector<16x128xf32>
      %1107 = arith.addf %1079, %1106 : vector<16x128xf32>
      %c41_449 = arith.constant 41 : index
      %c0_450 = arith.constant 0 : index
      %1108 = vector.load %arg3[%c41_449, %c0_450] : memref<49x128xf32, #tpu.memory_space<vmem>>, vector<1x128xf32>
      %1109 = vector.shape_cast %1108 : vector<1x128xf32> to vector<128xf32>
      %1110 = vector.shape_cast %1109 : vector<128xf32> to vector<1x128xf32>
      %1111 = vector.broadcast %1110 : vector<1x128xf32> to vector<16x128xf32>
      %1112 = arith.mulf %1101, %1111 : vector<16x128xf32>
      %1113 = arith.addf %1085, %1112 : vector<16x128xf32>
      %c34_451 = arith.constant 34 : index
      %c0_452 = arith.constant 0 : index
      %1114 = vector.load %arg3[%c34_451, %c0_452] : memref<49x128xf32, #tpu.memory_space<vmem>>, vector<1x128xf32>
      %1115 = vector.shape_cast %1114 : vector<1x128xf32> to vector<128xf32>
      %1116 = vector.shape_cast %1115 : vector<128xf32> to vector<1x128xf32>
      %1117 = vector.broadcast %1116 : vector<1x128xf32> to vector<16x128xf32>
      %1118 = arith.mulf %1101, %1117 : vector<16x128xf32>
      %1119 = arith.addf %1091, %1118 : vector<16x128xf32>
      %c27_453 = arith.constant 27 : index
      %c0_454 = arith.constant 0 : index
      %1120 = vector.load %arg3[%c27_453, %c0_454] : memref<49x128xf32, #tpu.memory_space<vmem>>, vector<1x128xf32>
      %1121 = vector.shape_cast %1120 : vector<1x128xf32> to vector<128xf32>
      %1122 = vector.shape_cast %1121 : vector<128xf32> to vector<1x128xf32>
      %1123 = vector.broadcast %1122 : vector<1x128xf32> to vector<16x128xf32>
      %1124 = arith.mulf %1101, %1123 : vector<16x128xf32>
      %1125 = arith.addf %1097, %1124 : vector<16x128xf32>
      %c7_i32 = arith.constant 7 : i32
      %1126 = arith.addi %5, %c7_i32 : i32
      %c0_455 = arith.constant 0 : index
      %1127 = arith.index_cast %1126 : i32 to index
      %c0_456 = arith.constant 0 : index
      %c0_457 = arith.constant 0 : index
      %1128 = vector.load %arg2[%c0_455, %1127, %c0_456, %c0_457] : memref<1x22x24x128xf32, #tpu.memory_space<vmem>>, vector<1x1x16x128xf32>
      %1129 = vector.shape_cast %1128 : vector<1x1x16x128xf32> to vector<16x128xf32>
      %c42_458 = arith.constant 42 : index
      %c0_459 = arith.constant 0 : index
      %1130 = vector.load %arg3[%c42_458, %c0_459] : memref<49x128xf32, #tpu.memory_space<vmem>>, vector<1x128xf32>
      %1131 = vector.shape_cast %1130 : vector<1x128xf32> to vector<128xf32>
      %1132 = vector.shape_cast %1131 : vector<128xf32> to vector<1x128xf32>
      %1133 = vector.broadcast %1132 : vector<1x128xf32> to vector<16x128xf32>
      %1134 = arith.mulf %1129, %1133 : vector<16x128xf32>
      %1135 = arith.addf %1113, %1134 : vector<16x128xf32>
      %c35_460 = arith.constant 35 : index
      %c0_461 = arith.constant 0 : index
      %1136 = vector.load %arg3[%c35_460, %c0_461] : memref<49x128xf32, #tpu.memory_space<vmem>>, vector<1x128xf32>
      %1137 = vector.shape_cast %1136 : vector<1x128xf32> to vector<128xf32>
      %1138 = vector.shape_cast %1137 : vector<128xf32> to vector<1x128xf32>
      %1139 = vector.broadcast %1138 : vector<1x128xf32> to vector<16x128xf32>
      %1140 = arith.mulf %1129, %1139 : vector<16x128xf32>
      %1141 = arith.addf %1119, %1140 : vector<16x128xf32>
      %c28_462 = arith.constant 28 : index
      %c0_463 = arith.constant 0 : index
      %1142 = vector.load %arg3[%c28_462, %c0_463] : memref<49x128xf32, #tpu.memory_space<vmem>>, vector<1x128xf32>
      %1143 = vector.shape_cast %1142 : vector<1x128xf32> to vector<128xf32>
      %1144 = vector.shape_cast %1143 : vector<128xf32> to vector<1x128xf32>
      %1145 = vector.broadcast %1144 : vector<1x128xf32> to vector<16x128xf32>
      %1146 = arith.mulf %1129, %1145 : vector<16x128xf32>
      %1147 = arith.addf %1125, %1146 : vector<16x128xf32>
      %c7_i32_464 = arith.constant 7 : i32
      %1148 = arith.addi %5, %c7_i32_464 : i32
      %c0_465 = arith.constant 0 : index
      %1149 = arith.index_cast %1148 : i32 to index
      %c1_466 = arith.constant 1 : index
      %c0_467 = arith.constant 0 : index
      %1150 = vector.load %arg2[%c0_465, %1149, %c1_466, %c0_467] : memref<1x22x24x128xf32, #tpu.memory_space<vmem>>, vector<1x1x16x128xf32>
      %1151 = vector.shape_cast %1150 : vector<1x1x16x128xf32> to vector<16x128xf32>
      %c43_468 = arith.constant 43 : index
      %c0_469 = arith.constant 0 : index
      %1152 = vector.load %arg3[%c43_468, %c0_469] : memref<49x128xf32, #tpu.memory_space<vmem>>, vector<1x128xf32>
      %1153 = vector.shape_cast %1152 : vector<1x128xf32> to vector<128xf32>
      %1154 = vector.shape_cast %1153 : vector<128xf32> to vector<1x128xf32>
      %1155 = vector.broadcast %1154 : vector<1x128xf32> to vector<16x128xf32>
      %1156 = arith.mulf %1151, %1155 : vector<16x128xf32>
      %1157 = arith.addf %1135, %1156 : vector<16x128xf32>
      %c36_470 = arith.constant 36 : index
      %c0_471 = arith.constant 0 : index
      %1158 = vector.load %arg3[%c36_470, %c0_471] : memref<49x128xf32, #tpu.memory_space<vmem>>, vector<1x128xf32>
      %1159 = vector.shape_cast %1158 : vector<1x128xf32> to vector<128xf32>
      %1160 = vector.shape_cast %1159 : vector<128xf32> to vector<1x128xf32>
      %1161 = vector.broadcast %1160 : vector<1x128xf32> to vector<16x128xf32>
      %1162 = arith.mulf %1151, %1161 : vector<16x128xf32>
      %1163 = arith.addf %1141, %1162 : vector<16x128xf32>
      %c29_472 = arith.constant 29 : index
      %c0_473 = arith.constant 0 : index
      %1164 = vector.load %arg3[%c29_472, %c0_473] : memref<49x128xf32, #tpu.memory_space<vmem>>, vector<1x128xf32>
      %1165 = vector.shape_cast %1164 : vector<1x128xf32> to vector<128xf32>
      %1166 = vector.shape_cast %1165 : vector<128xf32> to vector<1x128xf32>
      %1167 = vector.broadcast %1166 : vector<1x128xf32> to vector<16x128xf32>
      %1168 = arith.mulf %1151, %1167 : vector<16x128xf32>
      %1169 = arith.addf %1147, %1168 : vector<16x128xf32>
      %c7_i32_474 = arith.constant 7 : i32
      %1170 = arith.addi %5, %c7_i32_474 : i32
      %c0_475 = arith.constant 0 : index
      %1171 = arith.index_cast %1170 : i32 to index
      %c2_476 = arith.constant 2 : index
      %c0_477 = arith.constant 0 : index
      %1172 = vector.load %arg2[%c0_475, %1171, %c2_476, %c0_477] : memref<1x22x24x128xf32, #tpu.memory_space<vmem>>, vector<1x1x16x128xf32>
      %1173 = vector.shape_cast %1172 : vector<1x1x16x128xf32> to vector<16x128xf32>
      %c44_478 = arith.constant 44 : index
      %c0_479 = arith.constant 0 : index
      %1174 = vector.load %arg3[%c44_478, %c0_479] : memref<49x128xf32, #tpu.memory_space<vmem>>, vector<1x128xf32>
      %1175 = vector.shape_cast %1174 : vector<1x128xf32> to vector<128xf32>
      %1176 = vector.shape_cast %1175 : vector<128xf32> to vector<1x128xf32>
      %1177 = vector.broadcast %1176 : vector<1x128xf32> to vector<16x128xf32>
      %1178 = arith.mulf %1173, %1177 : vector<16x128xf32>
      %1179 = arith.addf %1157, %1178 : vector<16x128xf32>
      %c37_480 = arith.constant 37 : index
      %c0_481 = arith.constant 0 : index
      %1180 = vector.load %arg3[%c37_480, %c0_481] : memref<49x128xf32, #tpu.memory_space<vmem>>, vector<1x128xf32>
      %1181 = vector.shape_cast %1180 : vector<1x128xf32> to vector<128xf32>
      %1182 = vector.shape_cast %1181 : vector<128xf32> to vector<1x128xf32>
      %1183 = vector.broadcast %1182 : vector<1x128xf32> to vector<16x128xf32>
      %1184 = arith.mulf %1173, %1183 : vector<16x128xf32>
      %1185 = arith.addf %1163, %1184 : vector<16x128xf32>
      %c30_482 = arith.constant 30 : index
      %c0_483 = arith.constant 0 : index
      %1186 = vector.load %arg3[%c30_482, %c0_483] : memref<49x128xf32, #tpu.memory_space<vmem>>, vector<1x128xf32>
      %1187 = vector.shape_cast %1186 : vector<1x128xf32> to vector<128xf32>
      %1188 = vector.shape_cast %1187 : vector<128xf32> to vector<1x128xf32>
      %1189 = vector.broadcast %1188 : vector<1x128xf32> to vector<16x128xf32>
      %1190 = arith.mulf %1173, %1189 : vector<16x128xf32>
      %1191 = arith.addf %1169, %1190 : vector<16x128xf32>
      %c7_i32_484 = arith.constant 7 : i32
      %1192 = arith.addi %5, %c7_i32_484 : i32
      %c0_485 = arith.constant 0 : index
      %1193 = arith.index_cast %1192 : i32 to index
      %c3_486 = arith.constant 3 : index
      %c0_487 = arith.constant 0 : index
      %1194 = vector.load %arg2[%c0_485, %1193, %c3_486, %c0_487] : memref<1x22x24x128xf32, #tpu.memory_space<vmem>>, vector<1x1x16x128xf32>
      %1195 = vector.shape_cast %1194 : vector<1x1x16x128xf32> to vector<16x128xf32>
      %c45_488 = arith.constant 45 : index
      %c0_489 = arith.constant 0 : index
      %1196 = vector.load %arg3[%c45_488, %c0_489] : memref<49x128xf32, #tpu.memory_space<vmem>>, vector<1x128xf32>
      %1197 = vector.shape_cast %1196 : vector<1x128xf32> to vector<128xf32>
      %1198 = vector.shape_cast %1197 : vector<128xf32> to vector<1x128xf32>
      %1199 = vector.broadcast %1198 : vector<1x128xf32> to vector<16x128xf32>
      %1200 = arith.mulf %1195, %1199 : vector<16x128xf32>
      %1201 = arith.addf %1179, %1200 : vector<16x128xf32>
      %c38_490 = arith.constant 38 : index
      %c0_491 = arith.constant 0 : index
      %1202 = vector.load %arg3[%c38_490, %c0_491] : memref<49x128xf32, #tpu.memory_space<vmem>>, vector<1x128xf32>
      %1203 = vector.shape_cast %1202 : vector<1x128xf32> to vector<128xf32>
      %1204 = vector.shape_cast %1203 : vector<128xf32> to vector<1x128xf32>
      %1205 = vector.broadcast %1204 : vector<1x128xf32> to vector<16x128xf32>
      %1206 = arith.mulf %1195, %1205 : vector<16x128xf32>
      %1207 = arith.addf %1185, %1206 : vector<16x128xf32>
      %c31_492 = arith.constant 31 : index
      %c0_493 = arith.constant 0 : index
      %1208 = vector.load %arg3[%c31_492, %c0_493] : memref<49x128xf32, #tpu.memory_space<vmem>>, vector<1x128xf32>
      %1209 = vector.shape_cast %1208 : vector<1x128xf32> to vector<128xf32>
      %1210 = vector.shape_cast %1209 : vector<128xf32> to vector<1x128xf32>
      %1211 = vector.broadcast %1210 : vector<1x128xf32> to vector<16x128xf32>
      %1212 = arith.mulf %1195, %1211 : vector<16x128xf32>
      %1213 = arith.addf %1191, %1212 : vector<16x128xf32>
      %c7_i32_494 = arith.constant 7 : i32
      %1214 = arith.addi %5, %c7_i32_494 : i32
      %c0_495 = arith.constant 0 : index
      %1215 = arith.index_cast %1214 : i32 to index
      %c4_496 = arith.constant 4 : index
      %c0_497 = arith.constant 0 : index
      %1216 = vector.load %arg2[%c0_495, %1215, %c4_496, %c0_497] : memref<1x22x24x128xf32, #tpu.memory_space<vmem>>, vector<1x1x16x128xf32>
      %1217 = vector.shape_cast %1216 : vector<1x1x16x128xf32> to vector<16x128xf32>
      %c46_498 = arith.constant 46 : index
      %c0_499 = arith.constant 0 : index
      %1218 = vector.load %arg3[%c46_498, %c0_499] : memref<49x128xf32, #tpu.memory_space<vmem>>, vector<1x128xf32>
      %1219 = vector.shape_cast %1218 : vector<1x128xf32> to vector<128xf32>
      %1220 = vector.shape_cast %1219 : vector<128xf32> to vector<1x128xf32>
      %1221 = vector.broadcast %1220 : vector<1x128xf32> to vector<16x128xf32>
      %1222 = arith.mulf %1217, %1221 : vector<16x128xf32>
      %1223 = arith.addf %1201, %1222 : vector<16x128xf32>
      %c39_500 = arith.constant 39 : index
      %c0_501 = arith.constant 0 : index
      %1224 = vector.load %arg3[%c39_500, %c0_501] : memref<49x128xf32, #tpu.memory_space<vmem>>, vector<1x128xf32>
      %1225 = vector.shape_cast %1224 : vector<1x128xf32> to vector<128xf32>
      %1226 = vector.shape_cast %1225 : vector<128xf32> to vector<1x128xf32>
      %1227 = vector.broadcast %1226 : vector<1x128xf32> to vector<16x128xf32>
      %1228 = arith.mulf %1217, %1227 : vector<16x128xf32>
      %1229 = arith.addf %1207, %1228 : vector<16x128xf32>
      %c32_502 = arith.constant 32 : index
      %c0_503 = arith.constant 0 : index
      %1230 = vector.load %arg3[%c32_502, %c0_503] : memref<49x128xf32, #tpu.memory_space<vmem>>, vector<1x128xf32>
      %1231 = vector.shape_cast %1230 : vector<1x128xf32> to vector<128xf32>
      %1232 = vector.shape_cast %1231 : vector<128xf32> to vector<1x128xf32>
      %1233 = vector.broadcast %1232 : vector<1x128xf32> to vector<16x128xf32>
      %1234 = arith.mulf %1217, %1233 : vector<16x128xf32>
      %1235 = arith.addf %1213, %1234 : vector<16x128xf32>
      %c7_i32_504 = arith.constant 7 : i32
      %1236 = arith.addi %5, %c7_i32_504 : i32
      %c0_505 = arith.constant 0 : index
      %1237 = arith.index_cast %1236 : i32 to index
      %c5_506 = arith.constant 5 : index
      %c0_507 = arith.constant 0 : index
      %1238 = vector.load %arg2[%c0_505, %1237, %c5_506, %c0_507] : memref<1x22x24x128xf32, #tpu.memory_space<vmem>>, vector<1x1x16x128xf32>
      %1239 = vector.shape_cast %1238 : vector<1x1x16x128xf32> to vector<16x128xf32>
      %c47_508 = arith.constant 47 : index
      %c0_509 = arith.constant 0 : index
      %1240 = vector.load %arg3[%c47_508, %c0_509] : memref<49x128xf32, #tpu.memory_space<vmem>>, vector<1x128xf32>
      %1241 = vector.shape_cast %1240 : vector<1x128xf32> to vector<128xf32>
      %1242 = vector.shape_cast %1241 : vector<128xf32> to vector<1x128xf32>
      %1243 = vector.broadcast %1242 : vector<1x128xf32> to vector<16x128xf32>
      %1244 = arith.mulf %1239, %1243 : vector<16x128xf32>
      %1245 = arith.addf %1223, %1244 : vector<16x128xf32>
      %c40_510 = arith.constant 40 : index
      %c0_511 = arith.constant 0 : index
      %1246 = vector.load %arg3[%c40_510, %c0_511] : memref<49x128xf32, #tpu.memory_space<vmem>>, vector<1x128xf32>
      %1247 = vector.shape_cast %1246 : vector<1x128xf32> to vector<128xf32>
      %1248 = vector.shape_cast %1247 : vector<128xf32> to vector<1x128xf32>
      %1249 = vector.broadcast %1248 : vector<1x128xf32> to vector<16x128xf32>
      %1250 = arith.mulf %1239, %1249 : vector<16x128xf32>
      %1251 = arith.addf %1229, %1250 : vector<16x128xf32>
      %c33_512 = arith.constant 33 : index
      %c0_513 = arith.constant 0 : index
      %1252 = vector.load %arg3[%c33_512, %c0_513] : memref<49x128xf32, #tpu.memory_space<vmem>>, vector<1x128xf32>
      %1253 = vector.shape_cast %1252 : vector<1x128xf32> to vector<128xf32>
      %1254 = vector.shape_cast %1253 : vector<128xf32> to vector<1x128xf32>
      %1255 = vector.broadcast %1254 : vector<1x128xf32> to vector<16x128xf32>
      %1256 = arith.mulf %1239, %1255 : vector<16x128xf32>
      %1257 = arith.addf %1235, %1256 : vector<16x128xf32>
      %c7_i32_514 = arith.constant 7 : i32
      %1258 = arith.addi %5, %c7_i32_514 : i32
      %c0_515 = arith.constant 0 : index
      %1259 = arith.index_cast %1258 : i32 to index
      %c6_516 = arith.constant 6 : index
      %c0_517 = arith.constant 0 : index
      %1260 = vector.load %arg2[%c0_515, %1259, %c6_516, %c0_517] : memref<1x22x24x128xf32, #tpu.memory_space<vmem>>, vector<1x1x16x128xf32>
      %1261 = vector.shape_cast %1260 : vector<1x1x16x128xf32> to vector<16x128xf32>
      %c48_518 = arith.constant 48 : index
      %c0_519 = arith.constant 0 : index
      %1262 = vector.load %arg3[%c48_518, %c0_519] : memref<49x128xf32, #tpu.memory_space<vmem>>, vector<1x128xf32>
      %1263 = vector.shape_cast %1262 : vector<1x128xf32> to vector<128xf32>
      %1264 = vector.shape_cast %1263 : vector<128xf32> to vector<1x128xf32>
      %1265 = vector.broadcast %1264 : vector<1x128xf32> to vector<16x128xf32>
      %1266 = arith.mulf %1261, %1265 : vector<16x128xf32>
      %1267 = arith.addf %1245, %1266 : vector<16x128xf32>
      %c41_520 = arith.constant 41 : index
      %c0_521 = arith.constant 0 : index
      %1268 = vector.load %arg3[%c41_520, %c0_521] : memref<49x128xf32, #tpu.memory_space<vmem>>, vector<1x128xf32>
      %1269 = vector.shape_cast %1268 : vector<1x128xf32> to vector<128xf32>
      %1270 = vector.shape_cast %1269 : vector<128xf32> to vector<1x128xf32>
      %1271 = vector.broadcast %1270 : vector<1x128xf32> to vector<16x128xf32>
      %1272 = arith.mulf %1261, %1271 : vector<16x128xf32>
      %1273 = arith.addf %1251, %1272 : vector<16x128xf32>
      %c34_522 = arith.constant 34 : index
      %c0_523 = arith.constant 0 : index
      %1274 = vector.load %arg3[%c34_522, %c0_523] : memref<49x128xf32, #tpu.memory_space<vmem>>, vector<1x128xf32>
      %1275 = vector.shape_cast %1274 : vector<1x128xf32> to vector<128xf32>
      %1276 = vector.shape_cast %1275 : vector<128xf32> to vector<1x128xf32>
      %1277 = vector.broadcast %1276 : vector<1x128xf32> to vector<16x128xf32>
      %1278 = arith.mulf %1261, %1277 : vector<16x128xf32>
      %1279 = arith.addf %1257, %1278 : vector<16x128xf32>
      %c8_i32 = arith.constant 8 : i32
      %1280 = arith.addi %5, %c8_i32 : i32
      %c0_524 = arith.constant 0 : index
      %1281 = arith.index_cast %1280 : i32 to index
      %c0_525 = arith.constant 0 : index
      %c0_526 = arith.constant 0 : index
      %1282 = vector.load %arg2[%c0_524, %1281, %c0_525, %c0_526] : memref<1x22x24x128xf32, #tpu.memory_space<vmem>>, vector<1x1x16x128xf32>
      %1283 = vector.shape_cast %1282 : vector<1x1x16x128xf32> to vector<16x128xf32>
      %c42_527 = arith.constant 42 : index
      %c0_528 = arith.constant 0 : index
      %1284 = vector.load %arg3[%c42_527, %c0_528] : memref<49x128xf32, #tpu.memory_space<vmem>>, vector<1x128xf32>
      %1285 = vector.shape_cast %1284 : vector<1x128xf32> to vector<128xf32>
      %1286 = vector.shape_cast %1285 : vector<128xf32> to vector<1x128xf32>
      %1287 = vector.broadcast %1286 : vector<1x128xf32> to vector<16x128xf32>
      %1288 = arith.mulf %1283, %1287 : vector<16x128xf32>
      %1289 = arith.addf %1273, %1288 : vector<16x128xf32>
      %c35_529 = arith.constant 35 : index
      %c0_530 = arith.constant 0 : index
      %1290 = vector.load %arg3[%c35_529, %c0_530] : memref<49x128xf32, #tpu.memory_space<vmem>>, vector<1x128xf32>
      %1291 = vector.shape_cast %1290 : vector<1x128xf32> to vector<128xf32>
      %1292 = vector.shape_cast %1291 : vector<128xf32> to vector<1x128xf32>
      %1293 = vector.broadcast %1292 : vector<1x128xf32> to vector<16x128xf32>
      %1294 = arith.mulf %1283, %1293 : vector<16x128xf32>
      %1295 = arith.addf %1279, %1294 : vector<16x128xf32>
      %c8_i32_531 = arith.constant 8 : i32
      %1296 = arith.addi %5, %c8_i32_531 : i32
      %c0_532 = arith.constant 0 : index
      %1297 = arith.index_cast %1296 : i32 to index
      %c1_533 = arith.constant 1 : index
      %c0_534 = arith.constant 0 : index
      %1298 = vector.load %arg2[%c0_532, %1297, %c1_533, %c0_534] : memref<1x22x24x128xf32, #tpu.memory_space<vmem>>, vector<1x1x16x128xf32>
      %1299 = vector.shape_cast %1298 : vector<1x1x16x128xf32> to vector<16x128xf32>
      %c43_535 = arith.constant 43 : index
      %c0_536 = arith.constant 0 : index
      %1300 = vector.load %arg3[%c43_535, %c0_536] : memref<49x128xf32, #tpu.memory_space<vmem>>, vector<1x128xf32>
      %1301 = vector.shape_cast %1300 : vector<1x128xf32> to vector<128xf32>
      %1302 = vector.shape_cast %1301 : vector<128xf32> to vector<1x128xf32>
      %1303 = vector.broadcast %1302 : vector<1x128xf32> to vector<16x128xf32>
      %1304 = arith.mulf %1299, %1303 : vector<16x128xf32>
      %1305 = arith.addf %1289, %1304 : vector<16x128xf32>
      %c36_537 = arith.constant 36 : index
      %c0_538 = arith.constant 0 : index
      %1306 = vector.load %arg3[%c36_537, %c0_538] : memref<49x128xf32, #tpu.memory_space<vmem>>, vector<1x128xf32>
      %1307 = vector.shape_cast %1306 : vector<1x128xf32> to vector<128xf32>
      %1308 = vector.shape_cast %1307 : vector<128xf32> to vector<1x128xf32>
      %1309 = vector.broadcast %1308 : vector<1x128xf32> to vector<16x128xf32>
      %1310 = arith.mulf %1299, %1309 : vector<16x128xf32>
      %1311 = arith.addf %1295, %1310 : vector<16x128xf32>
      %c8_i32_539 = arith.constant 8 : i32
      %1312 = arith.addi %5, %c8_i32_539 : i32
      %c0_540 = arith.constant 0 : index
      %1313 = arith.index_cast %1312 : i32 to index
      %c2_541 = arith.constant 2 : index
      %c0_542 = arith.constant 0 : index
      %1314 = vector.load %arg2[%c0_540, %1313, %c2_541, %c0_542] : memref<1x22x24x128xf32, #tpu.memory_space<vmem>>, vector<1x1x16x128xf32>
      %1315 = vector.shape_cast %1314 : vector<1x1x16x128xf32> to vector<16x128xf32>
      %c44_543 = arith.constant 44 : index
      %c0_544 = arith.constant 0 : index
      %1316 = vector.load %arg3[%c44_543, %c0_544] : memref<49x128xf32, #tpu.memory_space<vmem>>, vector<1x128xf32>
      %1317 = vector.shape_cast %1316 : vector<1x128xf32> to vector<128xf32>
      %1318 = vector.shape_cast %1317 : vector<128xf32> to vector<1x128xf32>
      %1319 = vector.broadcast %1318 : vector<1x128xf32> to vector<16x128xf32>
      %1320 = arith.mulf %1315, %1319 : vector<16x128xf32>
      %1321 = arith.addf %1305, %1320 : vector<16x128xf32>
      %c37_545 = arith.constant 37 : index
      %c0_546 = arith.constant 0 : index
      %1322 = vector.load %arg3[%c37_545, %c0_546] : memref<49x128xf32, #tpu.memory_space<vmem>>, vector<1x128xf32>
      %1323 = vector.shape_cast %1322 : vector<1x128xf32> to vector<128xf32>
      %1324 = vector.shape_cast %1323 : vector<128xf32> to vector<1x128xf32>
      %1325 = vector.broadcast %1324 : vector<1x128xf32> to vector<16x128xf32>
      %1326 = arith.mulf %1315, %1325 : vector<16x128xf32>
      %1327 = arith.addf %1311, %1326 : vector<16x128xf32>
      %c8_i32_547 = arith.constant 8 : i32
      %1328 = arith.addi %5, %c8_i32_547 : i32
      %c0_548 = arith.constant 0 : index
      %1329 = arith.index_cast %1328 : i32 to index
      %c3_549 = arith.constant 3 : index
      %c0_550 = arith.constant 0 : index
      %1330 = vector.load %arg2[%c0_548, %1329, %c3_549, %c0_550] : memref<1x22x24x128xf32, #tpu.memory_space<vmem>>, vector<1x1x16x128xf32>
      %1331 = vector.shape_cast %1330 : vector<1x1x16x128xf32> to vector<16x128xf32>
      %c45_551 = arith.constant 45 : index
      %c0_552 = arith.constant 0 : index
      %1332 = vector.load %arg3[%c45_551, %c0_552] : memref<49x128xf32, #tpu.memory_space<vmem>>, vector<1x128xf32>
      %1333 = vector.shape_cast %1332 : vector<1x128xf32> to vector<128xf32>
      %1334 = vector.shape_cast %1333 : vector<128xf32> to vector<1x128xf32>
      %1335 = vector.broadcast %1334 : vector<1x128xf32> to vector<16x128xf32>
      %1336 = arith.mulf %1331, %1335 : vector<16x128xf32>
      %1337 = arith.addf %1321, %1336 : vector<16x128xf32>
      %c38_553 = arith.constant 38 : index
      %c0_554 = arith.constant 0 : index
      %1338 = vector.load %arg3[%c38_553, %c0_554] : memref<49x128xf32, #tpu.memory_space<vmem>>, vector<1x128xf32>
      %1339 = vector.shape_cast %1338 : vector<1x128xf32> to vector<128xf32>
      %1340 = vector.shape_cast %1339 : vector<128xf32> to vector<1x128xf32>
      %1341 = vector.broadcast %1340 : vector<1x128xf32> to vector<16x128xf32>
      %1342 = arith.mulf %1331, %1341 : vector<16x128xf32>
      %1343 = arith.addf %1327, %1342 : vector<16x128xf32>
      %c8_i32_555 = arith.constant 8 : i32
      %1344 = arith.addi %5, %c8_i32_555 : i32
      %c0_556 = arith.constant 0 : index
      %1345 = arith.index_cast %1344 : i32 to index
      %c4_557 = arith.constant 4 : index
      %c0_558 = arith.constant 0 : index
      %1346 = vector.load %arg2[%c0_556, %1345, %c4_557, %c0_558] : memref<1x22x24x128xf32, #tpu.memory_space<vmem>>, vector<1x1x16x128xf32>
      %1347 = vector.shape_cast %1346 : vector<1x1x16x128xf32> to vector<16x128xf32>
      %c46_559 = arith.constant 46 : index
      %c0_560 = arith.constant 0 : index
      %1348 = vector.load %arg3[%c46_559, %c0_560] : memref<49x128xf32, #tpu.memory_space<vmem>>, vector<1x128xf32>
      %1349 = vector.shape_cast %1348 : vector<1x128xf32> to vector<128xf32>
      %1350 = vector.shape_cast %1349 : vector<128xf32> to vector<1x128xf32>
      %1351 = vector.broadcast %1350 : vector<1x128xf32> to vector<16x128xf32>
      %1352 = arith.mulf %1347, %1351 : vector<16x128xf32>
      %1353 = arith.addf %1337, %1352 : vector<16x128xf32>
      %c39_561 = arith.constant 39 : index
      %c0_562 = arith.constant 0 : index
      %1354 = vector.load %arg3[%c39_561, %c0_562] : memref<49x128xf32, #tpu.memory_space<vmem>>, vector<1x128xf32>
      %1355 = vector.shape_cast %1354 : vector<1x128xf32> to vector<128xf32>
      %1356 = vector.shape_cast %1355 : vector<128xf32> to vector<1x128xf32>
      %1357 = vector.broadcast %1356 : vector<1x128xf32> to vector<16x128xf32>
      %1358 = arith.mulf %1347, %1357 : vector<16x128xf32>
      %1359 = arith.addf %1343, %1358 : vector<16x128xf32>
      %c8_i32_563 = arith.constant 8 : i32
      %1360 = arith.addi %5, %c8_i32_563 : i32
      %c0_564 = arith.constant 0 : index
      %1361 = arith.index_cast %1360 : i32 to index
      %c5_565 = arith.constant 5 : index
      %c0_566 = arith.constant 0 : index
      %1362 = vector.load %arg2[%c0_564, %1361, %c5_565, %c0_566] : memref<1x22x24x128xf32, #tpu.memory_space<vmem>>, vector<1x1x16x128xf32>
      %1363 = vector.shape_cast %1362 : vector<1x1x16x128xf32> to vector<16x128xf32>
      %c47_567 = arith.constant 47 : index
      %c0_568 = arith.constant 0 : index
      %1364 = vector.load %arg3[%c47_567, %c0_568] : memref<49x128xf32, #tpu.memory_space<vmem>>, vector<1x128xf32>
      %1365 = vector.shape_cast %1364 : vector<1x128xf32> to vector<128xf32>
      %1366 = vector.shape_cast %1365 : vector<128xf32> to vector<1x128xf32>
      %1367 = vector.broadcast %1366 : vector<1x128xf32> to vector<16x128xf32>
      %1368 = arith.mulf %1363, %1367 : vector<16x128xf32>
      %1369 = arith.addf %1353, %1368 : vector<16x128xf32>
      %c40_569 = arith.constant 40 : index
      %c0_570 = arith.constant 0 : index
      %1370 = vector.load %arg3[%c40_569, %c0_570] : memref<49x128xf32, #tpu.memory_space<vmem>>, vector<1x128xf32>
      %1371 = vector.shape_cast %1370 : vector<1x128xf32> to vector<128xf32>
      %1372 = vector.shape_cast %1371 : vector<128xf32> to vector<1x128xf32>
      %1373 = vector.broadcast %1372 : vector<1x128xf32> to vector<16x128xf32>
      %1374 = arith.mulf %1363, %1373 : vector<16x128xf32>
      %1375 = arith.addf %1359, %1374 : vector<16x128xf32>
      %c8_i32_571 = arith.constant 8 : i32
      %1376 = arith.addi %5, %c8_i32_571 : i32
      %c0_572 = arith.constant 0 : index
      %1377 = arith.index_cast %1376 : i32 to index
      %c6_573 = arith.constant 6 : index
      %c0_574 = arith.constant 0 : index
      %1378 = vector.load %arg2[%c0_572, %1377, %c6_573, %c0_574] : memref<1x22x24x128xf32, #tpu.memory_space<vmem>>, vector<1x1x16x128xf32>
      %1379 = vector.shape_cast %1378 : vector<1x1x16x128xf32> to vector<16x128xf32>
      %c48_575 = arith.constant 48 : index
      %c0_576 = arith.constant 0 : index
      %1380 = vector.load %arg3[%c48_575, %c0_576] : memref<49x128xf32, #tpu.memory_space<vmem>>, vector<1x128xf32>
      %1381 = vector.shape_cast %1380 : vector<1x128xf32> to vector<128xf32>
      %1382 = vector.shape_cast %1381 : vector<128xf32> to vector<1x128xf32>
      %1383 = vector.broadcast %1382 : vector<1x128xf32> to vector<16x128xf32>
      %1384 = arith.mulf %1379, %1383 : vector<16x128xf32>
      %1385 = arith.addf %1369, %1384 : vector<16x128xf32>
      %c41_577 = arith.constant 41 : index
      %c0_578 = arith.constant 0 : index
      %1386 = vector.load %arg3[%c41_577, %c0_578] : memref<49x128xf32, #tpu.memory_space<vmem>>, vector<1x128xf32>
      %1387 = vector.shape_cast %1386 : vector<1x128xf32> to vector<128xf32>
      %1388 = vector.shape_cast %1387 : vector<128xf32> to vector<1x128xf32>
      %1389 = vector.broadcast %1388 : vector<1x128xf32> to vector<16x128xf32>
      %1390 = arith.mulf %1379, %1389 : vector<16x128xf32>
      %1391 = arith.addf %1375, %1390 : vector<16x128xf32>
      %c9_i32 = arith.constant 9 : i32
      %1392 = arith.addi %5, %c9_i32 : i32
      %c0_579 = arith.constant 0 : index
      %1393 = arith.index_cast %1392 : i32 to index
      %c0_580 = arith.constant 0 : index
      %c0_581 = arith.constant 0 : index
      %1394 = vector.load %arg2[%c0_579, %1393, %c0_580, %c0_581] : memref<1x22x24x128xf32, #tpu.memory_space<vmem>>, vector<1x1x16x128xf32>
      %1395 = vector.shape_cast %1394 : vector<1x1x16x128xf32> to vector<16x128xf32>
      %c42_582 = arith.constant 42 : index
      %c0_583 = arith.constant 0 : index
      %1396 = vector.load %arg3[%c42_582, %c0_583] : memref<49x128xf32, #tpu.memory_space<vmem>>, vector<1x128xf32>
      %1397 = vector.shape_cast %1396 : vector<1x128xf32> to vector<128xf32>
      %1398 = vector.shape_cast %1397 : vector<128xf32> to vector<1x128xf32>
      %1399 = vector.broadcast %1398 : vector<1x128xf32> to vector<16x128xf32>
      %1400 = arith.mulf %1395, %1399 : vector<16x128xf32>
      %1401 = arith.addf %1391, %1400 : vector<16x128xf32>
      %c9_i32_584 = arith.constant 9 : i32
      %1402 = arith.addi %5, %c9_i32_584 : i32
      %c0_585 = arith.constant 0 : index
      %1403 = arith.index_cast %1402 : i32 to index
      %c1_586 = arith.constant 1 : index
      %c0_587 = arith.constant 0 : index
      %1404 = vector.load %arg2[%c0_585, %1403, %c1_586, %c0_587] : memref<1x22x24x128xf32, #tpu.memory_space<vmem>>, vector<1x1x16x128xf32>
      %1405 = vector.shape_cast %1404 : vector<1x1x16x128xf32> to vector<16x128xf32>
      %c43_588 = arith.constant 43 : index
      %c0_589 = arith.constant 0 : index
      %1406 = vector.load %arg3[%c43_588, %c0_589] : memref<49x128xf32, #tpu.memory_space<vmem>>, vector<1x128xf32>
      %1407 = vector.shape_cast %1406 : vector<1x128xf32> to vector<128xf32>
      %1408 = vector.shape_cast %1407 : vector<128xf32> to vector<1x128xf32>
      %1409 = vector.broadcast %1408 : vector<1x128xf32> to vector<16x128xf32>
      %1410 = arith.mulf %1405, %1409 : vector<16x128xf32>
      %1411 = arith.addf %1401, %1410 : vector<16x128xf32>
      %c9_i32_590 = arith.constant 9 : i32
      %1412 = arith.addi %5, %c9_i32_590 : i32
      %c0_591 = arith.constant 0 : index
      %1413 = arith.index_cast %1412 : i32 to index
      %c2_592 = arith.constant 2 : index
      %c0_593 = arith.constant 0 : index
      %1414 = vector.load %arg2[%c0_591, %1413, %c2_592, %c0_593] : memref<1x22x24x128xf32, #tpu.memory_space<vmem>>, vector<1x1x16x128xf32>
      %1415 = vector.shape_cast %1414 : vector<1x1x16x128xf32> to vector<16x128xf32>
      %c44_594 = arith.constant 44 : index
      %c0_595 = arith.constant 0 : index
      %1416 = vector.load %arg3[%c44_594, %c0_595] : memref<49x128xf32, #tpu.memory_space<vmem>>, vector<1x128xf32>
      %1417 = vector.shape_cast %1416 : vector<1x128xf32> to vector<128xf32>
      %1418 = vector.shape_cast %1417 : vector<128xf32> to vector<1x128xf32>
      %1419 = vector.broadcast %1418 : vector<1x128xf32> to vector<16x128xf32>
      %1420 = arith.mulf %1415, %1419 : vector<16x128xf32>
      %1421 = arith.addf %1411, %1420 : vector<16x128xf32>
      %c9_i32_596 = arith.constant 9 : i32
      %1422 = arith.addi %5, %c9_i32_596 : i32
      %c0_597 = arith.constant 0 : index
      %1423 = arith.index_cast %1422 : i32 to index
      %c3_598 = arith.constant 3 : index
      %c0_599 = arith.constant 0 : index
      %1424 = vector.load %arg2[%c0_597, %1423, %c3_598, %c0_599] : memref<1x22x24x128xf32, #tpu.memory_space<vmem>>, vector<1x1x16x128xf32>
      %1425 = vector.shape_cast %1424 : vector<1x1x16x128xf32> to vector<16x128xf32>
      %c45_600 = arith.constant 45 : index
      %c0_601 = arith.constant 0 : index
      %1426 = vector.load %arg3[%c45_600, %c0_601] : memref<49x128xf32, #tpu.memory_space<vmem>>, vector<1x128xf32>
      %1427 = vector.shape_cast %1426 : vector<1x128xf32> to vector<128xf32>
      %1428 = vector.shape_cast %1427 : vector<128xf32> to vector<1x128xf32>
      %1429 = vector.broadcast %1428 : vector<1x128xf32> to vector<16x128xf32>
      %1430 = arith.mulf %1425, %1429 : vector<16x128xf32>
      %1431 = arith.addf %1421, %1430 : vector<16x128xf32>
      %c9_i32_602 = arith.constant 9 : i32
      %1432 = arith.addi %5, %c9_i32_602 : i32
      %c0_603 = arith.constant 0 : index
      %1433 = arith.index_cast %1432 : i32 to index
      %c4_604 = arith.constant 4 : index
      %c0_605 = arith.constant 0 : index
      %1434 = vector.load %arg2[%c0_603, %1433, %c4_604, %c0_605] : memref<1x22x24x128xf32, #tpu.memory_space<vmem>>, vector<1x1x16x128xf32>
      %1435 = vector.shape_cast %1434 : vector<1x1x16x128xf32> to vector<16x128xf32>
      %c46_606 = arith.constant 46 : index
      %c0_607 = arith.constant 0 : index
      %1436 = vector.load %arg3[%c46_606, %c0_607] : memref<49x128xf32, #tpu.memory_space<vmem>>, vector<1x128xf32>
      %1437 = vector.shape_cast %1436 : vector<1x128xf32> to vector<128xf32>
      %1438 = vector.shape_cast %1437 : vector<128xf32> to vector<1x128xf32>
      %1439 = vector.broadcast %1438 : vector<1x128xf32> to vector<16x128xf32>
      %1440 = arith.mulf %1435, %1439 : vector<16x128xf32>
      %1441 = arith.addf %1431, %1440 : vector<16x128xf32>
      %c9_i32_608 = arith.constant 9 : i32
      %1442 = arith.addi %5, %c9_i32_608 : i32
      %c0_609 = arith.constant 0 : index
      %1443 = arith.index_cast %1442 : i32 to index
      %c5_610 = arith.constant 5 : index
      %c0_611 = arith.constant 0 : index
      %1444 = vector.load %arg2[%c0_609, %1443, %c5_610, %c0_611] : memref<1x22x24x128xf32, #tpu.memory_space<vmem>>, vector<1x1x16x128xf32>
      %1445 = vector.shape_cast %1444 : vector<1x1x16x128xf32> to vector<16x128xf32>
      %c47_612 = arith.constant 47 : index
      %c0_613 = arith.constant 0 : index
      %1446 = vector.load %arg3[%c47_612, %c0_613] : memref<49x128xf32, #tpu.memory_space<vmem>>, vector<1x128xf32>
      %1447 = vector.shape_cast %1446 : vector<1x128xf32> to vector<128xf32>
      %1448 = vector.shape_cast %1447 : vector<128xf32> to vector<1x128xf32>
      %1449 = vector.broadcast %1448 : vector<1x128xf32> to vector<16x128xf32>
      %1450 = arith.mulf %1445, %1449 : vector<16x128xf32>
      %1451 = arith.addf %1441, %1450 : vector<16x128xf32>
      %c9_i32_614 = arith.constant 9 : i32
      %1452 = arith.addi %5, %c9_i32_614 : i32
      %c0_615 = arith.constant 0 : index
      %1453 = arith.index_cast %1452 : i32 to index
      %c6_616 = arith.constant 6 : index
      %c0_617 = arith.constant 0 : index
      %1454 = vector.load %arg2[%c0_615, %1453, %c6_616, %c0_617] : memref<1x22x24x128xf32, #tpu.memory_space<vmem>>, vector<1x1x16x128xf32>
      %1455 = vector.shape_cast %1454 : vector<1x1x16x128xf32> to vector<16x128xf32>
      %c48_618 = arith.constant 48 : index
      %c0_619 = arith.constant 0 : index
      %1456 = vector.load %arg3[%c48_618, %c0_619] : memref<49x128xf32, #tpu.memory_space<vmem>>, vector<1x128xf32>
      %1457 = vector.shape_cast %1456 : vector<1x128xf32> to vector<128xf32>
      %1458 = vector.shape_cast %1457 : vector<128xf32> to vector<1x128xf32>
      %1459 = vector.broadcast %1458 : vector<1x128xf32> to vector<16x128xf32>
      %1460 = arith.mulf %1455, %1459 : vector<16x128xf32>
      %1461 = arith.addf %1451, %1460 : vector<16x128xf32>
      %c0_i32_620 = arith.constant 0 : i32
      %1462 = arith.addi %5, %c0_i32_620 : i32
      %c0_621 = arith.constant 0 : index
      %1463 = arith.index_cast %1462 : i32 to index
      %c0_622 = arith.constant 0 : index
      %c0_623 = arith.constant 0 : index
      %1464 = vector.load %arg5[%c0_621, %1463, %c0_622, %c0_623] : memref<1x16x16x128xf32, #tpu.memory_space<vmem>>, vector<1x1x16x128xf32>
      %1465 = vector.shape_cast %1464 : vector<1x1x16x128xf32> to vector<16x128xf32>
      %1466 = vector.shape_cast %1107 : vector<16x128xf32> to vector<1x1x16x128xf32>
      tpu.vector_store %arg5[%c0_621, %1463, %c0_622, %c0_623], %1466 {strides = array<i32>} : memref<1x16x16x128xf32, #tpu.memory_space<vmem>>, vector<1x1x16x128xf32>,
      %c1_i32_624 = arith.constant 1 : i32
      %1467 = arith.addi %5, %c1_i32_624 : i32
      %c0_625 = arith.constant 0 : index
      %1468 = arith.index_cast %1467 : i32 to index
      %c0_626 = arith.constant 0 : index
      %c0_627 = arith.constant 0 : index
      %1469 = vector.load %arg5[%c0_625, %1468, %c0_626, %c0_627] : memref<1x16x16x128xf32, #tpu.memory_space<vmem>>, vector<1x1x16x128xf32>
      %1470 = vector.shape_cast %1469 : vector<1x1x16x128xf32> to vector<16x128xf32>
      %1471 = vector.shape_cast %1267 : vector<16x128xf32> to vector<1x1x16x128xf32>
      tpu.vector_store %arg5[%c0_625, %1468, %c0_626, %c0_627], %1471 {strides = array<i32>} : memref<1x16x16x128xf32, #tpu.memory_space<vmem>>, vector<1x1x16x128xf32>,
      %c2_i32_628 = arith.constant 2 : i32
      %1472 = arith.addi %5, %c2_i32_628 : i32
      %c0_629 = arith.constant 0 : index
      %1473 = arith.index_cast %1472 : i32 to index
      %c0_630 = arith.constant 0 : index
      %c0_631 = arith.constant 0 : index
      %1474 = vector.load %arg5[%c0_629, %1473, %c0_630, %c0_631] : memref<1x16x16x128xf32, #tpu.memory_space<vmem>>, vector<1x1x16x128xf32>
      %1475 = vector.shape_cast %1474 : vector<1x1x16x128xf32> to vector<16x128xf32>
      %1476 = vector.shape_cast %1385 : vector<16x128xf32> to vector<1x1x16x128xf32>
      tpu.vector_store %arg5[%c0_629, %1473, %c0_630, %c0_631], %1476 {strides = array<i32>} : memref<1x16x16x128xf32, #tpu.memory_space<vmem>>, vector<1x1x16x128xf32>,
      %c3_i32_632 = arith.constant 3 : i32
      %1477 = arith.addi %5, %c3_i32_632 : i32
      %c0_633 = arith.constant 0 : index
      %1478 = arith.index_cast %1477 : i32 to index
      %c0_634 = arith.constant 0 : index
      %c0_635 = arith.constant 0 : index
      %1479 = vector.load %arg5[%c0_633, %1478, %c0_634, %c0_635] : memref<1x16x16x128xf32, #tpu.memory_space<vmem>>, vector<1x1x16x128xf32>
      %1480 = vector.shape_cast %1479 : vector<1x1x16x128xf32> to vector<16x128xf32>
      %1481 = vector.shape_cast %1461 : vector<16x128xf32> to vector<1x1x16x128xf32>
      tpu.vector_store %arg5[%c0_633, %1478, %c0_634, %c0_635], %1481 {strides = array<i32>} : memref<1x16x16x128xf32, #tpu.memory_space<vmem>>, vector<1x1x16x128xf32>,
    }
    %c4_i32_1 = arith.constant 4 : i32
    return
  }
  func.func @transform_0(%arg0: i32, %arg1: i32) -> (i32, i32, i32, i32) {
    %c0_i32 = arith.constant 0 : i32
    %c0_i32_0 = arith.constant 0 : i32
    %c0_i32_1 = arith.constant 0 : i32
    return %arg1, %c0_i32, %c0_i32_0, %arg0 : i32, i32, i32, i32
  }
  func.func @transform_1(%arg0: i32, %arg1: i32) -> (i32, i32) {
    %c0_i32 = arith.constant 0 : i32
    %c0_i32_0 = arith.constant 0 : i32
    return %c0_i32, %arg0 : i32, i32
  }
  func.func @transform_2(%arg0: i32, %arg1: i32) -> (i32, i32) {
    %c0_i32 = arith.constant 0 : i32
    %c0_i32_0 = arith.constant 0 : i32
    return %c0_i32, %arg0 : i32, i32
  }
  func.func @transform_3(%arg0: i32, %arg1: i32) -> (i32, i32, i32, i32) {
    %c0_i32 = arith.constant 0 : i32
    %c0_i32_0 = arith.constant 0 : i32
    %c0_i32_1 = arith.constant 0 : i32
    return %arg1, %c0_i32, %c0_i32_0, %arg0 : i32, i32, i32, i32
  }
}

</mosaic_0001>

<llo_original>
// kernel: tpu_custom_call.1
$region0: #{tpu_custom_call.1}
  #allocation0 [shape = 'u32[]', space=smem, size = 0x4, offset = 0x4, fixed_abs, tag = 'smem constant byte address 0x4 - core index']
  #allocation1 [shape = 'u32[72,128]{1,0:T(1,128)}', space=vmem, size = 0x9000, scoped, tag = 'internal scratch']
  %s0 = inlined_call_operand.hbm [shape: f32[2,22,24,128], index: 0, kind: input, shape index: {}]
  %s1 = inlined_call_operand.hbm [shape: f32[49,128], index: 1, kind: input, shape index: {}]
  %s2 = inlined_call_operand.vmem [shape: f32[1,128], index: 2, kind: input, shape index: {}]
  %s3 = inlined_call_operand.hbm [shape: f32[2,16,16,128], index: 3, kind: output, shape index: {}]
  %s4 = sld [smem:[#allocation0]]
  $region60: #{tpu_custom_call.1} parent=0
    _
  %s6 = ssub.s32 1, %s4
  %s7 = scalar_select 0, %s6, %s4
  $region1: #{tpu_custom_call.1} parent=0
    #allocation2 [shape = 'u8[540672]{0}', space=vmem, size = 0x84000, scoped, tag = 'input window, operand 0']
    #allocation3 [shape = 's32[2]{0}', space=sflag, size = 0x8, scoped, tag = 'scoped memory for tpu_custom_call.1']
    #allocation4 [shape = 's32[2]{0}', space=sflag, size = 0x8, scoped, tag = 'scoped memory for tpu_custom_call.1']
    #allocation5 [shape = 'u8[28672]{0}', space=vmem, size = 0x7000, scoped, tag = 'input window, operand 1, single buffered']
    #allocation6 [shape = 's32[1]{0}', space=sflag, size = 0x4, scoped, tag = 'scoped memory for tpu_custom_call.1']
    #allocation7 [shape = 'u8[262144]{0}', space=vmem, size = 0x40000, scoped, tag = 'output window, operand 0']
    %8 = vsyncpa [#allocation3], 0
    %s9 = scalar_lea.sflag [#allocation3], 1
    %10 = vsyncpa %s9, 0
    %11 = vsyncpa [#allocation6], 0
    %12 = vsyncpa [#allocation4], 0
    %s13 = scalar_lea.sflag [#allocation4], 1
    %14 = vsyncpa %s13, 0
    loop: start=0, step=1, limit=4
    $region2: #{tpu_custom_call.1} parent=1 // loop_pre_header
      _
    $region3: #{tpu_custom_call.1} parent=1 // loop_header
      %s16 = sphi 0, %s20
      %p17 = scmp.ge.s32.totalorder %s16, 4
      %s23 = sphi 0, %s35
      %s24 = sphi 0, %s31
      %s25 = sphi 0, %s23
      %s26 = sphi 0, %s24
      %s27 = sphi 0, %s25
      %s28 = sphi 0, %s26
      %s40 = sphi 0, %s42
      %s43 = sphi 0, %s40
      %s44 = sphi 0, %s43
      %s60 = sphi 0, %s44
      %s66 = sphi 0, %s68
      %s69 = sphi 0, %s66
      %s70 = sphi 0, %s69
      %s86 = sphi 0, %s70
      %s92 = sphi 0, %s94
      %s95 = sphi 0, %s92
      %s96 = sphi 0, %s95
      %s112 = sphi 0, %s96
      %s120 = sphi 0, %s122
      %s123 = sphi 0, %s120
      %s124 = sphi 0, %s123
      %s140 = sphi 0, %s124
    $region4: #{tpu_custom_call.1} parent=1 // loop_header_branch
      %19 = sbr.rel (%p17) target = $region8
    $region5: #{tpu_custom_call.1} parent=1 // loop_body
      %s21 = ssub.s32 %s16, 1
      %s22 = ssub.s32 %s16, 2
      %s29 = sadd.s32 1, %s24
      %p30 = scmp.ge.s32.totalorder %s29, 2
      %s31 = scalar_select %p30, 0, %s29
      %s32 = sadd.s32 1, %s23
      %s33 = scalar_select %p30, %s32, %s23
      %p34 = scmp.ge.s32.totalorder %s33, 1
      %s35 = scalar_select %p34, 0, %s33
      %s36 = ssub.s32 %s24, %s31
      %s37 = ssub.s32 %s23, %s35
      %s38 = sor.u32 %s36, %s37
      %p39 = scmp.eq.s32.totalorder %s38, 0
      %s41 = sadd.s32 %s40, 1
      %s42 = scalar_select %p39, %s40, %s41
      %p45 = pneg %p39
      %p46 = scmp.eq.s32.totalorder %s16, 1
      %p47 = por %p45, %p46
      %p48 = scmp.ne.s32.totalorder %s40, %s43
      %p49 = scmp.eq.s32.totalorder %s16, 0
      %p50 = por %p48, %p49
      %p51 = scmp.ne.s32.totalorder %s40, %s43
      %p52 = scmp.eq.s32.totalorder %s21, 1
      %p53 = por %p51, %p52
      %p54 = scmp.ne.s32.totalorder %s43, %s44
      %p55 = scmp.eq.s32.totalorder %s21, 0
      %p56 = por %p54, %p55
      %p57 = scmp.ne.s32.totalorder %s43, %s44
      %p58 = scmp.eq.s32.totalorder %s22, 1
      %p59 = por %p57, %p58
      %p61 = scmp.ne.s32.totalorder %s44, %s60
      %p62 = scmp.eq.s32.totalorder %s22, 0
      %p63 = por %p61, %p62
      %s64 = ssub.s32 %s23, %s35
      %p65 = scmp.eq.s32.totalorder %s64, 0
      %s67 = sadd.s32 %s66, 1
      %s68 = scalar_select %p65, %s66, %s67
      %p71 = pneg %p65
      %p72 = scmp.eq.s32.totalorder %s16, 1
      %p73 = por %p71, %p72
      %p74 = scmp.ne.s32.totalorder %s66, %s69
      %p75 = scmp.eq.s32.totalorder %s16, 0
      %p76 = por %p74, %p75
      %p77 = scmp.ne.s32.totalorder %s66, %s69
      %p78 = scmp.eq.s32.totalorder %s21, 1
      %p79 = por %p77, %p78
      %p80 = scmp.ne.s32.totalorder %s69, %s70
      %p81 = scmp.eq.s32.totalorder %s21, 0
      %p82 = por %p80, %p81
      %p83 = scmp.ne.s32.totalorder %s69, %s70
      %p84 = scmp.eq.s32.totalorder %s22, 1
      %p85 = por %p83, %p84
      %p87 = scmp.ne.s32.totalorder %s70, %s86
      %p88 = scmp.eq.s32.totalorder %s22, 0
      %p89 = por %p87, %p88
      %s90 = ssub.s32 %s23, %s35
      %p91 = scmp.eq.s32.totalorder %s90, 0
      %s93 = sadd.s32 %s92, 1
      %s94 = scalar_select %p91, %s92, %s93
      %p97 = pneg %p91
      %p98 = scmp.eq.s32.totalorder %s16, 1
      %p99 = por %p97, %p98
      %p100 = scmp.ne.s32.totalorder %s92, %s95
      %p101 = scmp.eq.s32.totalorder %s16, 0
      %p102 = por %p100, %p101
      %p103 = scmp.ne.s32.totalorder %s92, %s95
      %p104 = scmp.eq.s32.totalorder %s21, 1
      %p105 = por %p103, %p104
      %p106 = scmp.ne.s32.totalorder %s95, %s96
      %p107 = scmp.eq.s32.totalorder %s21, 0
      %p108 = por %p106, %p107
      %p109 = scmp.ne.s32.totalorder %s95, %s96
      %p110 = scmp.eq.s32.totalorder %s22, 1
      %p111 = por %p109, %p110
      %p113 = scmp.ne.s32.totalorder %s96, %s112
      %p114 = scmp.eq.s32.totalorder %s22, 0
      %p115 = por %p113, %p114
      %s116 = ssub.s32 %s24, %s31
      %s117 = ssub.s32 %s23, %s35
      %s118 = sor.u32 %s116, %s117
      %p119 = scmp.eq.s32.totalorder %s118, 0
      %s121 = sadd.s32 %s120, 1
      %s122 = scalar_select %p119, %s120, %s121
      %p125 = pneg %p119
      %p126 = scmp.eq.s32.totalorder %s16, 1
      %p127 = por %p125, %p126
      %p128 = scmp.ne.s32.totalorder %s120, %s123
      %p129 = scmp.eq.s32.totalorder %s16, 0
      %p130 = por %p128, %p129
      %p131 = scmp.ne.s32.totalorder %s120, %s123
      %p132 = scmp.eq.s32.totalorder %s21, 1
      %p133 = por %p131, %p132
      %p134 = scmp.ne.s32.totalorder %s123, %s124
      %p135 = scmp.eq.s32.totalorder %s21, 0
      %p136 = por %p134, %p135
      %p137 = scmp.ne.s32.totalorder %s123, %s124
      %p138 = scmp.eq.s32.totalorder %s22, 1
      %p139 = por %p137, %p138
      %p141 = scmp.ne.s32.totalorder %s124, %s140
      %p142 = scmp.eq.s32.totalorder %s22, 0
      %p143 = por %p141, %p142
      %p144 = scmp.le.s32.totalorder 1, %s16
      %p145 = scmp.lt.s32.totalorder %s16, 3
      %p146 = pnand %p144, %p145
      %p147 = pneg %p146
      // Predicated region
      $region9: #{tpu_custom_call.1} parent=5 // pred_check
        _
      $region10: #{tpu_custom_call.1} parent=5 // pred_check_branch
        %149 = sbr.rel (%p146) target = $region12
      $region11: #{tpu_custom_call.1} parent=5 // pred_region
        %s150 = ssub.s32 %s16, 1
        // Predicated region
        $region13: #{tpu_custom_call.1} parent=11 // pred_check
          %p151 = pneg %p82
        $region14: #{tpu_custom_call.1} parent=11 // pred_check_branch
          %153 = sbr.rel (%p151) target = $region16
        $region15: #{tpu_custom_call.1} parent=11 // pred_region
          %155 = vsyncadd [#allocation6], 0
          %s156 = smul.addr %s25, 8
          %s157 = scalar_lea.hbm %s1, %s156
          %s158 = sshll.u32 %s157, 4
          %s159 = int_to_ptr.hbm [resolvable:$true] %s158
          %s160 = sshll.u32 [#allocation5], 4
          %s161 = int_to_ptr.vmem [resolvable:$true] %s160
          %166 = dma.hbm_to_vmem [thread:$0]  %s159, 896, %s161, [#allocation6], 128, 128, 8
        $region16: #{tpu_custom_call.1} parent=11 // pred_fallthru
          _
        // Predicated region
        $region17: #{tpu_custom_call.1} parent=11 // pred_check
          %p167 = pneg %p108
        $region18: #{tpu_custom_call.1} parent=11 // pred_check_branch
          %169 = sbr.rel (%p167) target = $region20
        $region19: #{tpu_custom_call.1} parent=11 // pred_region
          %p170 = scmp.lt.s32.totalorder %s25, 0
          %s171 = scalar_select %p170, %s25, 0
          %s172 = scalar_lea.vmem %s2, %s171
        $region20: #{tpu_custom_call.1} parent=11 // pred_fallthru
          _
      $region12: #{tpu_custom_call.1} parent=5 // pred_fallthru
        _
      %p173 = scmp.lt.s32.totalorder %s16, 2
      // Predicated region
      $region21: #{tpu_custom_call.1} parent=5 // pred_check
        %p174 = pneg %p173
      $region22: #{tpu_custom_call.1} parent=5 // pred_check_branch
        %176 = sbr.rel (%p174) target = $region24
      $region23: #{tpu_custom_call.1} parent=5 // pred_region
        // Predicated region
        $region25: #{tpu_custom_call.1} parent=23 // pred_check
          %p177 = pneg %p50
        $region26: #{tpu_custom_call.1} parent=23 // pred_check_branch
          %179 = sbr.rel (%p177) target = $region28
        $region27: #{tpu_custom_call.1} parent=23 // pred_region
          %s180 = sand.u32 %s40, 1
          %s181 = scalar_lea.sflag [#allocation3], %s180
          %s182 = sand.u32 %s40, 1
          %s183 = smul.addr %s182, 528
          %s184 = scalar_lea.vmem [#allocation2], %s183
          %186 = vsyncadd %s181, 0
          %s187 = smul.addr %s24, 66
          %s188 = sadd.s32 %s23, %s187
          %s189 = smul.addr %s188, 8
          %s190 = scalar_lea.hbm %s0, %s189
          %s191 = sshll.u32 %s190, 4
          %s192 = int_to_ptr.hbm [resolvable:$true] %s191
          %s193 = sshll.u32 %s184, 4
          %s194 = int_to_ptr.vmem [resolvable:$true] %s193
          %199 = dma.hbm_to_vmem [thread:$0]  %s192, 8448, %s194, %s181, 128, 128, 8
        $region28: #{tpu_custom_call.1} parent=23 // pred_fallthru
          _
      $region24: #{tpu_custom_call.1} parent=5 // pred_fallthru
        _
      %p200 = scmp.le.s32.totalorder 1, %s16
      %p201 = scmp.lt.s32.totalorder %s16, 3
      %p202 = pnand %p200, %p201
      %p203 = pneg %p202
      // Predicated region
      $region29: #{tpu_custom_call.1} parent=5 // pred_check
        _
      $region30: #{tpu_custom_call.1} parent=5 // pred_check_branch
        %205 = sbr.rel (%p202) target = $region32
      $region31: #{tpu_custom_call.1} parent=5 // pred_region
        %s206 = ssub.s32 %s16, 1
        %s207 = sand.u32 %s43, 1
        %s208 = scalar_lea.sflag [#allocation3], %s207
        %s209 = sand.u32 %s43, 1
        %s210 = smul.addr %s209, 528
        %s211 = scalar_lea.vmem [#allocation2], %s210
        // Predicated region
        $region33: #{tpu_custom_call.1} parent=31 // pred_check
          %p212 = pneg %p56
        $region34: #{tpu_custom_call.1} parent=31 // pred_check_branch
          %214 = sbr.rel (%p212) target = $region36
        $region35: #{tpu_custom_call.1} parent=31 // pred_region
          %216 = dma.done %s208, 8448
        $region36: #{tpu_custom_call.1} parent=31 // pred_fallthru
          _
        // Predicated region
        $region37: #{tpu_custom_call.1} parent=31 // pred_check
          %p217 = pneg %p82
        $region38: #{tpu_custom_call.1} parent=31 // pred_check_branch
          %219 = sbr.rel (%p217) target = $region40
        $region39: #{tpu_custom_call.1} parent=31 // pred_region
          %221 = dma.done [#allocation6], 896
        $region40: #{tpu_custom_call.1} parent=31 // pred_fallthru
          _
        %s222 = sand.u32 %s43, 1
        %s223 = scalar_lea.sflag [#allocation3], %s222
        %s224 = sand.u32 %s43, 1
        %s225 = smul.addr %s224, 528
        %s226 = scalar_lea.vmem [#allocation2], %s225
        %p227 = pneg %p56
        %p228 = pneg %p53
        %p229 = pneg %p82
        %p230 = pneg %p79
        %p231 = scmp.lt.s32.totalorder %s25, 0
        %s232 = scalar_select %p231, %s25, 0
        %s233 = scalar_lea.vmem %s2, %s232
        %p234 = pneg %p108
        %p235 = pneg %p105
        %p236 = pneg %p136
        %p237 = pneg %p133
        %s238 = sand.u32 %s123, 1
        %s239 = scalar_lea.sflag [#allocation4], %s238
        %s240 = sand.u32 %s123, 1
        %s241 = smul.addr %s240, 256
        %s242 = scalar_lea.vmem [#allocation7], %s241
        %p243 = scmp.lt.s32.totalorder %s25, 0
        %s244 = scalar_select %p243, %s25, 0
        %s245 = scalar_lea.vmem %s2, %s244
        %v246 = vld [vmem:[%s245] sm:$0x1]
        %v248 = vperm.slane %v246, 0
        loop: start=0, step=1, limit=4
        $region41: #{tpu_custom_call.1} parent=31 // loop_pre_header
          _
        $region42: #{tpu_custom_call.1} parent=31 // loop_header
          %s251 = sphi 0, %s255
          %p252 = scmp.ge.s32.totalorder %s251, 4
        $region43: #{tpu_custom_call.1} parent=31 // loop_header_branch
          %254 = sbr.rel (%p252) target = $region47
        $region44: #{tpu_custom_call.1} parent=31 // loop_body
          %s256 = smul.u32 %s251, 4
          %s257 = smul.u32 %s256, 24
          %s258 = scalar_lea.vmem %s211, %s257 [#allocation2]
          %v259 = vld [vmem:[%s258] sm:$0xff]
          %v260 = vld [vmem:[%s258 + $0x8] sm:$0xff]
          %v261 = vld [vmem:[#allocation5] sm:$0x1]
          %v262 = vperm.slane %v261, 0
          %v263 = vmul.f32 %v259, %v262
          %v264 = vmul.f32 %v260, %v262
          %v265 = vadd.f32 %v248, %v263
          %v266 = vadd.f32 %v248, %v264
          %v267 = vld [vmem:[%s258 + $0x1] sm:$0xff]
          %v268 = vld [vmem:[%s258 + $0x9] sm:$0xff]
          %v269 = vld [vmem:[#allocation5 + $0x1] sm:$0x1]
          %v270 = vperm.slane %v269, 0
          %v271 = vmul.f32 %v267, %v270
          %v272 = vmul.f32 %v268, %v270
          %v273 = vadd.f32 %v265, %v271
          %v274 = vadd.f32 %v266, %v272
          %v275 = vld [vmem:[%s258 + $0x2] sm:$0xff]
          %v276 = vld [vmem:[%s258 + $0xa] sm:$0xff]
          %v277 = vld [vmem:[#allocation5 + $0x2] sm:$0x1]
          %v278 = vperm.slane %v277, 0
          %v279 = vmul.f32 %v275, %v278
          %v280 = vmul.f32 %v276, %v278
          %v281 = vadd.f32 %v273, %v279
          %v282 = vadd.f32 %v274, %v280
          %v283 = vld [vmem:[%s258 + $0x3] sm:$0xff]
          %v284 = vld [vmem:[%s258 + $0xb] sm:$0xff]
          %v285 = vld [vmem:[#allocation5 + $0x3] sm:$0x1]
          %v286 = vperm.slane %v285, 0
          %v287 = vmul.f32 %v283, %v286
          %v288 = vmul.f32 %v284, %v286
          %v289 = vadd.f32 %v281, %v287
          %v290 = vadd.f32 %v282, %v288
          %v291 = vld [vmem:[%s258 + $0x4] sm:$0xff]
          %v292 = vld [vmem:[%s258 + $0xc] sm:$0xff]
          %v293 = vld [vmem:[#allocation5 + $0x4] sm:$0x1]
          %v294 = vperm.slane %v293, 0
          %v295 = vmul.f32 %v291, %v294
          %v296 = vmul.f32 %v292, %v294
          %v297 = vadd.f32 %v289, %v295
          %v298 = vadd.f32 %v290, %v296
          %v299 = vld [vmem:[%s258 + $0x5] sm:$0xff]
          %v300 = vld [vmem:[%s258 + $0xd] sm:$0xff]
          %v301 = vld [vmem:[#allocation5 + $0x5] sm:$0x1]
          %v302 = vperm.slane %v301, 0
          %v303 = vmul.f32 %v299, %v302
          %v304 = vmul.f32 %v300, %v302
          %v305 = vadd.f32 %v297, %v303
          %v306 = vadd.f32 %v298, %v304
          %v307 = vld [vmem:[%s258 + $0x6] sm:$0xff]
          %v308 = vld [vmem:[%s258 + $0xe] sm:$0xff]
          %v309 = vld [vmem:[#allocation5 + $0x6] sm:$0x1]
          %v310 = vperm.slane %v309, 0
          %v311 = vmul.f32 %v307, %v310
          %v312 = vmul.f32 %v308, %v310
          %v313 = vadd.f32 %v305, %v311
          %v314 = vadd.f32 %v306, %v312
          %s315 = sadd.s32 %s256, 1
          %s316 = smul.u32 %s315, 24
          %s317 = scalar_lea.vmem %s211, %s316 [#allocation2]
          %v318 = vld [vmem:[%s317] sm:$0xff]
          %v319 = vld [vmem:[%s317 + $0x8] sm:$0xff]
          %v320 = vld [vmem:[#allocation5 + $0x7] sm:$0x1]
          %v321 = vperm.slane %v320, 0
          %v322 = vmul.f32 %v318, %v321
          %v323 = vmul.f32 %v319, %v321
          %v324 = vadd.f32 %v313, %v322
          %v325 = vadd.f32 %v314, %v323
          %v326 = vmul.f32 %v318, %v262
          %v327 = vmul.f32 %v319, %v262
          %v328 = vadd.f32 %v248, %v326
          %v329 = vadd.f32 %v248, %v327
          %v330 = vld [vmem:[%s317 + $0x1] sm:$0xff]
          %v331 = vld [vmem:[%s317 + $0x9] sm:$0xff]
          %v332 = vld [vmem:[#allocation5 + $0x8] sm:$0x1]
          %v333 = vperm.slane %v332, 0
          %v334 = vmul.f32 %v330, %v333
          %v335 = vmul.f32 %v331, %v333
          %v336 = vadd.f32 %v324, %v334
          %v337 = vadd.f32 %v325, %v335
          %v338 = vmul.f32 %v330, %v270
          %v339 = vmul.f32 %v331, %v270
          %v340 = vadd.f32 %v328, %v338
          %v341 = vadd.f32 %v329, %v339
          %v342 = vld [vmem:[%s317 + $0x2] sm:$0xff]
          %v343 = vld [vmem:[%s317 + $0xa] sm:$0xff]
          %v344 = vld [vmem:[#allocation5 + $0x9] sm:$0x1]
          %v345 = vperm.slane %v344, 0
          %v346 = vmul.f32 %v342, %v345
          %v347 = vmul.f32 %v343, %v345
          %v348 = vadd.f32 %v336, %v346
          %v349 = vadd.f32 %v337, %v347
          %v350 = vmul.f32 %v342, %v278
          %v351 = vmul.f32 %v343, %v278
          %v352 = vadd.f32 %v340, %v350
          %v353 = vadd.f32 %v341, %v351
          %v354 = vld [vmem:[%s317 + $0x3] sm:$0xff]
          %v355 = vld [vmem:[%s317 + $0xb] sm:$0xff]
          %v356 = vld [vmem:[#allocation5 + $0xa] sm:$0x1]
          %v357 = vperm.slane %v356, 0
          %v358 = vmul.f32 %v354, %v357
          %v359 = vmul.f32 %v355, %v357
          %v360 = vadd.f32 %v348, %v358
          %v361 = vadd.f32 %v349, %v359
          %v362 = vmul.f32 %v354, %v286
          %v363 = vmul.f32 %v355, %v286
          %v364 = vadd.f32 %v352, %v362
          %v365 = vadd.f32 %v353, %v363
          %v366 = vld [vmem:[%s317 + $0x4] sm:$0xff]
          %v367 = vld [vmem:[%s317 + $0xc] sm:$0xff]
          %v368 = vld [vmem:[#allocation5 + $0xb] sm:$0x1]
          %v369 = vperm.slane %v368, 0
          %v370 = vmul.f32 %v366, %v369
          %v371 = vmul.f32 %v367, %v369
          %v372 = vadd.f32 %v360, %v370
          %v373 = vadd.f32 %v361, %v371
          %v374 = vmul.f32 %v366, %v294
          %v375 = vmul.f32 %v367, %v294
          %v376 = vadd.f32 %v364, %v374
          %v377 = vadd.f32 %v365, %v375
          %v378 = vld [vmem:[%s317 + $0x5] sm:$0xff]
          %v379 = vld [vmem:[%s317 + $0xd] sm:$0xff]
          %v380 = vld [vmem:[#allocation5 + $0xc] sm:$0x1]
          %v381 = vperm.slane %v380, 0
          %v382 = vmul.f32 %v378, %v381
          %v383 = vmul.f32 %v379, %v381
          %v384 = vadd.f32 %v372, %v382
          %v385 = vadd.f32 %v373, %v383
          %v386 = vmul.f32 %v378, %v302
          %v387 = vmul.f32 %v379, %v302
          %v388 = vadd.f32 %v376, %v386
          %v389 = vadd.f32 %v377, %v387
          %v390 = vld [vmem:[%s317 + $0x6] sm:$0xff]
          %v391 = vld [vmem:[%s317 + $0xe] sm:$0xff]
          %v392 = vld [vmem:[#allocation5 + $0xd] sm:$0x1]
          %v393 = vperm.slane %v392, 0
          %v394 = vmul.f32 %v390, %v393
          %v395 = vmul.f32 %v391, %v393
          %v396 = vadd.f32 %v384, %v394
          %v397 = vadd.f32 %v385, %v395
          %v398 = vmul.f32 %v390, %v310
          %v399 = vmul.f32 %v391, %v310
          %v400 = vadd.f32 %v388, %v398
          %v401 = vadd.f32 %v389, %v399
          %s402 = sadd.s32 %s256, 2
          %s403 = smul.u32 %s402, 24
          %s404 = scalar_lea.vmem %s211, %s403 [#allocation2]
          %v405 = vld [vmem:[%s404] sm:$0xff]
          %v406 = vld [vmem:[%s404 + $0x8] sm:$0xff]
          %v407 = vld [vmem:[#allocation5 + $0xe] sm:$0x1]
          %v408 = vperm.slane %v407, 0
          %v409 = vmul.f32 %v405, %v408
          %v410 = vmul.f32 %v406, %v408
          %v411 = vadd.f32 %v396, %v409
          %v412 = vadd.f32 %v397, %v410
          %v413 = vmul.f32 %v405, %v321
          %v414 = vmul.f32 %v406, %v321
          %v415 = vadd.f32 %v400, %v413
          %v416 = vadd.f32 %v401, %v414
          %v417 = vmul.f32 %v405, %v262
          %v418 = vmul.f32 %v406, %v262
          %v419 = vadd.f32 %v248, %v417
          %v420 = vadd.f32 %v248, %v418
          %v421 = vld [vmem:[%s404 + $0x1] sm:$0xff]
          %v422 = vld [vmem:[%s404 + $0x9] sm:$0xff]
          %v423 = vld [vmem:[#allocation5 + $0xf] sm:$0x1]
          %v424 = vperm.slane %v423, 0
          %v425 = vmul.f32 %v421, %v424
          %v426 = vmul.f32 %v422, %v424
          %v427 = vadd.f32 %v411, %v425
          %v428 = vadd.f32 %v412, %v426
          %v429 = vmul.f32 %v421, %v333
          %v430 = vmul.f32 %v422, %v333
          %v431 = vadd.f32 %v415, %v429
          %v432 = vadd.f32 %v416, %v430
          %v433 = vmul.f32 %v421, %v270
          %v434 = vmul.f32 %v422, %v270
          %v435 = vadd.f32 %v419, %v433
          %v436 = vadd.f32 %v420, %v434
          %v437 = vld [vmem:[%s404 + $0x2] sm:$0xff]
          %v438 = vld [vmem:[%s404 + $0xa] sm:$0xff]
          %v439 = vld [vmem:[#allocation5 + $0x10] sm:$0x1]
          %v440 = vperm.slane %v439, 0
          %v441 = vmul.f32 %v437, %v440
          %v442 = vmul.f32 %v438, %v440
          %v443 = vadd.f32 %v427, %v441
          %v444 = vadd.f32 %v428, %v442
          %v445 = vmul.f32 %v437, %v345
          %v446 = vmul.f32 %v438, %v345
          %v447 = vadd.f32 %v431, %v445
          %v448 = vadd.f32 %v432, %v446
          %v449 = vmul.f32 %v437, %v278
          %v450 = vmul.f32 %v438, %v278
          %v451 = vadd.f32 %v435, %v449
          %v452 = vadd.f32 %v436, %v450
          %v453 = vld [vmem:[%s404 + $0x3] sm:$0xff]
          %v454 = vld [vmem:[%s404 + $0xb] sm:$0xff]
          %v455 = vld [vmem:[#allocation5 + $0x11] sm:$0x1]
          %v456 = vperm.slane %v455, 0
          %v457 = vmul.f32 %v453, %v456
          %v458 = vmul.f32 %v454, %v456
          %v459 = vadd.f32 %v443, %v457
          %v460 = vadd.f32 %v444, %v458
          %v461 = vmul.f32 %v453, %v357
          %v462 = vmul.f32 %v454, %v357
          %v463 = vadd.f32 %v447, %v461
          %v464 = vadd.f32 %v448, %v462
          %v465 = vmul.f32 %v453, %v286
          %v466 = vmul.f32 %v454, %v286
          %v467 = vadd.f32 %v451, %v465
          %v468 = vadd.f32 %v452, %v466
          %v469 = vld [vmem:[%s404 + $0x4] sm:$0xff]
          %v470 = vld [vmem:[%s404 + $0xc] sm:$0xff]
          %v471 = vld [vmem:[#allocation5 + $0x12] sm:$0x1]
          %v472 = vperm.slane %v471, 0
          %v473 = vmul.f32 %v469, %v472
          %v474 = vmul.f32 %v470, %v472
          %v475 = vadd.f32 %v459, %v473
          %v476 = vadd.f32 %v460, %v474
          %v477 = vmul.f32 %v469, %v369
          %v478 = vmul.f32 %v470, %v369
          %v479 = vadd.f32 %v463, %v477
          %v480 = vadd.f32 %v464, %v478
          %v481 = vmul.f32 %v469, %v294
          %v482 = vmul.f32 %v470, %v294
          %v483 = vadd.f32 %v467, %v481
          %v484 = vadd.f32 %v468, %v482
          %v485 = vld [vmem:[%s404 + $0x5] sm:$0xff]
          %v486 = vld [vmem:[%s404 + $0xd] sm:$0xff]
          %v487 = vld [vmem:[#allocation5 + $0x13] sm:$0x1]
          %v488 = vperm.slane %v487, 0
          %v489 = vmul.f32 %v485, %v488
          %v490 = vmul.f32 %v486, %v488
          %v491 = vadd.f32 %v475, %v489
          %v492 = vadd.f32 %v476, %v490
          %v493 = vmul.f32 %v485, %v381
          %v494 = vmul.f32 %v486, %v381
          %v495 = vadd.f32 %v479, %v493
          %v496 = vadd.f32 %v480, %v494
          %v497 = vmul.f32 %v485, %v302
          %v498 = vmul.f32 %v486, %v302
          %v499 = vadd.f32 %v483, %v497
          %v500 = vadd.f32 %v484, %v498
          %v501 = vld [vmem:[%s404 + $0x6] sm:$0xff]
          %v502 = vld [vmem:[%s404 + $0xe] sm:$0xff]
          %v503 = vld [vmem:[#allocation5 + $0x14] sm:$0x1]
          %v504 = vperm.slane %v503, 0
          %v505 = vmul.f32 %v501, %v504
          %v506 = vmul.f32 %v502, %v504
          %v507 = vadd.f32 %v491, %v505
          %v508 = vadd.f32 %v492, %v506
          %v509 = vmul.f32 %v501, %v393
          %v510 = vmul.f32 %v502, %v393
          %v511 = vadd.f32 %v495, %v509
          %v512 = vadd.f32 %v496, %v510
          %v513 = vmul.f32 %v501, %v310
          %v514 = vmul.f32 %v502, %v310
          %v515 = vadd.f32 %v499, %v513
          %v516 = vadd.f32 %v500, %v514
          %s517 = sadd.s32 %s256, 3
          %s518 = smul.u32 %s517, 24
          %s519 = scalar_lea.vmem %s211, %s518 [#allocation2]
          %v520 = vld [vmem:[%s519] sm:$0xff]
          %v521 = vld [vmem:[%s519 + $0x8] sm:$0xff]
          %v522 = vld [vmem:[#allocation5 + $0x15] sm:$0x1]
          %v523 = vperm.slane %v522, 0
          %v524 = vmul.f32 %v520, %v523
          %v525 = vmul.f32 %v521, %v523
          %v526 = vadd.f32 %v507, %v524
          %v527 = vadd.f32 %v508, %v525
          %v528 = vmul.f32 %v520, %v408
          %v529 = vmul.f32 %v521, %v408
          %v530 = vadd.f32 %v511, %v528
          %v531 = vadd.f32 %v512, %v529
          %v532 = vmul.f32 %v520, %v321
          %v533 = vmul.f32 %v521, %v321
          %v534 = vadd.f32 %v515, %v532
          %v535 = vadd.f32 %v516, %v533
          %v536 = vmul.f32 %v520, %v262
          %v537 = vmul.f32 %v521, %v262
          %v538 = vadd.f32 %v248, %v536
          %v539 = vadd.f32 %v248, %v537
          %v540 = vld [vmem:[%s519 + $0x1] sm:$0xff]
          %v541 = vld [vmem:[%s519 + $0x9] sm:$0xff]
          %v542 = vld [vmem:[#allocation5 + $0x16] sm:$0x1]
          %v543 = vperm.slane %v542, 0
          %v544 = vmul.f32 %v540, %v543
          %v545 = vmul.f32 %v541, %v543
          %v546 = vadd.f32 %v526, %v544
          %v547 = vadd.f32 %v527, %v545
          %v548 = vmul.f32 %v540, %v424
          %v549 = vmul.f32 %v541, %v424
          %v550 = vadd.f32 %v530, %v548
          %v551 = vadd.f32 %v531, %v549
          %v552 = vmul.f32 %v540, %v333
          %v553 = vmul.f32 %v541, %v333
          %v554 = vadd.f32 %v534, %v552
          %v555 = vadd.f32 %v535, %v553
          %v556 = vmul.f32 %v540, %v270
          %v557 = vmul.f32 %v541, %v270
          %v558 = vadd.f32 %v538, %v556
          %v559 = vadd.f32 %v539, %v557
          %v560 = vld [vmem:[%s519 + $0x2] sm:$0xff]
          %v561 = vld [vmem:[%s519 + $0xa] sm:$0xff]
          %v562 = vld [vmem:[#allocation5 + $0x17] sm:$0x1]
          %v563 = vperm.slane %v562, 0
          %v564 = vmul.f32 %v560, %v563
          %v565 = vmul.f32 %v561, %v563
          %v566 = vadd.f32 %v546, %v564
          %v567 = vadd.f32 %v547, %v565
          %v568 = vmul.f32 %v560, %v440
          %v569 = vmul.f32 %v561, %v440
          %v570 = vadd.f32 %v550, %v568
          %v571 = vadd.f32 %v551, %v569
          %v572 = vmul.f32 %v560, %v345
          %v573 = vmul.f32 %v561, %v345
          %v574 = vadd.f32 %v554, %v572
          %v575 = vadd.f32 %v555, %v573
          %v576 = vmul.f32 %v560, %v278
          %v577 = vmul.f32 %v561, %v278
          %v578 = vadd.f32 %v558, %v576
          %v579 = vadd.f32 %v559, %v577
          %v580 = vld [vmem:[%s519 + $0x3] sm:$0xff]
          %v581 = vld [vmem:[%s519 + $0xb] sm:$0xff]
          %v582 = vld [vmem:[#allocation5 + $0x18] sm:$0x1]
          %v583 = vperm.slane %v582, 0
          %v584 = vmul.f32 %v580, %v583
          %v585 = vmul.f32 %v581, %v583
          %v586 = vadd.f32 %v566, %v584
          %v587 = vadd.f32 %v567, %v585
          %v588 = vmul.f32 %v580, %v456
          %v589 = vmul.f32 %v581, %v456
          %v590 = vadd.f32 %v570, %v588
          %v591 = vadd.f32 %v571, %v589
          %v592 = vmul.f32 %v580, %v357
          %v593 = vmul.f32 %v581, %v357
          %v594 = vadd.f32 %v574, %v592
          %v595 = vadd.f32 %v575, %v593
          %v596 = vmul.f32 %v580, %v286
          %v597 = vmul.f32 %v581, %v286
          %v598 = vadd.f32 %v578, %v596
          %v599 = vadd.f32 %v579, %v597
          %v600 = vld [vmem:[%s519 + $0x4] sm:$0xff]
          %v601 = vld [vmem:[%s519 + $0xc] sm:$0xff]
          %v602 = vld [vmem:[#allocation5 + $0x19] sm:$0x1]
          %v603 = vperm.slane %v602, 0
          %v604 = vmul.f32 %v600, %v603
          %v605 = vmul.f32 %v601, %v603
          %v606 = vadd.f32 %v586, %v604
          %v607 = vadd.f32 %v587, %v605
          %v608 = vmul.f32 %v600, %v472
          %v609 = vmul.f32 %v601, %v472
          %v610 = vadd.f32 %v590, %v608
          %v611 = vadd.f32 %v591, %v609
          %v612 = vmul.f32 %v600, %v369
          %v613 = vmul.f32 %v601, %v369
          %v614 = vadd.f32 %v594, %v612
          %v615 = vadd.f32 %v595, %v613
          %v616 = vmul.f32 %v600, %v294
          %v617 = vmul.f32 %v601, %v294
          %v618 = vadd.f32 %v598, %v616
          %v619 = vadd.f32 %v599, %v617
          %v620 = vld [vmem:[%s519 + $0x5] sm:$0xff]
          %v621 = vld [vmem:[%s519 + $0xd] sm:$0xff]
          %v622 = vld [vmem:[#allocation5 + $0x1a] sm:$0x1]
          %v623 = vperm.slane %v622, 0
          %v624 = vmul.f32 %v620, %v623
          %v625 = vmul.f32 %v621, %v623
          %v626 = vadd.f32 %v606, %v624
          %v627 = vadd.f32 %v607, %v625
          %v628 = vmul.f32 %v620, %v488
          %v629 = vmul.f32 %v621, %v488
          %v630 = vadd.f32 %v610, %v628
          %v631 = vadd.f32 %v611, %v629
          %v632 = vmul.f32 %v620, %v381
          %v633 = vmul.f32 %v621, %v381
          %v634 = vadd.f32 %v614, %v632
          %v635 = vadd.f32 %v615, %v633
          %v636 = vmul.f32 %v620, %v302
          %v637 = vmul.f32 %v621, %v302
          %v638 = vadd.f32 %v618, %v636
          %v639 = vadd.f32 %v619, %v637
          %v640 = vld [vmem:[%s519 + $0x6] sm:$0xff]
          %v641 = vld [vmem:[%s519 + $0xe] sm:$0xff]
          %v642 = vld [vmem:[#allocation5 + $0x1b] sm:$0x1]
          %v643 = vperm.slane %v642, 0
          %v644 = vmul.f32 %v640, %v643
          %v645 = vmul.f32 %v641, %v643
          %v646 = vadd.f32 %v626, %v644
          %v647 = vadd.f32 %v627, %v645
          %v648 = vmul.f32 %v640, %v504
          %v649 = vmul.f32 %v641, %v504
          %v650 = vadd.f32 %v630, %v648
          %v651 = vadd.f32 %v631, %v649
          %v652 = vmul.f32 %v640, %v393
          %v653 = vmul.f32 %v641, %v393
          %v654 = vadd.f32 %v634, %v652
          %v655 = vadd.f32 %v635, %v653
          %v656 = vmul.f32 %v640, %v310
          %v657 = vmul.f32 %v641, %v310
          %v658 = vadd.f32 %v638, %v656
          %v659 = vadd.f32 %v639, %v657
          %s660 = sadd.s32 %s256, 4
          %s661 = smul.u32 %s660, 24
          %s662 = scalar_lea.vmem %s211, %s661 [#allocation2]
          %v663 = vld [vmem:[%s662] sm:$0xff]
          %v664 = vld [vmem:[%s662 + $0x8] sm:$0xff]
          %v665 = vld [vmem:[#allocation5 + $0x1c] sm:$0x1]
          %v666 = vperm.slane %v665, 0
          %v667 = vmul.f32 %v663, %v666
          %v668 = vmul.f32 %v664, %v666
          %v669 = vadd.f32 %v646, %v667
          %v670 = vadd.f32 %v647, %v668
          %v671 = vmul.f32 %v663, %v523
          %v672 = vmul.f32 %v664, %v523
          %v673 = vadd.f32 %v650, %v671
          %v674 = vadd.f32 %v651, %v672
          %v675 = vmul.f32 %v663, %v408
          %v676 = vmul.f32 %v664, %v408
          %v677 = vadd.f32 %v654, %v675
          %v678 = vadd.f32 %v655, %v676
          %v679 = vmul.f32 %v663, %v321
          %v680 = vmul.f32 %v664, %v321
          %v681 = vadd.f32 %v658, %v679
          %v682 = vadd.f32 %v659, %v680
          %v683 = vld [vmem:[%s662 + $0x1] sm:$0xff]
          %v684 = vld [vmem:[%s662 + $0x9] sm:$0xff]
          %v685 = vld [vmem:[#allocation5 + $0x1d] sm:$0x1]
          %v686 = vperm.slane %v685, 0
          %v687 = vmul.f32 %v683, %v686
          %v688 = vmul.f32 %v684, %v686
          %v689 = vadd.f32 %v669, %v687
          %v690 = vadd.f32 %v670, %v688
          %v691 = vmul.f32 %v683, %v543
          %v692 = vmul.f32 %v684, %v543
          %v693 = vadd.f32 %v673, %v691
          %v694 = vadd.f32 %v674, %v692
          %v695 = vmul.f32 %v683, %v424
          %v696 = vmul.f32 %v684, %v424
          %v697 = vadd.f32 %v677, %v695
          %v698 = vadd.f32 %v678, %v696
          %v699 = vmul.f32 %v683, %v333
          %v700 = vmul.f32 %v684, %v333
          %v701 = vadd.f32 %v681, %v699
          %v702 = vadd.f32 %v682, %v700
          %v703 = vld [vmem:[%s662 + $0x2] sm:$0xff]
          %v704 = vld [vmem:[%s662 + $0xa] sm:$0xff]
          %v705 = vld [vmem:[#allocation5 + $0x1e] sm:$0x1]
          %v706 = vperm.slane %v705, 0
          %v707 = vmul.f32 %v703, %v706
          %v708 = vmul.f32 %v704, %v706
          %v709 = vadd.f32 %v689, %v707
          %v710 = vadd.f32 %v690, %v708
          %v711 = vmul.f32 %v703, %v563
          %v712 = vmul.f32 %v704, %v563
          %v713 = vadd.f32 %v693, %v711
          %v714 = vadd.f32 %v694, %v712
          %v715 = vmul.f32 %v703, %v440
          %v716 = vmul.f32 %v704, %v440
          %v717 = vadd.f32 %v697, %v715
          %v718 = vadd.f32 %v698, %v716
          %v719 = vmul.f32 %v703, %v345
          %v720 = vmul.f32 %v704, %v345
          %v721 = vadd.f32 %v701, %v719
          %v722 = vadd.f32 %v702, %v720
          %v723 = vld [vmem:[%s662 + $0x3] sm:$0xff]
          %v724 = vld [vmem:[%s662 + $0xb] sm:$0xff]
          %v725 = vld [vmem:[#allocation5 + $0x1f] sm:$0x1]
          %v726 = vperm.slane %v725, 0
          %v727 = vmul.f32 %v723, %v726
          %v728 = vmul.f32 %v724, %v726
          %v729 = vadd.f32 %v709, %v727
          %v730 = vadd.f32 %v710, %v728
          %v731 = vmul.f32 %v723, %v583
          %v732 = vmul.f32 %v724, %v583
          %v733 = vadd.f32 %v713, %v731
          %v734 = vadd.f32 %v714, %v732
          %v735 = vmul.f32 %v723, %v456
          %v736 = vmul.f32 %v724, %v456
          %v737 = vadd.f32 %v717, %v735
          %v738 = vadd.f32 %v718, %v736
          %v739 = vmul.f32 %v723, %v357
          %v740 = vmul.f32 %v724, %v357
          %v741 = vadd.f32 %v721, %v739
          %v742 = vadd.f32 %v722, %v740
          %v743 = vld [vmem:[%s662 + $0x4] sm:$0xff]
          %v744 = vld [vmem:[%s662 + $0xc] sm:$0xff]
          %v745 = vld [vmem:[#allocation5 + $0x20] sm:$0x1]
          %v746 = vperm.slane %v745, 0
          %v747 = vmul.f32 %v743, %v746
          %v748 = vmul.f32 %v744, %v746
          %v749 = vadd.f32 %v729, %v747
          %v750 = vadd.f32 %v730, %v748
          %v751 = vmul.f32 %v743, %v603
          %v752 = vmul.f32 %v744, %v603
          %v753 = vadd.f32 %v733, %v751
          %v754 = vadd.f32 %v734, %v752
          %v755 = vmul.f32 %v743, %v472
          %v756 = vmul.f32 %v744, %v472
          %v757 = vadd.f32 %v737, %v755
          %v758 = vadd.f32 %v738, %v756
          %v759 = vmul.f32 %v743, %v369
          %v760 = vmul.f32 %v744, %v369
          %v761 = vadd.f32 %v741, %v759
          %v762 = vadd.f32 %v742, %v760
          %v763 = vld [vmem:[%s662 + $0x5] sm:$0xff]
          %v764 = vld [vmem:[%s662 + $0xd] sm:$0xff]
          %v765 = vld [vmem:[#allocation5 + $0x21] sm:$0x1]
          %v766 = vperm.slane %v765, 0
          %v767 = vmul.f32 %v763, %v766
          %v768 = vmul.f32 %v764, %v766
          %v769 = vadd.f32 %v749, %v767
          %v770 = vadd.f32 %v750, %v768
          %v771 = vmul.f32 %v763, %v623
          %v772 = vmul.f32 %v764, %v623
          %v773 = vadd.f32 %v753, %v771
          %v774 = vadd.f32 %v754, %v772
          %v775 = vmul.f32 %v763, %v488
          %v776 = vmul.f32 %v764, %v488
          %v777 = vadd.f32 %v757, %v775
          %v778 = vadd.f32 %v758, %v776
          %v779 = vmul.f32 %v763, %v381
          %v780 = vmul.f32 %v764, %v381
          %v781 = vadd.f32 %v761, %v779
          %v782 = vadd.f32 %v762, %v780
          %v783 = vld [vmem:[%s662 + $0x6] sm:$0xff]
          %v784 = vld [vmem:[%s662 + $0xe] sm:$0xff]
          %v785 = vld [vmem:[#allocation5 + $0x22] sm:$0x1]
          %v786 = vperm.slane %v785, 0
          %v787 = vmul.f32 %v783, %v786
          %v788 = vmul.f32 %v784, %v786
          %v789 = vadd.f32 %v769, %v787
          %v790 = vadd.f32 %v770, %v788
          %v791 = vmul.f32 %v783, %v643
          %v792 = vmul.f32 %v784, %v643
          %v793 = vadd.f32 %v773, %v791
          %v794 = vadd.f32 %v774, %v792
          %v795 = vmul.f32 %v783, %v504
          %v796 = vmul.f32 %v784, %v504
          %v797 = vadd.f32 %v777, %v795
          %v798 = vadd.f32 %v778, %v796
          %v799 = vmul.f32 %v783, %v393
          %v800 = vmul.f32 %v784, %v393
          %v801 = vadd.f32 %v781, %v799
          %v802 = vadd.f32 %v782, %v800
          %s803 = sadd.s32 %s256, 5
          %s804 = smul.u32 %s803, 24
          %s805 = scalar_lea.vmem %s211, %s804 [#allocation2]
          %v806 = vld [vmem:[%s805] sm:$0xff]
          %v807 = vld [vmem:[%s805 + $0x8] sm:$0xff]
          %v808 = vld [vmem:[#allocation5 + $0x23] sm:$0x1]
          %v809 = vperm.slane %v808, 0
          %v810 = vmul.f32 %v806, %v809
          %v811 = vmul.f32 %v807, %v809
          %v812 = vadd.f32 %v789, %v810
          %v813 = vadd.f32 %v790, %v811
          %v814 = vmul.f32 %v806, %v666
          %v815 = vmul.f32 %v807, %v666
          %v816 = vadd.f32 %v793, %v814
          %v817 = vadd.f32 %v794, %v815
          %v818 = vmul.f32 %v806, %v523
          %v819 = vmul.f32 %v807, %v523
          %v820 = vadd.f32 %v797, %v818
          %v821 = vadd.f32 %v798, %v819
          %v822 = vmul.f32 %v806, %v408
          %v823 = vmul.f32 %v807, %v408
          %v824 = vadd.f32 %v801, %v822
          %v825 = vadd.f32 %v802, %v823
          %v826 = vld [vmem:[%s805 + $0x1] sm:$0xff]
          %v827 = vld [vmem:[%s805 + $0x9] sm:$0xff]
          %v828 = vld [vmem:[#allocation5 + $0x24] sm:$0x1]
          %v829 = vperm.slane %v828, 0
          %v830 = vmul.f32 %v826, %v829
          %v831 = vmul.f32 %v827, %v829
          %v832 = vadd.f32 %v812, %v830
          %v833 = vadd.f32 %v813, %v831
          %v834 = vmul.f32 %v826, %v686
          %v835 = vmul.f32 %v827, %v686
          %v836 = vadd.f32 %v816, %v834
          %v837 = vadd.f32 %v817, %v835
          %v838 = vmul.f32 %v826, %v543
          %v839 = vmul.f32 %v827, %v543
          %v840 = vadd.f32 %v820, %v838
          %v841 = vadd.f32 %v821, %v839
          %v842 = vmul.f32 %v826, %v424
          %v843 = vmul.f32 %v827, %v424
          %v844 = vadd.f32 %v824, %v842
          %v845 = vadd.f32 %v825, %v843
          %v846 = vld [vmem:[%s805 + $0x2] sm:$0xff]
          %v847 = vld [vmem:[%s805 + $0xa] sm:$0xff]
          %v848 = vld [vmem:[#allocation5 + $0x25] sm:$0x1]
          %v849 = vperm.slane %v848, 0
          %v850 = vmul.f32 %v846, %v849
          %v851 = vmul.f32 %v847, %v849
          %v852 = vadd.f32 %v832, %v850
          %v853 = vadd.f32 %v833, %v851
          %v854 = vmul.f32 %v846, %v706
          %v855 = vmul.f32 %v847, %v706
          %v856 = vadd.f32 %v836, %v854
          %v857 = vadd.f32 %v837, %v855
          %v858 = vmul.f32 %v846, %v563
          %v859 = vmul.f32 %v847, %v563
          %v860 = vadd.f32 %v840, %v858
          %v861 = vadd.f32 %v841, %v859
          %v862 = vmul.f32 %v846, %v440
          %v863 = vmul.f32 %v847, %v440
          %v864 = vadd.f32 %v844, %v862
          %v865 = vadd.f32 %v845, %v863
          %v866 = vld [vmem:[%s805 + $0x3] sm:$0xff]
          %v867 = vld [vmem:[%s805 + $0xb] sm:$0xff]
          %v868 = vld [vmem:[#allocation5 + $0x26] sm:$0x1]
          %v869 = vperm.slane %v868, 0
          %v870 = vmul.f32 %v866, %v869
          %v871 = vmul.f32 %v867, %v869
          %v872 = vadd.f32 %v852, %v870
          %v873 = vadd.f32 %v853, %v871
          %v874 = vmul.f32 %v866, %v726
          %v875 = vmul.f32 %v867, %v726
          %v876 = vadd.f32 %v856, %v874
          %v877 = vadd.f32 %v857, %v875
          %v878 = vmul.f32 %v866, %v583
          %v879 = vmul.f32 %v867, %v583
          %v880 = vadd.f32 %v860, %v878
          %v881 = vadd.f32 %v861, %v879
          %v882 = vmul.f32 %v866, %v456
          %v883 = vmul.f32 %v867, %v456
          %v884 = vadd.f32 %v864, %v882
          %v885 = vadd.f32 %v865, %v883
          %v886 = vld [vmem:[%s805 + $0x4] sm:$0xff]
          %v887 = vld [vmem:[%s805 + $0xc] sm:$0xff]
          %v888 = vld [vmem:[#allocation5 + $0x27] sm:$0x1]
          %v889 = vperm.slane %v888, 0
          %v890 = vmul.f32 %v886, %v889
          %v891 = vmul.f32 %v887, %v889
          %v892 = vadd.f32 %v872, %v890
          %v893 = vadd.f32 %v873, %v891
          %v894 = vmul.f32 %v886, %v746
          %v895 = vmul.f32 %v887, %v746
          %v896 = vadd.f32 %v876, %v894
          %v897 = vadd.f32 %v877, %v895
          %v898 = vmul.f32 %v886, %v603
          %v899 = vmul.f32 %v887, %v603
          %v900 = vadd.f32 %v880, %v898
          %v901 = vadd.f32 %v881, %v899
          %v902 = vmul.f32 %v886, %v472
          %v903 = vmul.f32 %v887, %v472
          %v904 = vadd.f32 %v884, %v902
          %v905 = vadd.f32 %v885, %v903
          %v906 = vld [vmem:[%s805 + $0x5] sm:$0xff]
          %v907 = vld [vmem:[%s805 + $0xd] sm:$0xff]
          %v908 = vld [vmem:[#allocation5 + $0x28] sm:$0x1]
          %v909 = vperm.slane %v908, 0
          %v910 = vmul.f32 %v906, %v909
          %v911 = vmul.f32 %v907, %v909
          %v912 = vadd.f32 %v892, %v910
          %v913 = vadd.f32 %v893, %v911
          %v914 = vmul.f32 %v906, %v766
          %v915 = vmul.f32 %v907, %v766
          %v916 = vadd.f32 %v896, %v914
          %v917 = vadd.f32 %v897, %v915
          %v918 = vmul.f32 %v906, %v623
          %v919 = vmul.f32 %v907, %v623
          %v920 = vadd.f32 %v900, %v918
          %v921 = vadd.f32 %v901, %v919
          %v922 = vmul.f32 %v906, %v488
          %v923 = vmul.f32 %v907, %v488
          %v924 = vadd.f32 %v904, %v922
          %v925 = vadd.f32 %v905, %v923
          %v926 = vld [vmem:[%s805 + $0x6] sm:$0xff]
          %v927 = vld [vmem:[%s805 + $0xe] sm:$0xff]
          %v928 = vld [vmem:[#allocation5 + $0x29] sm:$0x1]
          %v929 = vperm.slane %v928, 0
          %v930 = vmul.f32 %v926, %v929
          %v931 = vmul.f32 %v927, %v929
          %v932 = vadd.f32 %v912, %v930
          %v933 = vadd.f32 %v913, %v931
          %v934 = vmul.f32 %v926, %v786
          %v935 = vmul.f32 %v927, %v786
          %v936 = vadd.f32 %v916, %v934
          %v937 = vadd.f32 %v917, %v935
          %v938 = vmul.f32 %v926, %v643
          %v939 = vmul.f32 %v927, %v643
          %v940 = vadd.f32 %v920, %v938
          %v941 = vadd.f32 %v921, %v939
          %v942 = vmul.f32 %v926, %v504
          %v943 = vmul.f32 %v927, %v504
          %v944 = vadd.f32 %v924, %v942
          %v945 = vadd.f32 %v925, %v943
          %s946 = sadd.s32 %s256, 6
          %s947 = smul.u32 %s946, 24
          %s948 = scalar_lea.vmem %s211, %s947 [#allocation2]
          %v949 = vld [vmem:[%s948] sm:$0xff]
          %v950 = vld [vmem:[%s948 + $0x8] sm:$0xff]
          %v951 = vld [vmem:[#allocation5 + $0x2a] sm:$0x1]
          %v952 = vperm.slane %v951, 0
          %v953 = vmul.f32 %v949, %v952
          %v954 = vmul.f32 %v950, %v952
          %v955 = vadd.f32 %v932, %v953
          %v956 = vadd.f32 %v933, %v954
          %v957 = vmul.f32 %v949, %v809
          %v958 = vmul.f32 %v950, %v809
          %v959 = vadd.f32 %v936, %v957
          %v960 = vadd.f32 %v937, %v958
          %v961 = vmul.f32 %v949, %v666
          %v962 = vmul.f32 %v950, %v666
          %v963 = vadd.f32 %v940, %v961
          %v964 = vadd.f32 %v941, %v962
          %v965 = vmul.f32 %v949, %v523
          %v966 = vmul.f32 %v950, %v523
          %v967 = vadd.f32 %v944, %v965
          %v968 = vadd.f32 %v945, %v966
          %v969 = vld [vmem:[%s948 + $0x1] sm:$0xff]
          %v970 = vld [vmem:[%s948 + $0x9] sm:$0xff]
          %v971 = vld [vmem:[#allocation5 + $0x2b] sm:$0x1]
          %v972 = vperm.slane %v971, 0
          %v973 = vmul.f32 %v969, %v972
          %v974 = vmul.f32 %v970, %v972
          %v975 = vadd.f32 %v955, %v973
          %v976 = vadd.f32 %v956, %v974
          %v977 = vmul.f32 %v969, %v829
          %v978 = vmul.f32 %v970, %v829
          %v979 = vadd.f32 %v959, %v977
          %v980 = vadd.f32 %v960, %v978
          %v981 = vmul.f32 %v969, %v686
          %v982 = vmul.f32 %v970, %v686
          %v983 = vadd.f32 %v963, %v981
          %v984 = vadd.f32 %v964, %v982
          %v985 = vmul.f32 %v969, %v543
          %v986 = vmul.f32 %v970, %v543
          %v987 = vadd.f32 %v967, %v985
          %v988 = vadd.f32 %v968, %v986
          %v989 = vld [vmem:[%s948 + $0x2] sm:$0xff]
          %v990 = vld [vmem:[%s948 + $0xa] sm:$0xff]
          %v991 = vld [vmem:[#allocation5 + $0x2c] sm:$0x1]
          %v992 = vperm.slane %v991, 0
          %v993 = vmul.f32 %v989, %v992
          %v994 = vmul.f32 %v990, %v992
          %v995 = vadd.f32 %v975, %v993
          %v996 = vadd.f32 %v976, %v994
          %v997 = vmul.f32 %v989, %v849
          %v998 = vmul.f32 %v990, %v849
          %v999 = vadd.f32 %v979, %v997
          %v1000 = vadd.f32 %v980, %v998
          %v1001 = vmul.f32 %v989, %v706
          %v1002 = vmul.f32 %v990, %v706
          %v1003 = vadd.f32 %v983, %v1001
          %v1004 = vadd.f32 %v984, %v1002
          %v1005 = vmul.f32 %v989, %v563
          %v1006 = vmul.f32 %v990, %v563
          %v1007 = vadd.f32 %v987, %v1005
          %v1008 = vadd.f32 %v988, %v1006
          %v1009 = vld [vmem:[%s948 + $0x3] sm:$0xff]
          %v1010 = vld [vmem:[%s948 + $0xb] sm:$0xff]
          %v1011 = vld [vmem:[#allocation5 + $0x2d] sm:$0x1]
          %v1012 = vperm.slane %v1011, 0
          %v1013 = vmul.f32 %v1009, %v1012
          %v1014 = vmul.f32 %v1010, %v1012
          %v1015 = vadd.f32 %v995, %v1013
          %v1016 = vadd.f32 %v996, %v1014
          %v1017 = vmul.f32 %v1009, %v869
          %v1018 = vmul.f32 %v1010, %v869
          %v1019 = vadd.f32 %v999, %v1017
          %v1020 = vadd.f32 %v1000, %v1018
          %v1021 = vmul.f32 %v1009, %v726
          %v1022 = vmul.f32 %v1010, %v726
          %v1023 = vadd.f32 %v1003, %v1021
          %v1024 = vadd.f32 %v1004, %v1022
          %v1025 = vmul.f32 %v1009, %v583
          %v1026 = vmul.f32 %v1010, %v583
          %v1027 = vadd.f32 %v1007, %v1025
          %v1028 = vadd.f32 %v1008, %v1026
          %v1029 = vld [vmem:[%s948 + $0x4] sm:$0xff]
          %v1030 = vld [vmem:[%s948 + $0xc] sm:$0xff]
          %v1031 = vld [vmem:[#allocation5 + $0x2e] sm:$0x1]
          %v1032 = vperm.slane %v1031, 0
          %v1033 = vmul.f32 %v1029, %v1032
          %v1034 = vmul.f32 %v1030, %v1032
          %v1035 = vadd.f32 %v1015, %v1033
          %v1036 = vadd.f32 %v1016, %v1034
          %v1037 = vmul.f32 %v1029, %v889
          %v1038 = vmul.f32 %v1030, %v889
          %v1039 = vadd.f32 %v1019, %v1037
          %v1040 = vadd.f32 %v1020, %v1038
          %v1041 = vmul.f32 %v1029, %v746
          %v1042 = vmul.f32 %v1030, %v746
          %v1043 = vadd.f32 %v1023, %v1041
          %v1044 = vadd.f32 %v1024, %v1042
          %v1045 = vmul.f32 %v1029, %v603
          %v1046 = vmul.f32 %v1030, %v603
          %v1047 = vadd.f32 %v1027, %v1045
          %v1048 = vadd.f32 %v1028, %v1046
          %v1049 = vld [vmem:[%s948 + $0x5] sm:$0xff]
          %v1050 = vld [vmem:[%s948 + $0xd] sm:$0xff]
          %v1051 = vld [vmem:[#allocation5 + $0x2f] sm:$0x1]
          %v1052 = vperm.slane %v1051, 0
          %v1053 = vmul.f32 %v1049, %v1052
          %v1054 = vmul.f32 %v1050, %v1052
          %v1055 = vadd.f32 %v1035, %v1053
          %v1056 = vadd.f32 %v1036, %v1054
          %v1057 = vmul.f32 %v1049, %v909
          %v1058 = vmul.f32 %v1050, %v909
          %v1059 = vadd.f32 %v1039, %v1057
          %v1060 = vadd.f32 %v1040, %v1058
          %v1061 = vmul.f32 %v1049, %v766
          %v1062 = vmul.f32 %v1050, %v766
          %v1063 = vadd.f32 %v1043, %v1061
          %v1064 = vadd.f32 %v1044, %v1062
          %v1065 = vmul.f32 %v1049, %v623
          %v1066 = vmul.f32 %v1050, %v623
          %v1067 = vadd.f32 %v1047, %v1065
          %v1068 = vadd.f32 %v1048, %v1066
          %v1069 = vld [vmem:[%s948 + $0x6] sm:$0xff]
          %v1070 = vld [vmem:[%s948 + $0xe] sm:$0xff]
          %v1071 = vld [vmem:[#allocation5 + $0x30] sm:$0x1]
          %v1072 = vperm.slane %v1071, 0
          %v1073 = vmul.f32 %v1069, %v1072
          %v1074 = vmul.f32 %v1070, %v1072
          %v1075 = vadd.f32 %v1055, %v1073
          %v1076 = vadd.f32 %v1056, %v1074
          %v1077 = vmul.f32 %v1069, %v929
          %v1078 = vmul.f32 %v1070, %v929
          %v1079 = vadd.f32 %v1059, %v1077
          %v1080 = vadd.f32 %v1060, %v1078
          %v1081 = vmul.f32 %v1069, %v786
          %v1082 = vmul.f32 %v1070, %v786
          %v1083 = vadd.f32 %v1063, %v1081
          %v1084 = vadd.f32 %v1064, %v1082
          %v1085 = vmul.f32 %v1069, %v643
          %v1086 = vmul.f32 %v1070, %v643
          %v1087 = vadd.f32 %v1067, %v1085
          %v1088 = vadd.f32 %v1068, %v1086
          %s1089 = sadd.s32 %s256, 7
          %s1090 = smul.u32 %s1089, 24
          %s1091 = scalar_lea.vmem %s211, %s1090 [#allocation2]
          %v1092 = vld [vmem:[%s1091] sm:$0xff]
          %v1093 = vld [vmem:[%s1091 + $0x8] sm:$0xff]
          %v1094 = vmul.f32 %v1092, %v952
          %v1095 = vmul.f32 %v1093, %v952
          %v1096 = vadd.f32 %v1079, %v1094
          %v1097 = vadd.f32 %v1080, %v1095
          %v1098 = vmul.f32 %v1092, %v809
          %v1099 = vmul.f32 %v1093, %v809
          %v1100 = vadd.f32 %v1083, %v1098
          %v1101 = vadd.f32 %v1084, %v1099
          %v1102 = vmul.f32 %v1092, %v666
          %v1103 = vmul.f32 %v1093, %v666
          %v1104 = vadd.f32 %v1087, %v1102
          %v1105 = vadd.f32 %v1088, %v1103
          %v1106 = vld [vmem:[%s1091 + $0x1] sm:$0xff]
          %v1107 = vld [vmem:[%s1091 + $0x9] sm:$0xff]
          %v1108 = vmul.f32 %v1106, %v972
          %v1109 = vmul.f32 %v1107, %v972
          %v1110 = vadd.f32 %v1096, %v1108
          %v1111 = vadd.f32 %v1097, %v1109
          %v1112 = vmul.f32 %v1106, %v829
          %v1113 = vmul.f32 %v1107, %v829
          %v1114 = vadd.f32 %v1100, %v1112
          %v1115 = vadd.f32 %v1101, %v1113
          %v1116 = vmul.f32 %v1106, %v686
          %v1117 = vmul.f32 %v1107, %v686
          %v1118 = vadd.f32 %v1104, %v1116
          %v1119 = vadd.f32 %v1105, %v1117
          %v1120 = vld [vmem:[%s1091 + $0x2] sm:$0xff]
          %v1121 = vld [vmem:[%s1091 + $0xa] sm:$0xff]
          %v1122 = vmul.f32 %v1120, %v992
          %v1123 = vmul.f32 %v1121, %v992
          %v1124 = vadd.f32 %v1110, %v1122
          %v1125 = vadd.f32 %v1111, %v1123
          %v1126 = vmul.f32 %v1120, %v849
          %v1127 = vmul.f32 %v1121, %v849
          %v1128 = vadd.f32 %v1114, %v1126
          %v1129 = vadd.f32 %v1115, %v1127
          %v1130 = vmul.f32 %v1120, %v706
          %v1131 = vmul.f32 %v1121, %v706
          %v1132 = vadd.f32 %v1118, %v1130
          %v1133 = vadd.f32 %v1119, %v1131
          %v1134 = vld [vmem:[%s1091 + $0x3] sm:$0xff]
          %v1135 = vld [vmem:[%s1091 + $0xb] sm:$0xff]
          %v1136 = vmul.f32 %v1134, %v1012
          %v1137 = vmul.f32 %v1135, %v1012
          %v1138 = vadd.f32 %v1124, %v1136
          %v1139 = vadd.f32 %v1125, %v1137
          %v1140 = vmul.f32 %v1134, %v869
          %v1141 = vmul.f32 %v1135, %v869
          %v1142 = vadd.f32 %v1128, %v1140
          %v1143 = vadd.f32 %v1129, %v1141
          %v1144 = vmul.f32 %v1134, %v726
          %v1145 = vmul.f32 %v1135, %v726
          %v1146 = vadd.f32 %v1132, %v1144
          %v1147 = vadd.f32 %v1133, %v1145
          %v1148 = vld [vmem:[%s1091 + $0x4] sm:$0xff]
          %v1149 = vld [vmem:[%s1091 + $0xc] sm:$0xff]
          %v1150 = vmul.f32 %v1148, %v1032
          %v1151 = vmul.f32 %v1149, %v1032
          %v1152 = vadd.f32 %v1138, %v1150
          %v1153 = vadd.f32 %v1139, %v1151
          %v1154 = vmul.f32 %v1148, %v889
          %v1155 = vmul.f32 %v1149, %v889
          %v1156 = vadd.f32 %v1142, %v1154
          %v1157 = vadd.f32 %v1143, %v1155
          %v1158 = vmul.f32 %v1148, %v746
          %v1159 = vmul.f32 %v1149, %v746
          %v1160 = vadd.f32 %v1146, %v1158
          %v1161 = vadd.f32 %v1147, %v1159
          %v1162 = vld [vmem:[%s1091 + $0x5] sm:$0xff]
          %v1163 = vld [vmem:[%s1091 + $0xd] sm:$0xff]
          %v1164 = vmul.f32 %v1162, %v1052
          %v1165 = vmul.f32 %v1163, %v1052
          %v1166 = vadd.f32 %v1152, %v1164
          %v1167 = vadd.f32 %v1153, %v1165
          %v1168 = vmul.f32 %v1162, %v909
          %v1169 = vmul.f32 %v1163, %v909
          %v1170 = vadd.f32 %v1156, %v1168
          %v1171 = vadd.f32 %v1157, %v1169
          %v1172 = vmul.f32 %v1162, %v766
          %v1173 = vmul.f32 %v1163, %v766
          %v1174 = vadd.f32 %v1160, %v1172
          %v1175 = vadd.f32 %v1161, %v1173
          %v1176 = vld [vmem:[%s1091 + $0x6] sm:$0xff]
          %v1177 = vld [vmem:[%s1091 + $0xe] sm:$0xff]
          %v1178 = vmul.f32 %v1176, %v1072
          %v1179 = vmul.f32 %v1177, %v1072
          %v1180 = vadd.f32 %v1166, %v1178
          %v1181 = vadd.f32 %v1167, %v1179
          %v1182 = vmul.f32 %v1176, %v929
          %v1183 = vmul.f32 %v1177, %v929
          %v1184 = vadd.f32 %v1170, %v1182
          %v1185 = vadd.f32 %v1171, %v1183
          %v1186 = vmul.f32 %v1176, %v786
          %v1187 = vmul.f32 %v1177, %v786
          %v1188 = vadd.f32 %v1174, %v1186
          %v1189 = vadd.f32 %v1175, %v1187
          %s1190 = sadd.s32 %s256, 8
          %s1191 = smul.u32 %s1190, 24
          %s1192 = scalar_lea.vmem %s211, %s1191 [#allocation2]
          %v1193 = vld [vmem:[%s1192] sm:$0xff]
          %v1194 = vld [vmem:[%s1192 + $0x8] sm:$0xff]
          %v1195 = vmul.f32 %v1193, %v952
          %v1196 = vmul.f32 %v1194, %v952
          %v1197 = vadd.f32 %v1184, %v1195
          %v1198 = vadd.f32 %v1185, %v1196
          %v1199 = vmul.f32 %v1193, %v809
          %v1200 = vmul.f32 %v1194, %v809
          %v1201 = vadd.f32 %v1188, %v1199
          %v1202 = vadd.f32 %v1189, %v1200
          %v1203 = vld [vmem:[%s1192 + $0x1] sm:$0xff]
          %v1204 = vld [vmem:[%s1192 + $0x9] sm:$0xff]
          %v1205 = vmul.f32 %v1203, %v972
          %v1206 = vmul.f32 %v1204, %v972
          %v1207 = vadd.f32 %v1197, %v1205
          %v1208 = vadd.f32 %v1198, %v1206
          %v1209 = vmul.f32 %v1203, %v829
          %v1210 = vmul.f32 %v1204, %v829
          %v1211 = vadd.f32 %v1201, %v1209
          %v1212 = vadd.f32 %v1202, %v1210
          %v1213 = vld [vmem:[%s1192 + $0x2] sm:$0xff]
          %v1214 = vld [vmem:[%s1192 + $0xa] sm:$0xff]
          %v1215 = vmul.f32 %v1213, %v992
          %v1216 = vmul.f32 %v1214, %v992
          %v1217 = vadd.f32 %v1207, %v1215
          %v1218 = vadd.f32 %v1208, %v1216
          %v1219 = vmul.f32 %v1213, %v849
          %v1220 = vmul.f32 %v1214, %v849
          %v1221 = vadd.f32 %v1211, %v1219
          %v1222 = vadd.f32 %v1212, %v1220
          %v1223 = vld [vmem:[%s1192 + $0x3] sm:$0xff]
          %v1224 = vld [vmem:[%s1192 + $0xb] sm:$0xff]
          %v1225 = vmul.f32 %v1223, %v1012
          %v1226 = vmul.f32 %v1224, %v1012
          %v1227 = vadd.f32 %v1217, %v1225
          %v1228 = vadd.f32 %v1218, %v1226
          %v1229 = vmul.f32 %v1223, %v869
          %v1230 = vmul.f32 %v1224, %v869
          %v1231 = vadd.f32 %v1221, %v1229
          %v1232 = vadd.f32 %v1222, %v1230
          %v1233 = vld [vmem:[%s1192 + $0x4] sm:$0xff]
          %v1234 = vld [vmem:[%s1192 + $0xc] sm:$0xff]
          %v1235 = vmul.f32 %v1233, %v1032
          %v1236 = vmul.f32 %v1234, %v1032
          %v1237 = vadd.f32 %v1227, %v1235
          %v1238 = vadd.f32 %v1228, %v1236
          %v1239 = vmul.f32 %v1233, %v889
          %v1240 = vmul.f32 %v1234, %v889
          %v1241 = vadd.f32 %v1231, %v1239
          %v1242 = vadd.f32 %v1232, %v1240
          %v1243 = vld [vmem:[%s1192 + $0x5] sm:$0xff]
          %v1244 = vld [vmem:[%s1192 + $0xd] sm:$0xff]
          %v1245 = vmul.f32 %v1243, %v1052
          %v1246 = vmul.f32 %v1244, %v1052
          %v1247 = vadd.f32 %v1237, %v1245
          %v1248 = vadd.f32 %v1238, %v1246
          %v1249 = vmul.f32 %v1243, %v909
          %v1250 = vmul.f32 %v1244, %v909
          %v1251 = vadd.f32 %v1241, %v1249
          %v1252 = vadd.f32 %v1242, %v1250
          %v1253 = vld [vmem:[%s1192 + $0x6] sm:$0xff]
          %v1254 = vld [vmem:[%s1192 + $0xe] sm:$0xff]
          %v1255 = vmul.f32 %v1253, %v1072
          %v1256 = vmul.f32 %v1254, %v1072
          %v1257 = vadd.f32 %v1247, %v1255
          %v1258 = vadd.f32 %v1248, %v1256
          %v1259 = vmul.f32 %v1253, %v929
          %v1260 = vmul.f32 %v1254, %v929
          %v1261 = vadd.f32 %v1251, %v1259
          %v1262 = vadd.f32 %v1252, %v1260
          %s1263 = sadd.s32 %s256, 9
          %s1264 = smul.u32 %s1263, 24
          %s1265 = scalar_lea.vmem %s211, %s1264 [#allocation2]
          %v1266 = vld [vmem:[%s1265] sm:$0xff]
          %v1267 = vld [vmem:[%s1265 + $0x8] sm:$0xff]
          %v1268 = vmul.f32 %v1266, %v952
          %v1269 = vmul.f32 %v1267, %v952
          %v1270 = vadd.f32 %v1261, %v1268
          %v1271 = vadd.f32 %v1262, %v1269
          %v1272 = vld [vmem:[%s1265 + $0x1] sm:$0xff]
          %v1273 = vld [vmem:[%s1265 + $0x9] sm:$0xff]
          %v1274 = vmul.f32 %v1272, %v972
          %v1275 = vmul.f32 %v1273, %v972
          %v1276 = vadd.f32 %v1270, %v1274
          %v1277 = vadd.f32 %v1271, %v1275
          %v1278 = vld [vmem:[%s1265 + $0x2] sm:$0xff]
          %v1279 = vld [vmem:[%s1265 + $0xa] sm:$0xff]
          %v1280 = vmul.f32 %v1278, %v992
          %v1281 = vmul.f32 %v1279, %v992
          %v1282 = vadd.f32 %v1276, %v1280
          %v1283 = vadd.f32 %v1277, %v1281
          %v1284 = vld [vmem:[%s1265 + $0x3] sm:$0xff]
          %v1285 = vld [vmem:[%s1265 + $0xb] sm:$0xff]
          %v1286 = vmul.f32 %v1284, %v1012
          %v1287 = vmul.f32 %v1285, %v1012
          %v1288 = vadd.f32 %v1282, %v1286
          %v1289 = vadd.f32 %v1283, %v1287
          %v1290 = vld [vmem:[%s1265 + $0x4] sm:$0xff]
          %v1291 = vld [vmem:[%s1265 + $0xc] sm:$0xff]
          %v1292 = vmul.f32 %v1290, %v1032
          %v1293 = vmul.f32 %v1291, %v1032
          %v1294 = vadd.f32 %v1288, %v1292
          %v1295 = vadd.f32 %v1289, %v1293
          %v1296 = vld [vmem:[%s1265 + $0x5] sm:$0xff]
          %v1297 = vld [vmem:[%s1265 + $0xd] sm:$0xff]
          %v1298 = vmul.f32 %v1296, %v1052
          %v1299 = vmul.f32 %v1297, %v1052
          %v1300 = vadd.f32 %v1294, %v1298
          %v1301 = vadd.f32 %v1295, %v1299
          %v1302 = vld [vmem:[%s1265 + $0x6] sm:$0xff]
          %v1303 = vld [vmem:[%s1265 + $0xe] sm:$0xff]
          %v1304 = vmul.f32 %v1302, %v1072
          %v1305 = vmul.f32 %v1303, %v1072
          %v1306 = vadd.f32 %v1300, %v1304
          %v1307 = vadd.f32 %v1301, %v1305
          %s1308 = smul.u32 %s256, 16
          %s1309 = scalar_lea.vmem %s242, %s1308 [#allocation7]
          %1310 = vst [vmem:[%s1309] sm:$0xff] %v1075
          %1311 = vst [vmem:[%s1309 + $0x8] sm:$0xff] %v1076
          %s1312 = smul.u32 %s315, 16
          %s1313 = scalar_lea.vmem %s242, %s1312 [#allocation7]
          %1314 = vst [vmem:[%s1313] sm:$0xff] %v1180
          %1315 = vst [vmem:[%s1313 + $0x8] sm:$0xff] %v1181
          %s1316 = smul.u32 %s402, 16
          %s1317 = scalar_lea.vmem %s242, %s1316 [#allocation7]
          %1318 = vst [vmem:[%s1317] sm:$0xff] %v1257
          %1319 = vst [vmem:[%s1317 + $0x8] sm:$0xff] %v1258
          %s1320 = smul.u32 %s517, 16
          %s1321 = scalar_lea.vmem %s242, %s1320 [#allocation7]
          %1322 = vst [vmem:[%s1321] sm:$0xff] %v1306
          %1323 = vst [vmem:[%s1321 + $0x8] sm:$0xff] %v1307
        $region45: #{tpu_custom_call.1} parent=31 // loop_footer
          %s255 = sadd.s32 1, %s251
        $region46: #{tpu_custom_call.1} parent=31 // loop_footer_branch
          %250 = sbr.rel target = $region42
        $region47: #{tpu_custom_call.1} parent=31 // loop_exit
          _
        %s1324 = sand.u32 %s123, 1
        %s1325 = scalar_lea.sflag [#allocation4], %s1324
        %s1326 = sand.u32 %s123, 1
        %s1327 = smul.addr %s1326, 256
        %s1328 = scalar_lea.vmem [#allocation7], %s1327
        // Predicated region
        $region48: #{tpu_custom_call.1} parent=31 // pred_check
          %p1329 = pneg %p133
        $region49: #{tpu_custom_call.1} parent=31 // pred_check_branch
          %1331 = sbr.rel (%p1329) target = $region51
        $region50: #{tpu_custom_call.1} parent=31 // pred_region
          %1333 = vsyncadd %s1325, 0
          %s1334 = smul.addr %s26, 32
          %s1335 = sadd.s32 %s25, %s1334
          %s1336 = smul.addr %s1335, 8
          %s1337 = scalar_lea.hbm %s3, %s1336
          %s1338 = sshll.u32 %s1328, 4
          %s1339 = int_to_ptr.vmem [resolvable:$true] %s1338
          %s1340 = sshll.u32 %s1337, 4
          %s1341 = int_to_ptr.hbm [resolvable:$true] %s1340
          %1346 = dma.vmem_to_hbm [thread:$0]  %s1339, 4096, %s1341, %s1325, 128, 128, 8
        $region51: #{tpu_custom_call.1} parent=31 // pred_fallthru
          _
      $region32: #{tpu_custom_call.1} parent=5 // pred_fallthru
        _
      %p1347 = scmp.le.s32.totalorder 2, %s16
      // Predicated region
      $region52: #{tpu_custom_call.1} parent=5 // pred_check
        %p1348 = pneg %p1347
      $region53: #{tpu_custom_call.1} parent=5 // pred_check_branch
        %1350 = sbr.rel (%p1348) target = $region55
      $region54: #{tpu_custom_call.1} parent=5 // pred_region
        %s1351 = ssub.s32 %s16, 2
        // Predicated region
        $region56: #{tpu_custom_call.1} parent=54 // pred_check
          %p1352 = pneg %p139
        $region57: #{tpu_custom_call.1} parent=54 // pred_check_branch
          %1354 = sbr.rel (%p1352) target = $region59
        $region58: #{tpu_custom_call.1} parent=54 // pred_region
          %s1355 = sand.u32 %s124, 1
          %s1356 = scalar_lea.sflag [#allocation4], %s1355
          %s1357 = sand.u32 %s124, 1
          %s1358 = smul.addr %s1357, 256
          %s1359 = scalar_lea.vmem [#allocation7], %s1358
          %1361 = dma.done %s1356, 4096
        $region59: #{tpu_custom_call.1} parent=54 // pred_fallthru
          _
      $region55: #{tpu_custom_call.1} parent=5 // pred_fallthru
        _
    $region6: #{tpu_custom_call.1} parent=1 // loop_footer
      %s20 = sadd.s32 1, %s16
    $region7: #{tpu_custom_call.1} parent=1 // loop_footer_branch
      %15 = sbr.rel target = $region3
    $region8: #{tpu_custom_call.1} parent=1 // loop_exit
      _
    %1362 = vsyncpa [#allocation3], 1
    %s1363 = scalar_lea.sflag [#allocation3], 1
    %1364 = vsyncpa %s1363, 1
    %1365 = vsyncpa [#allocation6], 1
    %1366 = vsyncpa [#allocation4], 1
    %s1367 = scalar_lea.sflag [#allocation4], 1
    %1368 = vsyncpa %s1367, 1

</llo_original>
